<compile_context>
chip_gen: v7x
topology: tpu7x:2x2x1
jax: 0.10.0
libtpu: 0.0.40
codegen_flags: <defaults>
</compile_context>

<pallas_src>
import jax
import jax.numpy as jnp
from jax import lax
from jax.experimental import pallas as pl
from jax.experimental.pallas import tpu as pltpu


# ----------------------------- Fused kernel ---------------------------------

def reviewdi_fused_kernel(
        tokens_ref, length_ref, noise_ref, emb_ref,
        wih_cat_ref, gi_bias_ref,
        whh_fr_ref, whh_fz_ref, whh_fn_ref,
        whh_br_ref, whh_bz_ref, whh_bn_ref,
        bhh_fn_ref, bhh_bn_ref,
        wmf_ref, wmb_ref, bm_ref,
        wvf_ref, wvb_ref, bv_ref,
        wr_ref, br_ref, wo_ref, bo_ref,
        logits_ref, mean_ref, logv_ref, z_ref):
    f32 = jnp.float32
    TB = tokens_ref.shape[0]
    B = noise_ref.shape[0]
    T = TB // B
    H = whh_fr_ref.shape[0]
    V = emb_ref.shape[0]

    # ---- embedding lookup as a one-hot matmul: (T*B, V) @ (V, E) ----
    tok = tokens_ref[...]                                        # (T*B, 1) int32
    lane_ids = lax.broadcasted_iota(jnp.int32, (TB, V), 1)
    onehot = (lane_ids == tok).astype(f32)
    x_flat = jnp.dot(onehot, emb_ref[...], preferred_element_type=f32)   # (T*B, E)

    # ---- hoisted input-to-hidden projection, both directions, bias folded ----
    gi_all = (jnp.dot(x_flat, wih_cat_ref[...], preferred_element_type=f32)
              + gi_bias_ref[...])                                # (T*B, 6H)

    # Static lane slices per gate (once), static sublane slices per time step.
    def split_time(col):
        return [col[t * B:(t + 1) * B, :] for t in range(T)]

    gi_fr = split_time(gi_all[:, 0 * H:1 * H])
    gi_fz = split_time(gi_all[:, 1 * H:2 * H])
    gi_fn = split_time(gi_all[:, 2 * H:3 * H])
    gi_br = split_time(gi_all[:, 3 * H:4 * H])
    gi_bz = split_time(gi_all[:, 4 * H:5 * H])
    gi_bn = split_time(gi_all[:, 5 * H:6 * H])

    whh_fr = whh_fr_ref[...]; whh_fz = whh_fz_ref[...]; whh_fn = whh_fn_ref[...]
    whh_br = whh_br_ref[...]; whh_bz = whh_bz_ref[...]; whh_bn = whh_bn_ref[...]
    bhh_fn = jnp.broadcast_to(bhh_fn_ref[...], (B, H))           # hoisted broadcasts
    bhh_bn = jnp.broadcast_to(bhh_bn_ref[...], (B, H))

    len_col = length_ref[...]                                    # (B, 1) int32

    h_f = jnp.zeros((B, H), f32)
    h_b = jnp.zeros((B, H), f32)
    last_f = jnp.zeros((B, H), f32)
    last_b = jnp.zeros((B, H), f32)

    # Fully unrolled, forward & backward directions interleaved per iteration.
    for i in range(T):
        tf = i
        tb = T - 1 - i

        # forward direction, time tf
        r_f = jax.nn.sigmoid(gi_fr[tf] + jnp.dot(h_f, whh_fr, preferred_element_type=f32))
        z_f = jax.nn.sigmoid(gi_fz[tf] + jnp.dot(h_f, whh_fz, preferred_element_type=f32))
        n_f = jnp.tanh(gi_fn[tf]
                       + r_f * (jnp.dot(h_f, whh_fn, preferred_element_type=f32) + bhh_fn))
        h_f = (1.0 - z_f) * n_f + z_f * h_f

        # backward direction, time tb
        r_b = jax.nn.sigmoid(gi_br[tb] + jnp.dot(h_b, whh_br, preferred_element_type=f32))
        z_b = jax.nn.sigmoid(gi_bz[tb] + jnp.dot(h_b, whh_bz, preferred_element_type=f32))
        n_b = jnp.tanh(gi_bn[tb]
                       + r_b * (jnp.dot(h_b, whh_bn, preferred_element_type=f32) + bhh_bn))
        h_b = (1.0 - z_b) * n_b + z_b * h_b

        # capture the hidden state at t == length - 1 for each direction
        sel_f = (len_col == (tf + 1)).astype(f32)                # (B, 1)
        sel_b = (len_col == (tb + 1)).astype(f32)
        last_f = last_f + sel_f * (h_f - last_f)
        last_b = last_b + sel_b * (h_b - last_b)

    # ---- heads: hidden2mean_z / hidden2logv_z / reparam / latent2RRe / output2vocab ----
    z_mean = (jnp.dot(last_f, wmf_ref[...], preferred_element_type=f32)
              + jnp.dot(last_b, wmb_ref[...], preferred_element_type=f32)
              + bm_ref[...])
    z_logv = (jnp.dot(last_f, wvf_ref[...], preferred_element_type=f32)
              + jnp.dot(last_b, wvb_ref[...], preferred_element_type=f32)
              + bv_ref[...])
    zz = noise_ref[...] * jnp.exp(0.5 * z_logv) + z_mean
    rre = jnp.dot(zz, wr_ref[...], preferred_element_type=f32) + br_ref[...]
    logits = jnp.dot(rre, wo_ref[...], preferred_element_type=f32) + bo_ref[...]

    mean_ref[...] = z_mean
    logv_ref[...] = z_logv
    z_ref[...] = zz
    logits_ref[...] = logits


# ----------------------------- Wrapper ---------------------------------------

def reviewdi_forward(kp, input_sequence, user_ids, length, noise):
    """Fused REVIEWDI forward. kp = kernel-layout params (prepare_kernel_params)."""
    del user_ids  # unused in the PyTorch forward
    B, T = input_sequence.shape
    L = kp["w_rre"].shape[0]
    V = kp["w_out"].shape[1]

    # time-major token column: row = t*B + b  (tiny int reshape/transpose glue)
    tokens_col = jnp.transpose(input_sequence).reshape(T * B, 1).astype(jnp.int32)
    length_col = length.reshape(B, 1).astype(jnp.int32)

    vmem = pl.BlockSpec(memory_space=pltpu.MemorySpace.VMEM)
    out_shapes = (jax.ShapeDtypeStruct((B, V), jnp.float32),   # RRe_logits
                  jax.ShapeDtypeStruct((B, L), jnp.float32),   # z_mean
                  jax.ShapeDtypeStruct((B, L), jnp.float32),   # z_logv
                  jax.ShapeDtypeStruct((B, L), jnp.float32))   # z

    return pl.pallas_call(
        reviewdi_fused_kernel,
        out_shape=out_shapes,
        in_specs=[vmem] * 24,
        out_specs=(vmem,) * 4,
    )(tokens_col, length_col, noise,
      kp["embedding"], kp["wih_cat"], kp["gi_bias"],
      kp["whh_f_r"], kp["whh_f_z"], kp["whh_f_n"],
      kp["whh_b_r"], kp["whh_b_z"], kp["whh_b_n"],
      kp["bhh_f_n"], kp["bhh_b_n"],
      kp["w_mean_f"], kp["w_mean_b"], kp["b_mean"],
      kp["w_logv_f"], kp["w_logv_b"], kp["b_logv"],
      kp["w_rre"], kp["b_rre"], kp["w_out"], kp["b_out"])


# ------------------- Param prep (done ONCE, outside jit) ---------------------

def prepare_kernel_params(p):
    """Convert PyTorch-style (transposed) params to the fused-kernel layout."""
    H = p["whh_f"].shape[0]

    def gi_bias_dir(bih, bhh):
        # fold bih (all gates) + bhh (r, z gates only) into the hoisted bias
        return jnp.concatenate([bih[:, 0 * H:1 * H] + bhh[:, 0 * H:1 * H],
                                bih[:, 1 * H:2 * H] + bhh[:, 1 * H:2 * H],
                                bih[:, 2 * H:3 * H]], axis=1)

    return {
        "embedding": p["embedding"],
        "wih_cat": jnp.concatenate([p["wih_f"], p["wih_b"]], axis=1),      # (E, 6H)
        "gi_bias": jnp.concatenate([gi_bias_dir(p["bih_f"], p["bhh_f"]),
                                    gi_bias_dir(p["bih_b"], p["bhh_b"])], axis=1),
        "whh_f_r": p["whh_f"][:, 0 * H:1 * H],
        "whh_f_z": p["whh_f"][:, 1 * H:2 * H],
        "whh_f_n": p["whh_f"][:, 2 * H:3 * H],
        "whh_b_r": p["whh_b"][:, 0 * H:1 * H],
        "whh_b_z": p["whh_b"][:, 1 * H:2 * H],
        "whh_b_n": p["whh_b"][:, 2 * H:3 * H],
        "bhh_f_n": p["bhh_f"][:, 2 * H:3 * H],
        "bhh_b_n": p["bhh_b"][:, 2 * H:3 * H],
        "w_mean_f": p["w_mean"][:H, :], "w_mean_b": p["w_mean"][H:, :],
        "b_mean": p["b_mean"],
        "w_logv_f": p["w_logv"][:H, :], "w_logv_b": p["w_logv"][H:, :],
        "b_logv": p["b_logv"],
        "w_rre": p["w_rre"], "b_rre": p["b_rre"],
        "w_out": p["w_out"], "b_out": p["b_out"],
    }


# ----------------------------- Reference (pure JAX) ---------------------------

def _gru_ref_dir(x_bte, wih, whh, bih, bhh, reverse=False):
    B, T, _ = x_bte.shape
    H = whh.shape[0]

    def step(h, x_t):
        gi = x_t @ wih + bih
        gh = h @ whh + bhh
        r = jax.nn.sigmoid(gi[:, :H] + gh[:, :H])
        z = jax.nn.sigmoid(gi[:, H:2 * H] + gh[:, H:2 * H])
        n = jnp.tanh(gi[:, 2 * H:] + r * gh[:, 2 * H:])
        h_new = (1.0 - z) * n + z * h
        return h_new, h_new

    xs = jnp.transpose(x_bte, (1, 0, 2))
    if reverse:
        xs = xs[::-1]
    _, outs = lax.scan(step, jnp.zeros((B, H), jnp.float32), xs)
    if reverse:
        outs = outs[::-1]
    return jnp.transpose(outs, (1, 0, 2))


def reviewdi_reference(p, input_sequence, length, noise):
    B = input_sequence.shape[0]
    emb = p["embedding"][input_sequence]
    out_f = _gru_ref_dir(emb, p["wih_f"], p["whh_f"], p["bih_f"], p["bhh_f"], False)
    out_b = _gru_ref_dir(emb, p["wih_b"], p["whh_b"], p["bih_b"], p["bhh_b"], True)
    en = jnp.concatenate([out_f, out_b], axis=-1)
    last = en[jnp.arange(B), length - 1, :]
    z_mean = last @ p["w_mean"] + p["b_mean"]
    z_logv = last @ p["w_logv"] + p["b_logv"]
    z = noise * jnp.exp(0.5 * z_logv) + z_mean
    rre = z @ p["w_rre"] + p["b_rre"]
    logits = rre @ p["w_out"] + p["b_out"]
    return logits, z_mean, z_logv, z


# ----------------------------- Setup & run -----------------------------------

def init_params(key, V, E, H, L):
    ks = jax.random.split(key, 16)
    s = 0.1
    f32 = jnp.float32
    return {
        "embedding": jax.random.normal(ks[0], (V, E), f32) * s,
        "wih_f": jax.random.normal(ks[1], (E, 3 * H), f32) * s,
        "whh_f": jax.random.normal(ks[2], (H, 3 * H), f32) * s,
        "bih_f": jax.random.normal(ks[3], (1, 3 * H), f32) * s,
        "bhh_f": jax.random.normal(ks[4], (1, 3 * H), f32) * s,
        "wih_b": jax.random.normal(ks[5], (E, 3 * H), f32) * s,
        "whh_b": jax.random.normal(ks[6], (H, 3 * H), f32) * s,
        "bih_b": jax.random.normal(ks[7], (1, 3 * H), f32) * s,
        "bhh_b": jax.random.normal(ks[8], (1, 3 * H), f32) * s,
        "w_mean": jax.random.normal(ks[9], (2 * H, L), f32) * s,
        "b_mean": jax.random.normal(ks[10], (1, L), f32) * s,
        "w_logv": jax.random.normal(ks[11], (2 * H, L), f32) * s,
        "b_logv": jax.random.normal(ks[12], (1, L), f32) * s,
        "w_rre": jax.random.normal(ks[13], (L, H), f32) * s,
        "b_rre": jax.random.normal(ks[14], (1, H), f32) * s,
        "w_out": jax.random.normal(ks[15], (H, V), f32) * s,
        "b_out": jnp.zeros((1, V), f32),
    }


if __name__ == "__main__":
    B, T, E, H, L, V, U = 2, 8, 32, 32, 16, 256, 10

    key = jax.random.PRNGKey(0)
    k_par, k_seq, k_usr, k_noise = jax.random.split(key, 4)

    params = init_params(k_par, V, E, H, L)
    kparams = prepare_kernel_params(params)          # one-time layout prep (outside jit)

    input_sequence = jax.random.randint(k_seq, (B, T), 0, V, dtype=jnp.int32)
    user_ids = jax.random.randint(k_usr, (B,), 0, U, dtype=jnp.int32)
    length = jnp.array([T, 5], dtype=jnp.int32)
    noise = jax.random.normal(k_noise, (B, L), jnp.float32)   # torch.randn_like equivalent

    logits, z_mean, z_logv, z = jax.jit(reviewdi_forward)(
        kparams, input_sequence, user_ids, length, noise)
    jax.block_until_ready((logits, z_mean, z_logv, z))

    # numerical check against pure-JAX reference (PyTorch-layout params)
    r_logits, r_mean, r_logv, r_z = reviewdi_reference(params, input_sequence, length, noise)
    for a, b in ((logits, r_logits), (z_mean, r_mean), (z_logv, r_logv), (z, r_z)):
        assert jnp.allclose(a, b, rtol=2e-3, atol=2e-3), "mismatch vs reference"

    assert logits.shape == (B, V) and z.shape == (B, L)
    print("KERNEL_OK")
</pallas_src>

<mosaic_0001>
module attributes {stable_mosaic.version = 11 : i64} {
  func.func @reviewdi_fused_kernel(%arg0: memref<16x1xi32, #tpu.memory_space<vmem>>, %arg1: memref<2x1xi32, #tpu.memory_space<vmem>>, %arg2: memref<2x16xf32, #tpu.memory_space<vmem>>, %arg3: memref<256x32xf32, #tpu.memory_space<vmem>>, %arg4: memref<32x192xf32, #tpu.memory_space<vmem>>, %arg5: memref<1x192xf32, #tpu.memory_space<vmem>>, %arg6: memref<32x32xf32, #tpu.memory_space<vmem>>, %arg7: memref<32x32xf32, #tpu.memory_space<vmem>>, %arg8: memref<32x32xf32, #tpu.memory_space<vmem>>, %arg9: memref<32x32xf32, #tpu.memory_space<vmem>>, %arg10: memref<32x32xf32, #tpu.memory_space<vmem>>, %arg11: memref<32x32xf32, #tpu.memory_space<vmem>>, %arg12: memref<1x32xf32, #tpu.memory_space<vmem>>, %arg13: memref<1x32xf32, #tpu.memory_space<vmem>>, %arg14: memref<32x16xf32, #tpu.memory_space<vmem>>, %arg15: memref<32x16xf32, #tpu.memory_space<vmem>>, %arg16: memref<1x16xf32, #tpu.memory_space<vmem>>, %arg17: memref<32x16xf32, #tpu.memory_space<vmem>>, %arg18: memref<32x16xf32, #tpu.memory_space<vmem>>, %arg19: memref<1x16xf32, #tpu.memory_space<vmem>>, %arg20: memref<16x32xf32, #tpu.memory_space<vmem>>, %arg21: memref<1x32xf32, #tpu.memory_space<vmem>>, %arg22: memref<32x256xf32, #tpu.memory_space<vmem>>, %arg23: memref<1x256xf32, #tpu.memory_space<vmem>>, %arg24: memref<2x256xf32, #tpu.memory_space<vmem>>, %arg25: memref<2x16xf32, #tpu.memory_space<vmem>>, %arg26: memref<2x16xf32, #tpu.memory_space<vmem>>, %arg27: memref<2x16xf32, #tpu.memory_space<vmem>>) attributes {dimension_semantics = [], scalar_prefetch = 0 : i64, scratch_operands = 0 : i64, tpu.core_type = #tpu.core_type<tc>} {
    %c0 = arith.constant 0 : index
    %c0_0 = arith.constant 0 : index
    %0 = vector.load %arg0[%c0, %c0_0] : memref<16x1xi32, #tpu.memory_space<vmem>>, vector<16x1xi32>
    %1 = tpu.iota {dimensions = array<i32: 1>} : vector<16x256xi32>
    %2 = vector.broadcast %0 : vector<16x1xi32> to vector<16x256xi32>
    %3 = arith.cmpi eq, %1, %2 : vector<16x256xi32>
    %4 = arith.extui %3 : vector<16x256xi1> to vector<16x256xi32>
    %5 = arith.sitofp %4 : vector<16x256xi32> to vector<16x256xf32>
    %c0_1 = arith.constant 0 : index
    %c0_2 = arith.constant 0 : index
    %6 = vector.load %arg3[%c0_1, %c0_2] : memref<256x32xf32, #tpu.memory_space<vmem>>, vector<256x32xf32>
    %cst = arith.constant dense<0.000000e+00> : vector<16x32xf32>
    %7 = tpu.matmul %5, %6, %cst {dimension_numbers = #tpu.dot_dimension_numbers<[1], [0], [0], [1], [0, 0, 1, 1], [], []>} : vector<16x256xf32>, vector<256x32xf32>, vector<16x32xf32> -> vector<16x32xf32>
    %c0_3 = arith.constant 0 : index
    %c0_4 = arith.constant 0 : index
    %8 = vector.load %arg4[%c0_3, %c0_4] : memref<32x192xf32, #tpu.memory_space<vmem>>, vector<32x192xf32>
    %cst_5 = arith.constant dense<0.000000e+00> : vector<16x192xf32>
    %9 = tpu.matmul %7, %8, %cst_5 {dimension_numbers = #tpu.dot_dimension_numbers<[1], [0], [0], [1], [0, 0, 1, 1], [], []>} : vector<16x32xf32>, vector<32x192xf32>, vector<16x192xf32> -> vector<16x192xf32>
    %c0_6 = arith.constant 0 : index
    %c0_7 = arith.constant 0 : index
    %10 = vector.load %arg5[%c0_6, %c0_7] : memref<1x192xf32, #tpu.memory_space<vmem>>, vector<1x192xf32>
    %11 = vector.broadcast %10 : vector<1x192xf32> to vector<16x192xf32>
    %12 = arith.addf %9, %11 : vector<16x192xf32>
    %13 = vector.extract_strided_slice %12 {offsets = [0, 0], sizes = [16, 32], strides = [1, 1]} : vector<16x192xf32> to vector<16x32xf32>
    %14 = vector.extract_strided_slice %13 {offsets = [0, 0], sizes = [2, 32], strides = [1, 1]} : vector<16x32xf32> to vector<2x32xf32>
    %15 = vector.extract_strided_slice %13 {offsets = [2, 0], sizes = [2, 32], strides = [1, 1]} : vector<16x32xf32> to vector<2x32xf32>
    %16 = vector.extract_strided_slice %13 {offsets = [4, 0], sizes = [2, 32], strides = [1, 1]} : vector<16x32xf32> to vector<2x32xf32>
    %17 = vector.extract_strided_slice %13 {offsets = [6, 0], sizes = [2, 32], strides = [1, 1]} : vector<16x32xf32> to vector<2x32xf32>
    %18 = vector.extract_strided_slice %13 {offsets = [8, 0], sizes = [2, 32], strides = [1, 1]} : vector<16x32xf32> to vector<2x32xf32>
    %19 = vector.extract_strided_slice %13 {offsets = [10, 0], sizes = [2, 32], strides = [1, 1]} : vector<16x32xf32> to vector<2x32xf32>
    %20 = vector.extract_strided_slice %13 {offsets = [12, 0], sizes = [2, 32], strides = [1, 1]} : vector<16x32xf32> to vector<2x32xf32>
    %21 = vector.extract_strided_slice %13 {offsets = [14, 0], sizes = [2, 32], strides = [1, 1]} : vector<16x32xf32> to vector<2x32xf32>
    %22 = vector.extract_strided_slice %12 {offsets = [0, 32], sizes = [16, 32], strides = [1, 1]} : vector<16x192xf32> to vector<16x32xf32>
    %23 = vector.extract_strided_slice %22 {offsets = [0, 0], sizes = [2, 32], strides = [1, 1]} : vector<16x32xf32> to vector<2x32xf32>
    %24 = vector.extract_strided_slice %22 {offsets = [2, 0], sizes = [2, 32], strides = [1, 1]} : vector<16x32xf32> to vector<2x32xf32>
    %25 = vector.extract_strided_slice %22 {offsets = [4, 0], sizes = [2, 32], strides = [1, 1]} : vector<16x32xf32> to vector<2x32xf32>
    %26 = vector.extract_strided_slice %22 {offsets = [6, 0], sizes = [2, 32], strides = [1, 1]} : vector<16x32xf32> to vector<2x32xf32>
    %27 = vector.extract_strided_slice %22 {offsets = [8, 0], sizes = [2, 32], strides = [1, 1]} : vector<16x32xf32> to vector<2x32xf32>
    %28 = vector.extract_strided_slice %22 {offsets = [10, 0], sizes = [2, 32], strides = [1, 1]} : vector<16x32xf32> to vector<2x32xf32>
    %29 = vector.extract_strided_slice %22 {offsets = [12, 0], sizes = [2, 32], strides = [1, 1]} : vector<16x32xf32> to vector<2x32xf32>
    %30 = vector.extract_strided_slice %22 {offsets = [14, 0], sizes = [2, 32], strides = [1, 1]} : vector<16x32xf32> to vector<2x32xf32>
    %31 = vector.extract_strided_slice %12 {offsets = [0, 64], sizes = [16, 32], strides = [1, 1]} : vector<16x192xf32> to vector<16x32xf32>
    %32 = vector.extract_strided_slice %31 {offsets = [0, 0], sizes = [2, 32], strides = [1, 1]} : vector<16x32xf32> to vector<2x32xf32>
    %33 = vector.extract_strided_slice %31 {offsets = [2, 0], sizes = [2, 32], strides = [1, 1]} : vector<16x32xf32> to vector<2x32xf32>
    %34 = vector.extract_strided_slice %31 {offsets = [4, 0], sizes = [2, 32], strides = [1, 1]} : vector<16x32xf32> to vector<2x32xf32>
    %35 = vector.extract_strided_slice %31 {offsets = [6, 0], sizes = [2, 32], strides = [1, 1]} : vector<16x32xf32> to vector<2x32xf32>
    %36 = vector.extract_strided_slice %31 {offsets = [8, 0], sizes = [2, 32], strides = [1, 1]} : vector<16x32xf32> to vector<2x32xf32>
    %37 = vector.extract_strided_slice %31 {offsets = [10, 0], sizes = [2, 32], strides = [1, 1]} : vector<16x32xf32> to vector<2x32xf32>
    %38 = vector.extract_strided_slice %31 {offsets = [12, 0], sizes = [2, 32], strides = [1, 1]} : vector<16x32xf32> to vector<2x32xf32>
    %39 = vector.extract_strided_slice %31 {offsets = [14, 0], sizes = [2, 32], strides = [1, 1]} : vector<16x32xf32> to vector<2x32xf32>
    %40 = vector.extract_strided_slice %12 {offsets = [0, 96], sizes = [16, 32], strides = [1, 1]} : vector<16x192xf32> to vector<16x32xf32>
    %41 = vector.extract_strided_slice %40 {offsets = [0, 0], sizes = [2, 32], strides = [1, 1]} : vector<16x32xf32> to vector<2x32xf32>
    %42 = vector.extract_strided_slice %40 {offsets = [2, 0], sizes = [2, 32], strides = [1, 1]} : vector<16x32xf32> to vector<2x32xf32>
    %43 = vector.extract_strided_slice %40 {offsets = [4, 0], sizes = [2, 32], strides = [1, 1]} : vector<16x32xf32> to vector<2x32xf32>
    %44 = vector.extract_strided_slice %40 {offsets = [6, 0], sizes = [2, 32], strides = [1, 1]} : vector<16x32xf32> to vector<2x32xf32>
    %45 = vector.extract_strided_slice %40 {offsets = [8, 0], sizes = [2, 32], strides = [1, 1]} : vector<16x32xf32> to vector<2x32xf32>
    %46 = vector.extract_strided_slice %40 {offsets = [10, 0], sizes = [2, 32], strides = [1, 1]} : vector<16x32xf32> to vector<2x32xf32>
    %47 = vector.extract_strided_slice %40 {offsets = [12, 0], sizes = [2, 32], strides = [1, 1]} : vector<16x32xf32> to vector<2x32xf32>
    %48 = vector.extract_strided_slice %40 {offsets = [14, 0], sizes = [2, 32], strides = [1, 1]} : vector<16x32xf32> to vector<2x32xf32>
    %49 = vector.extract_strided_slice %12 {offsets = [0, 128], sizes = [16, 32], strides = [1, 1]} : vector<16x192xf32> to vector<16x32xf32>
    %50 = vector.extract_strided_slice %49 {offsets = [0, 0], sizes = [2, 32], strides = [1, 1]} : vector<16x32xf32> to vector<2x32xf32>
    %51 = vector.extract_strided_slice %49 {offsets = [2, 0], sizes = [2, 32], strides = [1, 1]} : vector<16x32xf32> to vector<2x32xf32>
    %52 = vector.extract_strided_slice %49 {offsets = [4, 0], sizes = [2, 32], strides = [1, 1]} : vector<16x32xf32> to vector<2x32xf32>
    %53 = vector.extract_strided_slice %49 {offsets = [6, 0], sizes = [2, 32], strides = [1, 1]} : vector<16x32xf32> to vector<2x32xf32>
    %54 = vector.extract_strided_slice %49 {offsets = [8, 0], sizes = [2, 32], strides = [1, 1]} : vector<16x32xf32> to vector<2x32xf32>
    %55 = vector.extract_strided_slice %49 {offsets = [10, 0], sizes = [2, 32], strides = [1, 1]} : vector<16x32xf32> to vector<2x32xf32>
    %56 = vector.extract_strided_slice %49 {offsets = [12, 0], sizes = [2, 32], strides = [1, 1]} : vector<16x32xf32> to vector<2x32xf32>
    %57 = vector.extract_strided_slice %49 {offsets = [14, 0], sizes = [2, 32], strides = [1, 1]} : vector<16x32xf32> to vector<2x32xf32>
    %58 = vector.extract_strided_slice %12 {offsets = [0, 160], sizes = [16, 32], strides = [1, 1]} : vector<16x192xf32> to vector<16x32xf32>
    %59 = vector.extract_strided_slice %58 {offsets = [0, 0], sizes = [2, 32], strides = [1, 1]} : vector<16x32xf32> to vector<2x32xf32>
    %60 = vector.extract_strided_slice %58 {offsets = [2, 0], sizes = [2, 32], strides = [1, 1]} : vector<16x32xf32> to vector<2x32xf32>
    %61 = vector.extract_strided_slice %58 {offsets = [4, 0], sizes = [2, 32], strides = [1, 1]} : vector<16x32xf32> to vector<2x32xf32>
    %62 = vector.extract_strided_slice %58 {offsets = [6, 0], sizes = [2, 32], strides = [1, 1]} : vector<16x32xf32> to vector<2x32xf32>
    %63 = vector.extract_strided_slice %58 {offsets = [8, 0], sizes = [2, 32], strides = [1, 1]} : vector<16x32xf32> to vector<2x32xf32>
    %64 = vector.extract_strided_slice %58 {offsets = [10, 0], sizes = [2, 32], strides = [1, 1]} : vector<16x32xf32> to vector<2x32xf32>
    %65 = vector.extract_strided_slice %58 {offsets = [12, 0], sizes = [2, 32], strides = [1, 1]} : vector<16x32xf32> to vector<2x32xf32>
    %66 = vector.extract_strided_slice %58 {offsets = [14, 0], sizes = [2, 32], strides = [1, 1]} : vector<16x32xf32> to vector<2x32xf32>
    %c0_8 = arith.constant 0 : index
    %c0_9 = arith.constant 0 : index
    %67 = vector.load %arg6[%c0_8, %c0_9] : memref<32x32xf32, #tpu.memory_space<vmem>>, vector<32x32xf32>
    %c0_10 = arith.constant 0 : index
    %c0_11 = arith.constant 0 : index
    %68 = vector.load %arg7[%c0_10, %c0_11] : memref<32x32xf32, #tpu.memory_space<vmem>>, vector<32x32xf32>
    %c0_12 = arith.constant 0 : index
    %c0_13 = arith.constant 0 : index
    %69 = vector.load %arg8[%c0_12, %c0_13] : memref<32x32xf32, #tpu.memory_space<vmem>>, vector<32x32xf32>
    %c0_14 = arith.constant 0 : index
    %c0_15 = arith.constant 0 : index
    %70 = vector.load %arg9[%c0_14, %c0_15] : memref<32x32xf32, #tpu.memory_space<vmem>>, vector<32x32xf32>
    %c0_16 = arith.constant 0 : index
    %c0_17 = arith.constant 0 : index
    %71 = vector.load %arg10[%c0_16, %c0_17] : memref<32x32xf32, #tpu.memory_space<vmem>>, vector<32x32xf32>
    %c0_18 = arith.constant 0 : index
    %c0_19 = arith.constant 0 : index
    %72 = vector.load %arg11[%c0_18, %c0_19] : memref<32x32xf32, #tpu.memory_space<vmem>>, vector<32x32xf32>
    %c0_20 = arith.constant 0 : index
    %c0_21 = arith.constant 0 : index
    %73 = vector.load %arg12[%c0_20, %c0_21] : memref<1x32xf32, #tpu.memory_space<vmem>>, vector<1x32xf32>
    %74 = vector.shape_cast %73 : vector<1x32xf32> to vector<1x32xf32>
    %75 = vector.broadcast %74 : vector<1x32xf32> to vector<2x32xf32>
    %c0_22 = arith.constant 0 : index
    %c0_23 = arith.constant 0 : index
    %76 = vector.load %arg13[%c0_22, %c0_23] : memref<1x32xf32, #tpu.memory_space<vmem>>, vector<1x32xf32>
    %77 = vector.shape_cast %76 : vector<1x32xf32> to vector<1x32xf32>
    %78 = vector.broadcast %77 : vector<1x32xf32> to vector<2x32xf32>
    %c0_24 = arith.constant 0 : index
    %c0_25 = arith.constant 0 : index
    %79 = vector.load %arg1[%c0_24, %c0_25] : memref<2x1xi32, #tpu.memory_space<vmem>>, vector<2x1xi32>
    %cst_26 = arith.constant 0.000000e+00 : f32
    %80 = vector.broadcast %cst_26 : f32 to vector<2x32xf32>
    %cst_27 = arith.constant 0.000000e+00 : f32
    %81 = vector.broadcast %cst_27 : f32 to vector<2x32xf32>
    %cst_28 = arith.constant 0.000000e+00 : f32
    %82 = vector.broadcast %cst_28 : f32 to vector<2x32xf32>
    %cst_29 = arith.constant 0.000000e+00 : f32
    %83 = vector.broadcast %cst_29 : f32 to vector<2x32xf32>
    %cst_30 = arith.constant dense<0.000000e+00> : vector<2x32xf32>
    %84 = tpu.matmul %80, %67, %cst_30 {dimension_numbers = #tpu.dot_dimension_numbers<[1], [0], [0], [1], [0, 0, 1, 1], [], []>} : vector<2x32xf32>, vector<32x32xf32>, vector<2x32xf32> -> vector<2x32xf32>
    %85 = arith.addf %14, %84 : vector<2x32xf32>
    %86 = arith.negf %85 : vector<2x32xf32>
    %87 = math.exp %86 : vector<2x32xf32>
    %cst_31 = arith.constant 1.000000e+00 : f32
    %88 = vector.broadcast %cst_31 : f32 to vector<2x32xf32>
    %89 = arith.addf %88, %87 : vector<2x32xf32>
    %90 = arith.divf %88, %89 : vector<2x32xf32>
    %cst_32 = arith.constant dense<0.000000e+00> : vector<2x32xf32>
    %91 = tpu.matmul %80, %68, %cst_32 {dimension_numbers = #tpu.dot_dimension_numbers<[1], [0], [0], [1], [0, 0, 1, 1], [], []>} : vector<2x32xf32>, vector<32x32xf32>, vector<2x32xf32> -> vector<2x32xf32>
    %92 = arith.addf %23, %91 : vector<2x32xf32>
    %93 = arith.negf %92 : vector<2x32xf32>
    %94 = math.exp %93 : vector<2x32xf32>
    %cst_33 = arith.constant 1.000000e+00 : f32
    %95 = vector.broadcast %cst_33 : f32 to vector<2x32xf32>
    %96 = arith.addf %95, %94 : vector<2x32xf32>
    %97 = arith.divf %95, %96 : vector<2x32xf32>
    %cst_34 = arith.constant dense<0.000000e+00> : vector<2x32xf32>
    %98 = tpu.matmul %80, %69, %cst_34 {dimension_numbers = #tpu.dot_dimension_numbers<[1], [0], [0], [1], [0, 0, 1, 1], [], []>} : vector<2x32xf32>, vector<32x32xf32>, vector<2x32xf32> -> vector<2x32xf32>
    %99 = arith.addf %98, %75 : vector<2x32xf32>
    %100 = arith.mulf %90, %99 : vector<2x32xf32>
    %101 = arith.addf %32, %100 : vector<2x32xf32>
    %102 = math.tanh %101 : vector<2x32xf32>
    %cst_35 = arith.constant 1.000000e+00 : f32
    %103 = vector.broadcast %cst_35 : f32 to vector<2x32xf32>
    %104 = arith.subf %103, %97 : vector<2x32xf32>
    %105 = arith.mulf %104, %102 : vector<2x32xf32>
    %106 = arith.mulf %97, %80 : vector<2x32xf32>
    %107 = arith.addf %105, %106 : vector<2x32xf32>
    %cst_36 = arith.constant dense<0.000000e+00> : vector<2x32xf32>
    %108 = tpu.matmul %81, %70, %cst_36 {dimension_numbers = #tpu.dot_dimension_numbers<[1], [0], [0], [1], [0, 0, 1, 1], [], []>} : vector<2x32xf32>, vector<32x32xf32>, vector<2x32xf32> -> vector<2x32xf32>
    %109 = arith.addf %48, %108 : vector<2x32xf32>
    %110 = arith.negf %109 : vector<2x32xf32>
    %111 = math.exp %110 : vector<2x32xf32>
    %cst_37 = arith.constant 1.000000e+00 : f32
    %112 = vector.broadcast %cst_37 : f32 to vector<2x32xf32>
    %113 = arith.addf %112, %111 : vector<2x32xf32>
    %114 = arith.divf %112, %113 : vector<2x32xf32>
    %cst_38 = arith.constant dense<0.000000e+00> : vector<2x32xf32>
    %115 = tpu.matmul %81, %71, %cst_38 {dimension_numbers = #tpu.dot_dimension_numbers<[1], [0], [0], [1], [0, 0, 1, 1], [], []>} : vector<2x32xf32>, vector<32x32xf32>, vector<2x32xf32> -> vector<2x32xf32>
    %116 = arith.addf %57, %115 : vector<2x32xf32>
    %117 = arith.negf %116 : vector<2x32xf32>
    %118 = math.exp %117 : vector<2x32xf32>
    %cst_39 = arith.constant 1.000000e+00 : f32
    %119 = vector.broadcast %cst_39 : f32 to vector<2x32xf32>
    %120 = arith.addf %119, %118 : vector<2x32xf32>
    %121 = arith.divf %119, %120 : vector<2x32xf32>
    %cst_40 = arith.constant dense<0.000000e+00> : vector<2x32xf32>
    %122 = tpu.matmul %81, %72, %cst_40 {dimension_numbers = #tpu.dot_dimension_numbers<[1], [0], [0], [1], [0, 0, 1, 1], [], []>} : vector<2x32xf32>, vector<32x32xf32>, vector<2x32xf32> -> vector<2x32xf32>
    %123 = arith.addf %122, %78 : vector<2x32xf32>
    %124 = arith.mulf %114, %123 : vector<2x32xf32>
    %125 = arith.addf %66, %124 : vector<2x32xf32>
    %126 = math.tanh %125 : vector<2x32xf32>
    %cst_41 = arith.constant 1.000000e+00 : f32
    %127 = vector.broadcast %cst_41 : f32 to vector<2x32xf32>
    %128 = arith.subf %127, %121 : vector<2x32xf32>
    %129 = arith.mulf %128, %126 : vector<2x32xf32>
    %130 = arith.mulf %121, %81 : vector<2x32xf32>
    %131 = arith.addf %129, %130 : vector<2x32xf32>
    %c1_i32 = arith.constant 1 : i32
    %132 = vector.broadcast %c1_i32 : i32 to vector<2x1xi32>
    %133 = arith.cmpi eq, %79, %132 : vector<2x1xi32>
    %134 = arith.extui %133 : vector<2x1xi1> to vector<2x1xi32>
    %135 = arith.sitofp %134 : vector<2x1xi32> to vector<2x1xf32>
    %c8_i32 = arith.constant 8 : i32
    %136 = vector.broadcast %c8_i32 : i32 to vector<2x1xi32>
    %137 = arith.cmpi eq, %79, %136 : vector<2x1xi32>
    %138 = arith.extui %137 : vector<2x1xi1> to vector<2x1xi32>
    %139 = arith.sitofp %138 : vector<2x1xi32> to vector<2x1xf32>
    %140 = arith.subf %107, %82 : vector<2x32xf32>
    %141 = vector.broadcast %135 : vector<2x1xf32> to vector<2x32xf32>
    %142 = arith.mulf %141, %140 : vector<2x32xf32>
    %143 = arith.addf %82, %142 : vector<2x32xf32>
    %144 = arith.subf %131, %83 : vector<2x32xf32>
    %145 = vector.broadcast %139 : vector<2x1xf32> to vector<2x32xf32>
    %146 = arith.mulf %145, %144 : vector<2x32xf32>
    %147 = arith.addf %83, %146 : vector<2x32xf32>
    %cst_42 = arith.constant dense<0.000000e+00> : vector<2x32xf32>
    %148 = tpu.matmul %107, %67, %cst_42 {dimension_numbers = #tpu.dot_dimension_numbers<[1], [0], [0], [1], [0, 0, 1, 1], [], []>} : vector<2x32xf32>, vector<32x32xf32>, vector<2x32xf32> -> vector<2x32xf32>
    %149 = arith.addf %15, %148 : vector<2x32xf32>
    %150 = arith.negf %149 : vector<2x32xf32>
    %151 = math.exp %150 : vector<2x32xf32>
    %cst_43 = arith.constant 1.000000e+00 : f32
    %152 = vector.broadcast %cst_43 : f32 to vector<2x32xf32>
    %153 = arith.addf %152, %151 : vector<2x32xf32>
    %154 = arith.divf %152, %153 : vector<2x32xf32>
    %cst_44 = arith.constant dense<0.000000e+00> : vector<2x32xf32>
    %155 = tpu.matmul %107, %68, %cst_44 {dimension_numbers = #tpu.dot_dimension_numbers<[1], [0], [0], [1], [0, 0, 1, 1], [], []>} : vector<2x32xf32>, vector<32x32xf32>, vector<2x32xf32> -> vector<2x32xf32>
    %156 = arith.addf %24, %155 : vector<2x32xf32>
    %157 = arith.negf %156 : vector<2x32xf32>
    %158 = math.exp %157 : vector<2x32xf32>
    %cst_45 = arith.constant 1.000000e+00 : f32
    %159 = vector.broadcast %cst_45 : f32 to vector<2x32xf32>
    %160 = arith.addf %159, %158 : vector<2x32xf32>
    %161 = arith.divf %159, %160 : vector<2x32xf32>
    %cst_46 = arith.constant dense<0.000000e+00> : vector<2x32xf32>
    %162 = tpu.matmul %107, %69, %cst_46 {dimension_numbers = #tpu.dot_dimension_numbers<[1], [0], [0], [1], [0, 0, 1, 1], [], []>} : vector<2x32xf32>, vector<32x32xf32>, vector<2x32xf32> -> vector<2x32xf32>
    %163 = arith.addf %162, %75 : vector<2x32xf32>
    %164 = arith.mulf %154, %163 : vector<2x32xf32>
    %165 = arith.addf %33, %164 : vector<2x32xf32>
    %166 = math.tanh %165 : vector<2x32xf32>
    %cst_47 = arith.constant 1.000000e+00 : f32
    %167 = vector.broadcast %cst_47 : f32 to vector<2x32xf32>
    %168 = arith.subf %167, %161 : vector<2x32xf32>
    %169 = arith.mulf %168, %166 : vector<2x32xf32>
    %170 = arith.mulf %161, %107 : vector<2x32xf32>
    %171 = arith.addf %169, %170 : vector<2x32xf32>
    %cst_48 = arith.constant dense<0.000000e+00> : vector<2x32xf32>
    %172 = tpu.matmul %131, %70, %cst_48 {dimension_numbers = #tpu.dot_dimension_numbers<[1], [0], [0], [1], [0, 0, 1, 1], [], []>} : vector<2x32xf32>, vector<32x32xf32>, vector<2x32xf32> -> vector<2x32xf32>
    %173 = arith.addf %47, %172 : vector<2x32xf32>
    %174 = arith.negf %173 : vector<2x32xf32>
    %175 = math.exp %174 : vector<2x32xf32>
    %cst_49 = arith.constant 1.000000e+00 : f32
    %176 = vector.broadcast %cst_49 : f32 to vector<2x32xf32>
    %177 = arith.addf %176, %175 : vector<2x32xf32>
    %178 = arith.divf %176, %177 : vector<2x32xf32>
    %cst_50 = arith.constant dense<0.000000e+00> : vector<2x32xf32>
    %179 = tpu.matmul %131, %71, %cst_50 {dimension_numbers = #tpu.dot_dimension_numbers<[1], [0], [0], [1], [0, 0, 1, 1], [], []>} : vector<2x32xf32>, vector<32x32xf32>, vector<2x32xf32> -> vector<2x32xf32>
    %180 = arith.addf %56, %179 : vector<2x32xf32>
    %181 = arith.negf %180 : vector<2x32xf32>
    %182 = math.exp %181 : vector<2x32xf32>
    %cst_51 = arith.constant 1.000000e+00 : f32
    %183 = vector.broadcast %cst_51 : f32 to vector<2x32xf32>
    %184 = arith.addf %183, %182 : vector<2x32xf32>
    %185 = arith.divf %183, %184 : vector<2x32xf32>
    %cst_52 = arith.constant dense<0.000000e+00> : vector<2x32xf32>
    %186 = tpu.matmul %131, %72, %cst_52 {dimension_numbers = #tpu.dot_dimension_numbers<[1], [0], [0], [1], [0, 0, 1, 1], [], []>} : vector<2x32xf32>, vector<32x32xf32>, vector<2x32xf32> -> vector<2x32xf32>
    %187 = arith.addf %186, %78 : vector<2x32xf32>
    %188 = arith.mulf %178, %187 : vector<2x32xf32>
    %189 = arith.addf %65, %188 : vector<2x32xf32>
    %190 = math.tanh %189 : vector<2x32xf32>
    %cst_53 = arith.constant 1.000000e+00 : f32
    %191 = vector.broadcast %cst_53 : f32 to vector<2x32xf32>
    %192 = arith.subf %191, %185 : vector<2x32xf32>
    %193 = arith.mulf %192, %190 : vector<2x32xf32>
    %194 = arith.mulf %185, %131 : vector<2x32xf32>
    %195 = arith.addf %193, %194 : vector<2x32xf32>
    %c2_i32 = arith.constant 2 : i32
    %196 = vector.broadcast %c2_i32 : i32 to vector<2x1xi32>
    %197 = arith.cmpi eq, %79, %196 : vector<2x1xi32>
    %198 = arith.extui %197 : vector<2x1xi1> to vector<2x1xi32>
    %199 = arith.sitofp %198 : vector<2x1xi32> to vector<2x1xf32>
    %c7_i32 = arith.constant 7 : i32
    %200 = vector.broadcast %c7_i32 : i32 to vector<2x1xi32>
    %201 = arith.cmpi eq, %79, %200 : vector<2x1xi32>
    %202 = arith.extui %201 : vector<2x1xi1> to vector<2x1xi32>
    %203 = arith.sitofp %202 : vector<2x1xi32> to vector<2x1xf32>
    %204 = arith.subf %171, %143 : vector<2x32xf32>
    %205 = vector.broadcast %199 : vector<2x1xf32> to vector<2x32xf32>
    %206 = arith.mulf %205, %204 : vector<2x32xf32>
    %207 = arith.addf %143, %206 : vector<2x32xf32>
    %208 = arith.subf %195, %147 : vector<2x32xf32>
    %209 = vector.broadcast %203 : vector<2x1xf32> to vector<2x32xf32>
    %210 = arith.mulf %209, %208 : vector<2x32xf32>
    %211 = arith.addf %147, %210 : vector<2x32xf32>
    %cst_54 = arith.constant dense<0.000000e+00> : vector<2x32xf32>
    %212 = tpu.matmul %171, %67, %cst_54 {dimension_numbers = #tpu.dot_dimension_numbers<[1], [0], [0], [1], [0, 0, 1, 1], [], []>} : vector<2x32xf32>, vector<32x32xf32>, vector<2x32xf32> -> vector<2x32xf32>
    %213 = arith.addf %16, %212 : vector<2x32xf32>
    %214 = arith.negf %213 : vector<2x32xf32>
    %215 = math.exp %214 : vector<2x32xf32>
    %cst_55 = arith.constant 1.000000e+00 : f32
    %216 = vector.broadcast %cst_55 : f32 to vector<2x32xf32>
    %217 = arith.addf %216, %215 : vector<2x32xf32>
    %218 = arith.divf %216, %217 : vector<2x32xf32>
    %cst_56 = arith.constant dense<0.000000e+00> : vector<2x32xf32>
    %219 = tpu.matmul %171, %68, %cst_56 {dimension_numbers = #tpu.dot_dimension_numbers<[1], [0], [0], [1], [0, 0, 1, 1], [], []>} : vector<2x32xf32>, vector<32x32xf32>, vector<2x32xf32> -> vector<2x32xf32>
    %220 = arith.addf %25, %219 : vector<2x32xf32>
    %221 = arith.negf %220 : vector<2x32xf32>
    %222 = math.exp %221 : vector<2x32xf32>
    %cst_57 = arith.constant 1.000000e+00 : f32
    %223 = vector.broadcast %cst_57 : f32 to vector<2x32xf32>
    %224 = arith.addf %223, %222 : vector<2x32xf32>
    %225 = arith.divf %223, %224 : vector<2x32xf32>
    %cst_58 = arith.constant dense<0.000000e+00> : vector<2x32xf32>
    %226 = tpu.matmul %171, %69, %cst_58 {dimension_numbers = #tpu.dot_dimension_numbers<[1], [0], [0], [1], [0, 0, 1, 1], [], []>} : vector<2x32xf32>, vector<32x32xf32>, vector<2x32xf32> -> vector<2x32xf32>
    %227 = arith.addf %226, %75 : vector<2x32xf32>
    %228 = arith.mulf %218, %227 : vector<2x32xf32>
    %229 = arith.addf %34, %228 : vector<2x32xf32>
    %230 = math.tanh %229 : vector<2x32xf32>
    %cst_59 = arith.constant 1.000000e+00 : f32
    %231 = vector.broadcast %cst_59 : f32 to vector<2x32xf32>
    %232 = arith.subf %231, %225 : vector<2x32xf32>
    %233 = arith.mulf %232, %230 : vector<2x32xf32>
    %234 = arith.mulf %225, %171 : vector<2x32xf32>
    %235 = arith.addf %233, %234 : vector<2x32xf32>
    %cst_60 = arith.constant dense<0.000000e+00> : vector<2x32xf32>
    %236 = tpu.matmul %195, %70, %cst_60 {dimension_numbers = #tpu.dot_dimension_numbers<[1], [0], [0], [1], [0, 0, 1, 1], [], []>} : vector<2x32xf32>, vector<32x32xf32>, vector<2x32xf32> -> vector<2x32xf32>
    %237 = arith.addf %46, %236 : vector<2x32xf32>
    %238 = arith.negf %237 : vector<2x32xf32>
    %239 = math.exp %238 : vector<2x32xf32>
    %cst_61 = arith.constant 1.000000e+00 : f32
    %240 = vector.broadcast %cst_61 : f32 to vector<2x32xf32>
    %241 = arith.addf %240, %239 : vector<2x32xf32>
    %242 = arith.divf %240, %241 : vector<2x32xf32>
    %cst_62 = arith.constant dense<0.000000e+00> : vector<2x32xf32>
    %243 = tpu.matmul %195, %71, %cst_62 {dimension_numbers = #tpu.dot_dimension_numbers<[1], [0], [0], [1], [0, 0, 1, 1], [], []>} : vector<2x32xf32>, vector<32x32xf32>, vector<2x32xf32> -> vector<2x32xf32>
    %244 = arith.addf %55, %243 : vector<2x32xf32>
    %245 = arith.negf %244 : vector<2x32xf32>
    %246 = math.exp %245 : vector<2x32xf32>
    %cst_63 = arith.constant 1.000000e+00 : f32
    %247 = vector.broadcast %cst_63 : f32 to vector<2x32xf32>
    %248 = arith.addf %247, %246 : vector<2x32xf32>
    %249 = arith.divf %247, %248 : vector<2x32xf32>
    %cst_64 = arith.constant dense<0.000000e+00> : vector<2x32xf32>
    %250 = tpu.matmul %195, %72, %cst_64 {dimension_numbers = #tpu.dot_dimension_numbers<[1], [0], [0], [1], [0, 0, 1, 1], [], []>} : vector<2x32xf32>, vector<32x32xf32>, vector<2x32xf32> -> vector<2x32xf32>
    %251 = arith.addf %250, %78 : vector<2x32xf32>
    %252 = arith.mulf %242, %251 : vector<2x32xf32>
    %253 = arith.addf %64, %252 : vector<2x32xf32>
    %254 = math.tanh %253 : vector<2x32xf32>
    %cst_65 = arith.constant 1.000000e+00 : f32
    %255 = vector.broadcast %cst_65 : f32 to vector<2x32xf32>
    %256 = arith.subf %255, %249 : vector<2x32xf32>
    %257 = arith.mulf %256, %254 : vector<2x32xf32>
    %258 = arith.mulf %249, %195 : vector<2x32xf32>
    %259 = arith.addf %257, %258 : vector<2x32xf32>
    %c3_i32 = arith.constant 3 : i32
    %260 = vector.broadcast %c3_i32 : i32 to vector<2x1xi32>
    %261 = arith.cmpi eq, %79, %260 : vector<2x1xi32>
    %262 = arith.extui %261 : vector<2x1xi1> to vector<2x1xi32>
    %263 = arith.sitofp %262 : vector<2x1xi32> to vector<2x1xf32>
    %c6_i32 = arith.constant 6 : i32
    %264 = vector.broadcast %c6_i32 : i32 to vector<2x1xi32>
    %265 = arith.cmpi eq, %79, %264 : vector<2x1xi32>
    %266 = arith.extui %265 : vector<2x1xi1> to vector<2x1xi32>
    %267 = arith.sitofp %266 : vector<2x1xi32> to vector<2x1xf32>
    %268 = arith.subf %235, %207 : vector<2x32xf32>
    %269 = vector.broadcast %263 : vector<2x1xf32> to vector<2x32xf32>
    %270 = arith.mulf %269, %268 : vector<2x32xf32>
    %271 = arith.addf %207, %270 : vector<2x32xf32>
    %272 = arith.subf %259, %211 : vector<2x32xf32>
    %273 = vector.broadcast %267 : vector<2x1xf32> to vector<2x32xf32>
    %274 = arith.mulf %273, %272 : vector<2x32xf32>
    %275 = arith.addf %211, %274 : vector<2x32xf32>
    %cst_66 = arith.constant dense<0.000000e+00> : vector<2x32xf32>
    %276 = tpu.matmul %235, %67, %cst_66 {dimension_numbers = #tpu.dot_dimension_numbers<[1], [0], [0], [1], [0, 0, 1, 1], [], []>} : vector<2x32xf32>, vector<32x32xf32>, vector<2x32xf32> -> vector<2x32xf32>
    %277 = arith.addf %17, %276 : vector<2x32xf32>
    %278 = arith.negf %277 : vector<2x32xf32>
    %279 = math.exp %278 : vector<2x32xf32>
    %cst_67 = arith.constant 1.000000e+00 : f32
    %280 = vector.broadcast %cst_67 : f32 to vector<2x32xf32>
    %281 = arith.addf %280, %279 : vector<2x32xf32>
    %282 = arith.divf %280, %281 : vector<2x32xf32>
    %cst_68 = arith.constant dense<0.000000e+00> : vector<2x32xf32>
    %283 = tpu.matmul %235, %68, %cst_68 {dimension_numbers = #tpu.dot_dimension_numbers<[1], [0], [0], [1], [0, 0, 1, 1], [], []>} : vector<2x32xf32>, vector<32x32xf32>, vector<2x32xf32> -> vector<2x32xf32>
    %284 = arith.addf %26, %283 : vector<2x32xf32>
    %285 = arith.negf %284 : vector<2x32xf32>
    %286 = math.exp %285 : vector<2x32xf32>
    %cst_69 = arith.constant 1.000000e+00 : f32
    %287 = vector.broadcast %cst_69 : f32 to vector<2x32xf32>
    %288 = arith.addf %287, %286 : vector<2x32xf32>
    %289 = arith.divf %287, %288 : vector<2x32xf32>
    %cst_70 = arith.constant dense<0.000000e+00> : vector<2x32xf32>
    %290 = tpu.matmul %235, %69, %cst_70 {dimension_numbers = #tpu.dot_dimension_numbers<[1], [0], [0], [1], [0, 0, 1, 1], [], []>} : vector<2x32xf32>, vector<32x32xf32>, vector<2x32xf32> -> vector<2x32xf32>
    %291 = arith.addf %290, %75 : vector<2x32xf32>
    %292 = arith.mulf %282, %291 : vector<2x32xf32>
    %293 = arith.addf %35, %292 : vector<2x32xf32>
    %294 = math.tanh %293 : vector<2x32xf32>
    %cst_71 = arith.constant 1.000000e+00 : f32
    %295 = vector.broadcast %cst_71 : f32 to vector<2x32xf32>
    %296 = arith.subf %295, %289 : vector<2x32xf32>
    %297 = arith.mulf %296, %294 : vector<2x32xf32>
    %298 = arith.mulf %289, %235 : vector<2x32xf32>
    %299 = arith.addf %297, %298 : vector<2x32xf32>
    %cst_72 = arith.constant dense<0.000000e+00> : vector<2x32xf32>
    %300 = tpu.matmul %259, %70, %cst_72 {dimension_numbers = #tpu.dot_dimension_numbers<[1], [0], [0], [1], [0, 0, 1, 1], [], []>} : vector<2x32xf32>, vector<32x32xf32>, vector<2x32xf32> -> vector<2x32xf32>
    %301 = arith.addf %45, %300 : vector<2x32xf32>
    %302 = arith.negf %301 : vector<2x32xf32>
    %303 = math.exp %302 : vector<2x32xf32>
    %cst_73 = arith.constant 1.000000e+00 : f32
    %304 = vector.broadcast %cst_73 : f32 to vector<2x32xf32>
    %305 = arith.addf %304, %303 : vector<2x32xf32>
    %306 = arith.divf %304, %305 : vector<2x32xf32>
    %cst_74 = arith.constant dense<0.000000e+00> : vector<2x32xf32>
    %307 = tpu.matmul %259, %71, %cst_74 {dimension_numbers = #tpu.dot_dimension_numbers<[1], [0], [0], [1], [0, 0, 1, 1], [], []>} : vector<2x32xf32>, vector<32x32xf32>, vector<2x32xf32> -> vector<2x32xf32>
    %308 = arith.addf %54, %307 : vector<2x32xf32>
    %309 = arith.negf %308 : vector<2x32xf32>
    %310 = math.exp %309 : vector<2x32xf32>
    %cst_75 = arith.constant 1.000000e+00 : f32
    %311 = vector.broadcast %cst_75 : f32 to vector<2x32xf32>
    %312 = arith.addf %311, %310 : vector<2x32xf32>
    %313 = arith.divf %311, %312 : vector<2x32xf32>
    %cst_76 = arith.constant dense<0.000000e+00> : vector<2x32xf32>
    %314 = tpu.matmul %259, %72, %cst_76 {dimension_numbers = #tpu.dot_dimension_numbers<[1], [0], [0], [1], [0, 0, 1, 1], [], []>} : vector<2x32xf32>, vector<32x32xf32>, vector<2x32xf32> -> vector<2x32xf32>
    %315 = arith.addf %314, %78 : vector<2x32xf32>
    %316 = arith.mulf %306, %315 : vector<2x32xf32>
    %317 = arith.addf %63, %316 : vector<2x32xf32>
    %318 = math.tanh %317 : vector<2x32xf32>
    %cst_77 = arith.constant 1.000000e+00 : f32
    %319 = vector.broadcast %cst_77 : f32 to vector<2x32xf32>
    %320 = arith.subf %319, %313 : vector<2x32xf32>
    %321 = arith.mulf %320, %318 : vector<2x32xf32>
    %322 = arith.mulf %313, %259 : vector<2x32xf32>
    %323 = arith.addf %321, %322 : vector<2x32xf32>
    %c4_i32 = arith.constant 4 : i32
    %324 = vector.broadcast %c4_i32 : i32 to vector<2x1xi32>
    %325 = arith.cmpi eq, %79, %324 : vector<2x1xi32>
    %326 = arith.extui %325 : vector<2x1xi1> to vector<2x1xi32>
    %327 = arith.sitofp %326 : vector<2x1xi32> to vector<2x1xf32>
    %c5_i32 = arith.constant 5 : i32
    %328 = vector.broadcast %c5_i32 : i32 to vector<2x1xi32>
    %329 = arith.cmpi eq, %79, %328 : vector<2x1xi32>
    %330 = arith.extui %329 : vector<2x1xi1> to vector<2x1xi32>
    %331 = arith.sitofp %330 : vector<2x1xi32> to vector<2x1xf32>
    %332 = arith.subf %299, %271 : vector<2x32xf32>
    %333 = vector.broadcast %327 : vector<2x1xf32> to vector<2x32xf32>
    %334 = arith.mulf %333, %332 : vector<2x32xf32>
    %335 = arith.addf %271, %334 : vector<2x32xf32>
    %336 = arith.subf %323, %275 : vector<2x32xf32>
    %337 = vector.broadcast %331 : vector<2x1xf32> to vector<2x32xf32>
    %338 = arith.mulf %337, %336 : vector<2x32xf32>
    %339 = arith.addf %275, %338 : vector<2x32xf32>
    %cst_78 = arith.constant dense<0.000000e+00> : vector<2x32xf32>
    %340 = tpu.matmul %299, %67, %cst_78 {dimension_numbers = #tpu.dot_dimension_numbers<[1], [0], [0], [1], [0, 0, 1, 1], [], []>} : vector<2x32xf32>, vector<32x32xf32>, vector<2x32xf32> -> vector<2x32xf32>
    %341 = arith.addf %18, %340 : vector<2x32xf32>
    %342 = arith.negf %341 : vector<2x32xf32>
    %343 = math.exp %342 : vector<2x32xf32>
    %cst_79 = arith.constant 1.000000e+00 : f32
    %344 = vector.broadcast %cst_79 : f32 to vector<2x32xf32>
    %345 = arith.addf %344, %343 : vector<2x32xf32>
    %346 = arith.divf %344, %345 : vector<2x32xf32>
    %cst_80 = arith.constant dense<0.000000e+00> : vector<2x32xf32>
    %347 = tpu.matmul %299, %68, %cst_80 {dimension_numbers = #tpu.dot_dimension_numbers<[1], [0], [0], [1], [0, 0, 1, 1], [], []>} : vector<2x32xf32>, vector<32x32xf32>, vector<2x32xf32> -> vector<2x32xf32>
    %348 = arith.addf %27, %347 : vector<2x32xf32>
    %349 = arith.negf %348 : vector<2x32xf32>
    %350 = math.exp %349 : vector<2x32xf32>
    %cst_81 = arith.constant 1.000000e+00 : f32
    %351 = vector.broadcast %cst_81 : f32 to vector<2x32xf32>
    %352 = arith.addf %351, %350 : vector<2x32xf32>
    %353 = arith.divf %351, %352 : vector<2x32xf32>
    %cst_82 = arith.constant dense<0.000000e+00> : vector<2x32xf32>
    %354 = tpu.matmul %299, %69, %cst_82 {dimension_numbers = #tpu.dot_dimension_numbers<[1], [0], [0], [1], [0, 0, 1, 1], [], []>} : vector<2x32xf32>, vector<32x32xf32>, vector<2x32xf32> -> vector<2x32xf32>
    %355 = arith.addf %354, %75 : vector<2x32xf32>
    %356 = arith.mulf %346, %355 : vector<2x32xf32>
    %357 = arith.addf %36, %356 : vector<2x32xf32>
    %358 = math.tanh %357 : vector<2x32xf32>
    %cst_83 = arith.constant 1.000000e+00 : f32
    %359 = vector.broadcast %cst_83 : f32 to vector<2x32xf32>
    %360 = arith.subf %359, %353 : vector<2x32xf32>
    %361 = arith.mulf %360, %358 : vector<2x32xf32>
    %362 = arith.mulf %353, %299 : vector<2x32xf32>
    %363 = arith.addf %361, %362 : vector<2x32xf32>
    %cst_84 = arith.constant dense<0.000000e+00> : vector<2x32xf32>
    %364 = tpu.matmul %323, %70, %cst_84 {dimension_numbers = #tpu.dot_dimension_numbers<[1], [0], [0], [1], [0, 0, 1, 1], [], []>} : vector<2x32xf32>, vector<32x32xf32>, vector<2x32xf32> -> vector<2x32xf32>
    %365 = arith.addf %44, %364 : vector<2x32xf32>
    %366 = arith.negf %365 : vector<2x32xf32>
    %367 = math.exp %366 : vector<2x32xf32>
    %cst_85 = arith.constant 1.000000e+00 : f32
    %368 = vector.broadcast %cst_85 : f32 to vector<2x32xf32>
    %369 = arith.addf %368, %367 : vector<2x32xf32>
    %370 = arith.divf %368, %369 : vector<2x32xf32>
    %cst_86 = arith.constant dense<0.000000e+00> : vector<2x32xf32>
    %371 = tpu.matmul %323, %71, %cst_86 {dimension_numbers = #tpu.dot_dimension_numbers<[1], [0], [0], [1], [0, 0, 1, 1], [], []>} : vector<2x32xf32>, vector<32x32xf32>, vector<2x32xf32> -> vector<2x32xf32>
    %372 = arith.addf %53, %371 : vector<2x32xf32>
    %373 = arith.negf %372 : vector<2x32xf32>
    %374 = math.exp %373 : vector<2x32xf32>
    %cst_87 = arith.constant 1.000000e+00 : f32
    %375 = vector.broadcast %cst_87 : f32 to vector<2x32xf32>
    %376 = arith.addf %375, %374 : vector<2x32xf32>
    %377 = arith.divf %375, %376 : vector<2x32xf32>
    %cst_88 = arith.constant dense<0.000000e+00> : vector<2x32xf32>
    %378 = tpu.matmul %323, %72, %cst_88 {dimension_numbers = #tpu.dot_dimension_numbers<[1], [0], [0], [1], [0, 0, 1, 1], [], []>} : vector<2x32xf32>, vector<32x32xf32>, vector<2x32xf32> -> vector<2x32xf32>
    %379 = arith.addf %378, %78 : vector<2x32xf32>
    %380 = arith.mulf %370, %379 : vector<2x32xf32>
    %381 = arith.addf %62, %380 : vector<2x32xf32>
    %382 = math.tanh %381 : vector<2x32xf32>
    %cst_89 = arith.constant 1.000000e+00 : f32
    %383 = vector.broadcast %cst_89 : f32 to vector<2x32xf32>
    %384 = arith.subf %383, %377 : vector<2x32xf32>
    %385 = arith.mulf %384, %382 : vector<2x32xf32>
    %386 = arith.mulf %377, %323 : vector<2x32xf32>
    %387 = arith.addf %385, %386 : vector<2x32xf32>
    %c5_i32_90 = arith.constant 5 : i32
    %388 = vector.broadcast %c5_i32_90 : i32 to vector<2x1xi32>
    %389 = arith.cmpi eq, %79, %388 : vector<2x1xi32>
    %390 = arith.extui %389 : vector<2x1xi1> to vector<2x1xi32>
    %391 = arith.sitofp %390 : vector<2x1xi32> to vector<2x1xf32>
    %c4_i32_91 = arith.constant 4 : i32
    %392 = vector.broadcast %c4_i32_91 : i32 to vector<2x1xi32>
    %393 = arith.cmpi eq, %79, %392 : vector<2x1xi32>
    %394 = arith.extui %393 : vector<2x1xi1> to vector<2x1xi32>
    %395 = arith.sitofp %394 : vector<2x1xi32> to vector<2x1xf32>
    %396 = arith.subf %363, %335 : vector<2x32xf32>
    %397 = vector.broadcast %391 : vector<2x1xf32> to vector<2x32xf32>
    %398 = arith.mulf %397, %396 : vector<2x32xf32>
    %399 = arith.addf %335, %398 : vector<2x32xf32>
    %400 = arith.subf %387, %339 : vector<2x32xf32>
    %401 = vector.broadcast %395 : vector<2x1xf32> to vector<2x32xf32>
    %402 = arith.mulf %401, %400 : vector<2x32xf32>
    %403 = arith.addf %339, %402 : vector<2x32xf32>
    %cst_92 = arith.constant dense<0.000000e+00> : vector<2x32xf32>
    %404 = tpu.matmul %363, %67, %cst_92 {dimension_numbers = #tpu.dot_dimension_numbers<[1], [0], [0], [1], [0, 0, 1, 1], [], []>} : vector<2x32xf32>, vector<32x32xf32>, vector<2x32xf32> -> vector<2x32xf32>
    %405 = arith.addf %19, %404 : vector<2x32xf32>
    %406 = arith.negf %405 : vector<2x32xf32>
    %407 = math.exp %406 : vector<2x32xf32>
    %cst_93 = arith.constant 1.000000e+00 : f32
    %408 = vector.broadcast %cst_93 : f32 to vector<2x32xf32>
    %409 = arith.addf %408, %407 : vector<2x32xf32>
    %410 = arith.divf %408, %409 : vector<2x32xf32>
    %cst_94 = arith.constant dense<0.000000e+00> : vector<2x32xf32>
    %411 = tpu.matmul %363, %68, %cst_94 {dimension_numbers = #tpu.dot_dimension_numbers<[1], [0], [0], [1], [0, 0, 1, 1], [], []>} : vector<2x32xf32>, vector<32x32xf32>, vector<2x32xf32> -> vector<2x32xf32>
    %412 = arith.addf %28, %411 : vector<2x32xf32>
    %413 = arith.negf %412 : vector<2x32xf32>
    %414 = math.exp %413 : vector<2x32xf32>
    %cst_95 = arith.constant 1.000000e+00 : f32
    %415 = vector.broadcast %cst_95 : f32 to vector<2x32xf32>
    %416 = arith.addf %415, %414 : vector<2x32xf32>
    %417 = arith.divf %415, %416 : vector<2x32xf32>
    %cst_96 = arith.constant dense<0.000000e+00> : vector<2x32xf32>
    %418 = tpu.matmul %363, %69, %cst_96 {dimension_numbers = #tpu.dot_dimension_numbers<[1], [0], [0], [1], [0, 0, 1, 1], [], []>} : vector<2x32xf32>, vector<32x32xf32>, vector<2x32xf32> -> vector<2x32xf32>
    %419 = arith.addf %418, %75 : vector<2x32xf32>
    %420 = arith.mulf %410, %419 : vector<2x32xf32>
    %421 = arith.addf %37, %420 : vector<2x32xf32>
    %422 = math.tanh %421 : vector<2x32xf32>
    %cst_97 = arith.constant 1.000000e+00 : f32
    %423 = vector.broadcast %cst_97 : f32 to vector<2x32xf32>
    %424 = arith.subf %423, %417 : vector<2x32xf32>
    %425 = arith.mulf %424, %422 : vector<2x32xf32>
    %426 = arith.mulf %417, %363 : vector<2x32xf32>
    %427 = arith.addf %425, %426 : vector<2x32xf32>
    %cst_98 = arith.constant dense<0.000000e+00> : vector<2x32xf32>
    %428 = tpu.matmul %387, %70, %cst_98 {dimension_numbers = #tpu.dot_dimension_numbers<[1], [0], [0], [1], [0, 0, 1, 1], [], []>} : vector<2x32xf32>, vector<32x32xf32>, vector<2x32xf32> -> vector<2x32xf32>
    %429 = arith.addf %43, %428 : vector<2x32xf32>
    %430 = arith.negf %429 : vector<2x32xf32>
    %431 = math.exp %430 : vector<2x32xf32>
    %cst_99 = arith.constant 1.000000e+00 : f32
    %432 = vector.broadcast %cst_99 : f32 to vector<2x32xf32>
    %433 = arith.addf %432, %431 : vector<2x32xf32>
    %434 = arith.divf %432, %433 : vector<2x32xf32>
    %cst_100 = arith.constant dense<0.000000e+00> : vector<2x32xf32>
    %435 = tpu.matmul %387, %71, %cst_100 {dimension_numbers = #tpu.dot_dimension_numbers<[1], [0], [0], [1], [0, 0, 1, 1], [], []>} : vector<2x32xf32>, vector<32x32xf32>, vector<2x32xf32> -> vector<2x32xf32>
    %436 = arith.addf %52, %435 : vector<2x32xf32>
    %437 = arith.negf %436 : vector<2x32xf32>
    %438 = math.exp %437 : vector<2x32xf32>
    %cst_101 = arith.constant 1.000000e+00 : f32
    %439 = vector.broadcast %cst_101 : f32 to vector<2x32xf32>
    %440 = arith.addf %439, %438 : vector<2x32xf32>
    %441 = arith.divf %439, %440 : vector<2x32xf32>
    %cst_102 = arith.constant dense<0.000000e+00> : vector<2x32xf32>
    %442 = tpu.matmul %387, %72, %cst_102 {dimension_numbers = #tpu.dot_dimension_numbers<[1], [0], [0], [1], [0, 0, 1, 1], [], []>} : vector<2x32xf32>, vector<32x32xf32>, vector<2x32xf32> -> vector<2x32xf32>
    %443 = arith.addf %442, %78 : vector<2x32xf32>
    %444 = arith.mulf %434, %443 : vector<2x32xf32>
    %445 = arith.addf %61, %444 : vector<2x32xf32>
    %446 = math.tanh %445 : vector<2x32xf32>
    %cst_103 = arith.constant 1.000000e+00 : f32
    %447 = vector.broadcast %cst_103 : f32 to vector<2x32xf32>
    %448 = arith.subf %447, %441 : vector<2x32xf32>
    %449 = arith.mulf %448, %446 : vector<2x32xf32>
    %450 = arith.mulf %441, %387 : vector<2x32xf32>
    %451 = arith.addf %449, %450 : vector<2x32xf32>
    %c6_i32_104 = arith.constant 6 : i32
    %452 = vector.broadcast %c6_i32_104 : i32 to vector<2x1xi32>
    %453 = arith.cmpi eq, %79, %452 : vector<2x1xi32>
    %454 = arith.extui %453 : vector<2x1xi1> to vector<2x1xi32>
    %455 = arith.sitofp %454 : vector<2x1xi32> to vector<2x1xf32>
    %c3_i32_105 = arith.constant 3 : i32
    %456 = vector.broadcast %c3_i32_105 : i32 to vector<2x1xi32>
    %457 = arith.cmpi eq, %79, %456 : vector<2x1xi32>
    %458 = arith.extui %457 : vector<2x1xi1> to vector<2x1xi32>
    %459 = arith.sitofp %458 : vector<2x1xi32> to vector<2x1xf32>
    %460 = arith.subf %427, %399 : vector<2x32xf32>
    %461 = vector.broadcast %455 : vector<2x1xf32> to vector<2x32xf32>
    %462 = arith.mulf %461, %460 : vector<2x32xf32>
    %463 = arith.addf %399, %462 : vector<2x32xf32>
    %464 = arith.subf %451, %403 : vector<2x32xf32>
    %465 = vector.broadcast %459 : vector<2x1xf32> to vector<2x32xf32>
    %466 = arith.mulf %465, %464 : vector<2x32xf32>
    %467 = arith.addf %403, %466 : vector<2x32xf32>
    %cst_106 = arith.constant dense<0.000000e+00> : vector<2x32xf32>
    %468 = tpu.matmul %427, %67, %cst_106 {dimension_numbers = #tpu.dot_dimension_numbers<[1], [0], [0], [1], [0, 0, 1, 1], [], []>} : vector<2x32xf32>, vector<32x32xf32>, vector<2x32xf32> -> vector<2x32xf32>
    %469 = arith.addf %20, %468 : vector<2x32xf32>
    %470 = arith.negf %469 : vector<2x32xf32>
    %471 = math.exp %470 : vector<2x32xf32>
    %cst_107 = arith.constant 1.000000e+00 : f32
    %472 = vector.broadcast %cst_107 : f32 to vector<2x32xf32>
    %473 = arith.addf %472, %471 : vector<2x32xf32>
    %474 = arith.divf %472, %473 : vector<2x32xf32>
    %cst_108 = arith.constant dense<0.000000e+00> : vector<2x32xf32>
    %475 = tpu.matmul %427, %68, %cst_108 {dimension_numbers = #tpu.dot_dimension_numbers<[1], [0], [0], [1], [0, 0, 1, 1], [], []>} : vector<2x32xf32>, vector<32x32xf32>, vector<2x32xf32> -> vector<2x32xf32>
    %476 = arith.addf %29, %475 : vector<2x32xf32>
    %477 = arith.negf %476 : vector<2x32xf32>
    %478 = math.exp %477 : vector<2x32xf32>
    %cst_109 = arith.constant 1.000000e+00 : f32
    %479 = vector.broadcast %cst_109 : f32 to vector<2x32xf32>
    %480 = arith.addf %479, %478 : vector<2x32xf32>
    %481 = arith.divf %479, %480 : vector<2x32xf32>
    %cst_110 = arith.constant dense<0.000000e+00> : vector<2x32xf32>
    %482 = tpu.matmul %427, %69, %cst_110 {dimension_numbers = #tpu.dot_dimension_numbers<[1], [0], [0], [1], [0, 0, 1, 1], [], []>} : vector<2x32xf32>, vector<32x32xf32>, vector<2x32xf32> -> vector<2x32xf32>
    %483 = arith.addf %482, %75 : vector<2x32xf32>
    %484 = arith.mulf %474, %483 : vector<2x32xf32>
    %485 = arith.addf %38, %484 : vector<2x32xf32>
    %486 = math.tanh %485 : vector<2x32xf32>
    %cst_111 = arith.constant 1.000000e+00 : f32
    %487 = vector.broadcast %cst_111 : f32 to vector<2x32xf32>
    %488 = arith.subf %487, %481 : vector<2x32xf32>
    %489 = arith.mulf %488, %486 : vector<2x32xf32>
    %490 = arith.mulf %481, %427 : vector<2x32xf32>
    %491 = arith.addf %489, %490 : vector<2x32xf32>
    %cst_112 = arith.constant dense<0.000000e+00> : vector<2x32xf32>
    %492 = tpu.matmul %451, %70, %cst_112 {dimension_numbers = #tpu.dot_dimension_numbers<[1], [0], [0], [1], [0, 0, 1, 1], [], []>} : vector<2x32xf32>, vector<32x32xf32>, vector<2x32xf32> -> vector<2x32xf32>
    %493 = arith.addf %42, %492 : vector<2x32xf32>
    %494 = arith.negf %493 : vector<2x32xf32>
    %495 = math.exp %494 : vector<2x32xf32>
    %cst_113 = arith.constant 1.000000e+00 : f32
    %496 = vector.broadcast %cst_113 : f32 to vector<2x32xf32>
    %497 = arith.addf %496, %495 : vector<2x32xf32>
    %498 = arith.divf %496, %497 : vector<2x32xf32>
    %cst_114 = arith.constant dense<0.000000e+00> : vector<2x32xf32>
    %499 = tpu.matmul %451, %71, %cst_114 {dimension_numbers = #tpu.dot_dimension_numbers<[1], [0], [0], [1], [0, 0, 1, 1], [], []>} : vector<2x32xf32>, vector<32x32xf32>, vector<2x32xf32> -> vector<2x32xf32>
    %500 = arith.addf %51, %499 : vector<2x32xf32>
    %501 = arith.negf %500 : vector<2x32xf32>
    %502 = math.exp %501 : vector<2x32xf32>
    %cst_115 = arith.constant 1.000000e+00 : f32
    %503 = vector.broadcast %cst_115 : f32 to vector<2x32xf32>
    %504 = arith.addf %503, %502 : vector<2x32xf32>
    %505 = arith.divf %503, %504 : vector<2x32xf32>
    %cst_116 = arith.constant dense<0.000000e+00> : vector<2x32xf32>
    %506 = tpu.matmul %451, %72, %cst_116 {dimension_numbers = #tpu.dot_dimension_numbers<[1], [0], [0], [1], [0, 0, 1, 1], [], []>} : vector<2x32xf32>, vector<32x32xf32>, vector<2x32xf32> -> vector<2x32xf32>
    %507 = arith.addf %506, %78 : vector<2x32xf32>
    %508 = arith.mulf %498, %507 : vector<2x32xf32>
    %509 = arith.addf %60, %508 : vector<2x32xf32>
    %510 = math.tanh %509 : vector<2x32xf32>
    %cst_117 = arith.constant 1.000000e+00 : f32
    %511 = vector.broadcast %cst_117 : f32 to vector<2x32xf32>
    %512 = arith.subf %511, %505 : vector<2x32xf32>
    %513 = arith.mulf %512, %510 : vector<2x32xf32>
    %514 = arith.mulf %505, %451 : vector<2x32xf32>
    %515 = arith.addf %513, %514 : vector<2x32xf32>
    %c7_i32_118 = arith.constant 7 : i32
    %516 = vector.broadcast %c7_i32_118 : i32 to vector<2x1xi32>
    %517 = arith.cmpi eq, %79, %516 : vector<2x1xi32>
    %518 = arith.extui %517 : vector<2x1xi1> to vector<2x1xi32>
    %519 = arith.sitofp %518 : vector<2x1xi32> to vector<2x1xf32>
    %c2_i32_119 = arith.constant 2 : i32
    %520 = vector.broadcast %c2_i32_119 : i32 to vector<2x1xi32>
    %521 = arith.cmpi eq, %79, %520 : vector<2x1xi32>
    %522 = arith.extui %521 : vector<2x1xi1> to vector<2x1xi32>
    %523 = arith.sitofp %522 : vector<2x1xi32> to vector<2x1xf32>
    %524 = arith.subf %491, %463 : vector<2x32xf32>
    %525 = vector.broadcast %519 : vector<2x1xf32> to vector<2x32xf32>
    %526 = arith.mulf %525, %524 : vector<2x32xf32>
    %527 = arith.addf %463, %526 : vector<2x32xf32>
    %528 = arith.subf %515, %467 : vector<2x32xf32>
    %529 = vector.broadcast %523 : vector<2x1xf32> to vector<2x32xf32>
    %530 = arith.mulf %529, %528 : vector<2x32xf32>
    %531 = arith.addf %467, %530 : vector<2x32xf32>
    %cst_120 = arith.constant dense<0.000000e+00> : vector<2x32xf32>
    %532 = tpu.matmul %491, %67, %cst_120 {dimension_numbers = #tpu.dot_dimension_numbers<[1], [0], [0], [1], [0, 0, 1, 1], [], []>} : vector<2x32xf32>, vector<32x32xf32>, vector<2x32xf32> -> vector<2x32xf32>
    %533 = arith.addf %21, %532 : vector<2x32xf32>
    %534 = arith.negf %533 : vector<2x32xf32>
    %535 = math.exp %534 : vector<2x32xf32>
    %cst_121 = arith.constant 1.000000e+00 : f32
    %536 = vector.broadcast %cst_121 : f32 to vector<2x32xf32>
    %537 = arith.addf %536, %535 : vector<2x32xf32>
    %538 = arith.divf %536, %537 : vector<2x32xf32>
    %cst_122 = arith.constant dense<0.000000e+00> : vector<2x32xf32>
    %539 = tpu.matmul %491, %68, %cst_122 {dimension_numbers = #tpu.dot_dimension_numbers<[1], [0], [0], [1], [0, 0, 1, 1], [], []>} : vector<2x32xf32>, vector<32x32xf32>, vector<2x32xf32> -> vector<2x32xf32>
    %540 = arith.addf %30, %539 : vector<2x32xf32>
    %541 = arith.negf %540 : vector<2x32xf32>
    %542 = math.exp %541 : vector<2x32xf32>
    %cst_123 = arith.constant 1.000000e+00 : f32
    %543 = vector.broadcast %cst_123 : f32 to vector<2x32xf32>
    %544 = arith.addf %543, %542 : vector<2x32xf32>
    %545 = arith.divf %543, %544 : vector<2x32xf32>
    %cst_124 = arith.constant dense<0.000000e+00> : vector<2x32xf32>
    %546 = tpu.matmul %491, %69, %cst_124 {dimension_numbers = #tpu.dot_dimension_numbers<[1], [0], [0], [1], [0, 0, 1, 1], [], []>} : vector<2x32xf32>, vector<32x32xf32>, vector<2x32xf32> -> vector<2x32xf32>
    %547 = arith.addf %546, %75 : vector<2x32xf32>
    %548 = arith.mulf %538, %547 : vector<2x32xf32>
    %549 = arith.addf %39, %548 : vector<2x32xf32>
    %550 = math.tanh %549 : vector<2x32xf32>
    %cst_125 = arith.constant 1.000000e+00 : f32
    %551 = vector.broadcast %cst_125 : f32 to vector<2x32xf32>
    %552 = arith.subf %551, %545 : vector<2x32xf32>
    %553 = arith.mulf %552, %550 : vector<2x32xf32>
    %554 = arith.mulf %545, %491 : vector<2x32xf32>
    %555 = arith.addf %553, %554 : vector<2x32xf32>
    %cst_126 = arith.constant dense<0.000000e+00> : vector<2x32xf32>
    %556 = tpu.matmul %515, %70, %cst_126 {dimension_numbers = #tpu.dot_dimension_numbers<[1], [0], [0], [1], [0, 0, 1, 1], [], []>} : vector<2x32xf32>, vector<32x32xf32>, vector<2x32xf32> -> vector<2x32xf32>
    %557 = arith.addf %41, %556 : vector<2x32xf32>
    %558 = arith.negf %557 : vector<2x32xf32>
    %559 = math.exp %558 : vector<2x32xf32>
    %cst_127 = arith.constant 1.000000e+00 : f32
    %560 = vector.broadcast %cst_127 : f32 to vector<2x32xf32>
    %561 = arith.addf %560, %559 : vector<2x32xf32>
    %562 = arith.divf %560, %561 : vector<2x32xf32>
    %cst_128 = arith.constant dense<0.000000e+00> : vector<2x32xf32>
    %563 = tpu.matmul %515, %71, %cst_128 {dimension_numbers = #tpu.dot_dimension_numbers<[1], [0], [0], [1], [0, 0, 1, 1], [], []>} : vector<2x32xf32>, vector<32x32xf32>, vector<2x32xf32> -> vector<2x32xf32>
    %564 = arith.addf %50, %563 : vector<2x32xf32>
    %565 = arith.negf %564 : vector<2x32xf32>
    %566 = math.exp %565 : vector<2x32xf32>
    %cst_129 = arith.constant 1.000000e+00 : f32
    %567 = vector.broadcast %cst_129 : f32 to vector<2x32xf32>
    %568 = arith.addf %567, %566 : vector<2x32xf32>
    %569 = arith.divf %567, %568 : vector<2x32xf32>
    %cst_130 = arith.constant dense<0.000000e+00> : vector<2x32xf32>
    %570 = tpu.matmul %515, %72, %cst_130 {dimension_numbers = #tpu.dot_dimension_numbers<[1], [0], [0], [1], [0, 0, 1, 1], [], []>} : vector<2x32xf32>, vector<32x32xf32>, vector<2x32xf32> -> vector<2x32xf32>
    %571 = arith.addf %570, %78 : vector<2x32xf32>
    %572 = arith.mulf %562, %571 : vector<2x32xf32>
    %573 = arith.addf %59, %572 : vector<2x32xf32>
    %574 = math.tanh %573 : vector<2x32xf32>
    %cst_131 = arith.constant 1.000000e+00 : f32
    %575 = vector.broadcast %cst_131 : f32 to vector<2x32xf32>
    %576 = arith.subf %575, %569 : vector<2x32xf32>
    %577 = arith.mulf %576, %574 : vector<2x32xf32>
    %578 = arith.mulf %569, %515 : vector<2x32xf32>
    %579 = arith.addf %577, %578 : vector<2x32xf32>
    %c8_i32_132 = arith.constant 8 : i32
    %580 = vector.broadcast %c8_i32_132 : i32 to vector<2x1xi32>
    %581 = arith.cmpi eq, %79, %580 : vector<2x1xi32>
    %582 = arith.extui %581 : vector<2x1xi1> to vector<2x1xi32>
    %583 = arith.sitofp %582 : vector<2x1xi32> to vector<2x1xf32>
    %c1_i32_133 = arith.constant 1 : i32
    %584 = vector.broadcast %c1_i32_133 : i32 to vector<2x1xi32>
    %585 = arith.cmpi eq, %79, %584 : vector<2x1xi32>
    %586 = arith.extui %585 : vector<2x1xi1> to vector<2x1xi32>
    %587 = arith.sitofp %586 : vector<2x1xi32> to vector<2x1xf32>
    %588 = arith.subf %555, %527 : vector<2x32xf32>
    %589 = vector.broadcast %583 : vector<2x1xf32> to vector<2x32xf32>
    %590 = arith.mulf %589, %588 : vector<2x32xf32>
    %591 = arith.addf %527, %590 : vector<2x32xf32>
    %592 = arith.subf %579, %531 : vector<2x32xf32>
    %593 = vector.broadcast %587 : vector<2x1xf32> to vector<2x32xf32>
    %594 = arith.mulf %593, %592 : vector<2x32xf32>
    %595 = arith.addf %531, %594 : vector<2x32xf32>
    %c0_134 = arith.constant 0 : index
    %c0_135 = arith.constant 0 : index
    %596 = vector.load %arg14[%c0_134, %c0_135] : memref<32x16xf32, #tpu.memory_space<vmem>>, vector<32x16xf32>
    %cst_136 = arith.constant dense<0.000000e+00> : vector<2x16xf32>
    %597 = tpu.matmul %591, %596, %cst_136 {dimension_numbers = #tpu.dot_dimension_numbers<[1], [0], [0], [1], [0, 0, 1, 1], [], []>} : vector<2x32xf32>, vector<32x16xf32>, vector<2x16xf32> -> vector<2x16xf32>
    %c0_137 = arith.constant 0 : index
    %c0_138 = arith.constant 0 : index
    %598 = vector.load %arg15[%c0_137, %c0_138] : memref<32x16xf32, #tpu.memory_space<vmem>>, vector<32x16xf32>
    %cst_139 = arith.constant dense<0.000000e+00> : vector<2x16xf32>
    %599 = tpu.matmul %595, %598, %cst_139 {dimension_numbers = #tpu.dot_dimension_numbers<[1], [0], [0], [1], [0, 0, 1, 1], [], []>} : vector<2x32xf32>, vector<32x16xf32>, vector<2x16xf32> -> vector<2x16xf32>
    %600 = arith.addf %597, %599 : vector<2x16xf32>
    %c0_140 = arith.constant 0 : index
    %c0_141 = arith.constant 0 : index
    %601 = vector.load %arg16[%c0_140, %c0_141] : memref<1x16xf32, #tpu.memory_space<vmem>>, vector<1x16xf32>
    %602 = vector.broadcast %601 : vector<1x16xf32> to vector<2x16xf32>
    %603 = arith.addf %600, %602 : vector<2x16xf32>
    %c0_142 = arith.constant 0 : index
    %c0_143 = arith.constant 0 : index
    %604 = vector.load %arg17[%c0_142, %c0_143] : memref<32x16xf32, #tpu.memory_space<vmem>>, vector<32x16xf32>
    %cst_144 = arith.constant dense<0.000000e+00> : vector<2x16xf32>
    %605 = tpu.matmul %591, %604, %cst_144 {dimension_numbers = #tpu.dot_dimension_numbers<[1], [0], [0], [1], [0, 0, 1, 1], [], []>} : vector<2x32xf32>, vector<32x16xf32>, vector<2x16xf32> -> vector<2x16xf32>
    %c0_145 = arith.constant 0 : index
    %c0_146 = arith.constant 0 : index
    %606 = vector.load %arg18[%c0_145, %c0_146] : memref<32x16xf32, #tpu.memory_space<vmem>>, vector<32x16xf32>
    %cst_147 = arith.constant dense<0.000000e+00> : vector<2x16xf32>
    %607 = tpu.matmul %595, %606, %cst_147 {dimension_numbers = #tpu.dot_dimension_numbers<[1], [0], [0], [1], [0, 0, 1, 1], [], []>} : vector<2x32xf32>, vector<32x16xf32>, vector<2x16xf32> -> vector<2x16xf32>
    %608 = arith.addf %605, %607 : vector<2x16xf32>
    %c0_148 = arith.constant 0 : index
    %c0_149 = arith.constant 0 : index
    %609 = vector.load %arg19[%c0_148, %c0_149] : memref<1x16xf32, #tpu.memory_space<vmem>>, vector<1x16xf32>
    %610 = vector.broadcast %609 : vector<1x16xf32> to vector<2x16xf32>
    %611 = arith.addf %608, %610 : vector<2x16xf32>
    %c0_150 = arith.constant 0 : index
    %c0_151 = arith.constant 0 : index
    %612 = vector.load %arg2[%c0_150, %c0_151] : memref<2x16xf32, #tpu.memory_space<vmem>>, vector<2x16xf32>
    %cst_152 = arith.constant 5.000000e-01 : f32
    %613 = vector.broadcast %cst_152 : f32 to vector<2x16xf32>
    %614 = arith.mulf %613, %611 : vector<2x16xf32>
    %615 = math.exp %614 : vector<2x16xf32>
    %616 = arith.mulf %612, %615 : vector<2x16xf32>
    %617 = arith.addf %616, %603 : vector<2x16xf32>
    %c0_153 = arith.constant 0 : index
    %c0_154 = arith.constant 0 : index
    %618 = vector.load %arg20[%c0_153, %c0_154] : memref<16x32xf32, #tpu.memory_space<vmem>>, vector<16x32xf32>
    %cst_155 = arith.constant dense<0.000000e+00> : vector<2x32xf32>
    %619 = tpu.matmul %617, %618, %cst_155 {dimension_numbers = #tpu.dot_dimension_numbers<[1], [0], [0], [1], [0, 0, 1, 1], [], []>} : vector<2x16xf32>, vector<16x32xf32>, vector<2x32xf32> -> vector<2x32xf32>
    %c0_156 = arith.constant 0 : index
    %c0_157 = arith.constant 0 : index
    %620 = vector.load %arg21[%c0_156, %c0_157] : memref<1x32xf32, #tpu.memory_space<vmem>>, vector<1x32xf32>
    %621 = vector.broadcast %620 : vector<1x32xf32> to vector<2x32xf32>
    %622 = arith.addf %619, %621 : vector<2x32xf32>
    %c0_158 = arith.constant 0 : index
    %c0_159 = arith.constant 0 : index
    %623 = vector.load %arg22[%c0_158, %c0_159] : memref<32x256xf32, #tpu.memory_space<vmem>>, vector<32x256xf32>
    %cst_160 = arith.constant dense<0.000000e+00> : vector<2x256xf32>
    %624 = tpu.matmul %622, %623, %cst_160 {dimension_numbers = #tpu.dot_dimension_numbers<[1], [0], [0], [1], [0, 0, 1, 1], [], []>} : vector<2x32xf32>, vector<32x256xf32>, vector<2x256xf32> -> vector<2x256xf32>
    %c0_161 = arith.constant 0 : index
    %c0_162 = arith.constant 0 : index
    %625 = vector.load %arg23[%c0_161, %c0_162] : memref<1x256xf32, #tpu.memory_space<vmem>>, vector<1x256xf32>
    %626 = vector.broadcast %625 : vector<1x256xf32> to vector<2x256xf32>
    %627 = arith.addf %624, %626 : vector<2x256xf32>
    %c0_163 = arith.constant 0 : index
    %c0_164 = arith.constant 0 : index
    %628 = vector.load %arg25[%c0_163, %c0_164] : memref<2x16xf32, #tpu.memory_space<vmem>>, vector<2x16xf32>
    tpu.vector_store %arg25[%c0_163, %c0_164], %603 {strides = array<i32>} : memref<2x16xf32, #tpu.memory_space<vmem>>, vector<2x16xf32>,
    %c0_165 = arith.constant 0 : index
    %c0_166 = arith.constant 0 : index
    %629 = vector.load %arg26[%c0_165, %c0_166] : memref<2x16xf32, #tpu.memory_space<vmem>>, vector<2x16xf32>
    tpu.vector_store %arg26[%c0_165, %c0_166], %611 {strides = array<i32>} : memref<2x16xf32, #tpu.memory_space<vmem>>, vector<2x16xf32>,
    %c0_167 = arith.constant 0 : index
    %c0_168 = arith.constant 0 : index
    %630 = vector.load %arg27[%c0_167, %c0_168] : memref<2x16xf32, #tpu.memory_space<vmem>>, vector<2x16xf32>
    tpu.vector_store %arg27[%c0_167, %c0_168], %617 {strides = array<i32>} : memref<2x16xf32, #tpu.memory_space<vmem>>, vector<2x16xf32>,
    %c0_169 = arith.constant 0 : index
    %c0_170 = arith.constant 0 : index
    %631 = vector.load %arg24[%c0_169, %c0_170] : memref<2x256xf32, #tpu.memory_space<vmem>>, vector<2x256xf32>
    tpu.vector_store %arg24[%c0_169, %c0_170], %627 {strides = array<i32>} : memref<2x256xf32, #tpu.memory_space<vmem>>, vector<2x256xf32>,
    return
  }
}

</mosaic_0001>

<llo_original>
// kernel: reviewdi_forward.1
$region0: #{reviewdi_forward.1}
  #allocation0 [shape = 'u32[]', space=smem, size = 0x4, offset = 0x4, fixed_abs, tag = 'smem constant byte address 0x4 - core index']
  #allocation1 [shape = 'u32[144,128]{1,0:T(1,128)}', space=vmem, size = 0x12000, scoped, tag = 'internal scratch']
  %s0 = inlined_call_operand.vmem [shape: s32[16,1], index: 0, kind: input, shape index: {}]
  %s1 = inlined_call_operand.vmem [shape: s32[2,1], index: 1, kind: input, shape index: {}]
  %s2 = inlined_call_operand.vmem [shape: f32[2,16], index: 2, kind: input, shape index: {}]
  %s3 = inlined_call_operand.vmem [shape: f32[256,32], index: 3, kind: input, shape index: {}]
  %s4 = inlined_call_operand.vmem [shape: f32[32,192], index: 4, kind: input, shape index: {}]
  %s5 = inlined_call_operand.vmem [shape: f32[1,192], index: 5, kind: input, shape index: {}]
  %s6 = inlined_call_operand.vmem [shape: f32[32,32], index: 6, kind: input, shape index: {}]
  %s7 = inlined_call_operand.vmem [shape: f32[32,32], index: 7, kind: input, shape index: {}]
  %s8 = inlined_call_operand.vmem [shape: f32[32,32], index: 8, kind: input, shape index: {}]
  %s9 = inlined_call_operand.vmem [shape: f32[32,32], index: 9, kind: input, shape index: {}]
  %s10 = inlined_call_operand.vmem [shape: f32[32,32], index: 10, kind: input, shape index: {}]
  %s11 = inlined_call_operand.vmem [shape: f32[32,32], index: 11, kind: input, shape index: {}]
  %s12 = inlined_call_operand.vmem [shape: f32[1,32], index: 12, kind: input, shape index: {}]
  %s13 = inlined_call_operand.vmem [shape: f32[1,32], index: 13, kind: input, shape index: {}]
  %s14 = inlined_call_operand.vmem [shape: f32[32,16], index: 14, kind: input, shape index: {}]
  %s15 = inlined_call_operand.vmem [shape: f32[32,16], index: 15, kind: input, shape index: {}]
  %s16 = inlined_call_operand.vmem [shape: f32[1,16], index: 16, kind: input, shape index: {}]
  %s17 = inlined_call_operand.vmem [shape: f32[32,16], index: 17, kind: input, shape index: {}]
  %s18 = inlined_call_operand.vmem [shape: f32[32,16], index: 18, kind: input, shape index: {}]
  %s19 = inlined_call_operand.vmem [shape: f32[1,16], index: 19, kind: input, shape index: {}]
  %s20 = inlined_call_operand.vmem [shape: f32[16,32], index: 20, kind: input, shape index: {}]
  %s21 = inlined_call_operand.vmem [shape: f32[1,32], index: 21, kind: input, shape index: {}]
  %s22 = inlined_call_operand.vmem [shape: f32[32,256], index: 22, kind: input, shape index: {}]
  %s23 = inlined_call_operand.vmem [shape: f32[1,256], index: 23, kind: input, shape index: {}]
  %s24 = inlined_call_operand.hbm [shape: f32[2,256], index: 24, kind: output, shape index: {0}]
  %s25 = inlined_call_operand.hbm [shape: f32[2,16], index: 25, kind: output, shape index: {1}]
  %s26 = inlined_call_operand.hbm [shape: f32[2,16], index: 26, kind: output, shape index: {2}]
  %s27 = inlined_call_operand.hbm [shape: f32[2,16], index: 27, kind: output, shape index: {3}]
  %28 = xla_tuple %s24, %s25, %s26, %s27
  %s29 = sld [smem:[#allocation0]]
  $region130: #{reviewdi_forward.1} parent=0
    _
  %s31 = ssub.s32 1, %s29
  %s32 = scalar_select 0, %s31, %s29
  $region1: #{reviewdi_forward.1} parent=0
    #allocation2 [shape = 'u8[2048]{0}', space=vmem, size = 0x800, scoped, tag = 'output window, operand 0, single buffered']
    #allocation3 [shape = 's32[1]{0}', space=sflag, size = 0x4, scoped, tag = 'scoped memory for reviewdi_forward.1']
    #allocation4 [shape = 'u8[1024]{0}', space=vmem, size = 0x400, scoped, tag = 'output window, operand 1, single buffered']
    #allocation5 [shape = 's32[1]{0}', space=sflag, size = 0x4, scoped, tag = 'scoped memory for reviewdi_forward.1']
    #allocation6 [shape = 'u8[1024]{0}', space=vmem, size = 0x400, scoped, tag = 'output window, operand 2, single buffered']
    #allocation7 [shape = 'u8[1024]{0}', space=vmem, size = 0x400, scoped, tag = 'output window, operand 3, single buffered']
    #allocation8 [shape = 's32[1]{0}', space=sflag, size = 0x4, scoped, tag = 'scoped memory for reviewdi_forward.1']
    %33 = vsyncpa [#allocation3], 0
    %34 = vsyncpa [#allocation5], 0
    %35 = vsyncpa [#allocation8], 0
    // Predicated region
    $region2: #{reviewdi_forward.1} parent=1 // pred_check
      _
    $region3: #{reviewdi_forward.1} parent=1 // pred_check_branch
      %37 = sbr.rel (0) target = $region5
    $region4: #{reviewdi_forward.1} parent=1 // pred_region
      _
    $region5: #{reviewdi_forward.1} parent=1 // pred_fallthru
      _
    // Predicated region
    $region6: #{reviewdi_forward.1} parent=1 // pred_check
      _
    $region7: #{reviewdi_forward.1} parent=1 // pred_check_branch
      %39 = sbr.rel (0) target = $region9
    $region8: #{reviewdi_forward.1} parent=1 // pred_region
      _
    $region9: #{reviewdi_forward.1} parent=1 // pred_fallthru
      _
    // Predicated region
    $region10: #{reviewdi_forward.1} parent=1 // pred_check
      _
    $region11: #{reviewdi_forward.1} parent=1 // pred_check_branch
      %41 = sbr.rel (0) target = $region13
    $region12: #{reviewdi_forward.1} parent=1 // pred_region
      _
    $region13: #{reviewdi_forward.1} parent=1 // pred_fallthru
      _
    // Predicated region
    $region14: #{reviewdi_forward.1} parent=1 // pred_check
      _
    $region15: #{reviewdi_forward.1} parent=1 // pred_check_branch
      %43 = sbr.rel (0) target = $region17
    $region16: #{reviewdi_forward.1} parent=1 // pred_region
      _
    $region17: #{reviewdi_forward.1} parent=1 // pred_fallthru
      _
    // Predicated region
    $region18: #{reviewdi_forward.1} parent=1 // pred_check
      _
    $region19: #{reviewdi_forward.1} parent=1 // pred_check_branch
      %45 = sbr.rel (0) target = $region21
    $region20: #{reviewdi_forward.1} parent=1 // pred_region
      _
    $region21: #{reviewdi_forward.1} parent=1 // pred_fallthru
      _
    // Predicated region
    $region22: #{reviewdi_forward.1} parent=1 // pred_check
      _
    $region23: #{reviewdi_forward.1} parent=1 // pred_check_branch
      %47 = sbr.rel (0) target = $region25
    $region24: #{reviewdi_forward.1} parent=1 // pred_region
      _
    $region25: #{reviewdi_forward.1} parent=1 // pred_fallthru
      _
    // Predicated region
    $region26: #{reviewdi_forward.1} parent=1 // pred_check
      _
    $region27: #{reviewdi_forward.1} parent=1 // pred_check_branch
      %49 = sbr.rel (0) target = $region29
    $region28: #{reviewdi_forward.1} parent=1 // pred_region
      _
    $region29: #{reviewdi_forward.1} parent=1 // pred_fallthru
      _
    // Predicated region
    $region30: #{reviewdi_forward.1} parent=1 // pred_check
      _
    $region31: #{reviewdi_forward.1} parent=1 // pred_check_branch
      %51 = sbr.rel (0) target = $region33
    $region32: #{reviewdi_forward.1} parent=1 // pred_region
      _
    $region33: #{reviewdi_forward.1} parent=1 // pred_fallthru
      _
    // Predicated region
    $region34: #{reviewdi_forward.1} parent=1 // pred_check
      _
    $region35: #{reviewdi_forward.1} parent=1 // pred_check_branch
      %53 = sbr.rel (0) target = $region37
    $region36: #{reviewdi_forward.1} parent=1 // pred_region
      _
    $region37: #{reviewdi_forward.1} parent=1 // pred_fallthru
      _
    // Predicated region
    $region38: #{reviewdi_forward.1} parent=1 // pred_check
      _
    $region39: #{reviewdi_forward.1} parent=1 // pred_check_branch
      %55 = sbr.rel (0) target = $region41
    $region40: #{reviewdi_forward.1} parent=1 // pred_region
      _
    $region41: #{reviewdi_forward.1} parent=1 // pred_fallthru
      _
    // Predicated region
    $region42: #{reviewdi_forward.1} parent=1 // pred_check
      _
    $region43: #{reviewdi_forward.1} parent=1 // pred_check_branch
      %57 = sbr.rel (0) target = $region45
    $region44: #{reviewdi_forward.1} parent=1 // pred_region
      _
    $region45: #{reviewdi_forward.1} parent=1 // pred_fallthru
      _
    // Predicated region
    $region46: #{reviewdi_forward.1} parent=1 // pred_check
      _
    $region47: #{reviewdi_forward.1} parent=1 // pred_check_branch
      %59 = sbr.rel (0) target = $region49
    $region48: #{reviewdi_forward.1} parent=1 // pred_region
      _
    $region49: #{reviewdi_forward.1} parent=1 // pred_fallthru
      _
    // Predicated region
    $region50: #{reviewdi_forward.1} parent=1 // pred_check
      _
    $region51: #{reviewdi_forward.1} parent=1 // pred_check_branch
      %61 = sbr.rel (0) target = $region53
    $region52: #{reviewdi_forward.1} parent=1 // pred_region
      _
    $region53: #{reviewdi_forward.1} parent=1 // pred_fallthru
      _
    // Predicated region
    $region54: #{reviewdi_forward.1} parent=1 // pred_check
      _
    $region55: #{reviewdi_forward.1} parent=1 // pred_check_branch
      %63 = sbr.rel (0) target = $region57
    $region56: #{reviewdi_forward.1} parent=1 // pred_region
      _
    $region57: #{reviewdi_forward.1} parent=1 // pred_fallthru
      _
    // Predicated region
    $region58: #{reviewdi_forward.1} parent=1 // pred_check
      _
    $region59: #{reviewdi_forward.1} parent=1 // pred_check_branch
      %65 = sbr.rel (0) target = $region61
    $region60: #{reviewdi_forward.1} parent=1 // pred_region
      _
    $region61: #{reviewdi_forward.1} parent=1 // pred_fallthru
      _
    // Predicated region
    $region62: #{reviewdi_forward.1} parent=1 // pred_check
      _
    $region63: #{reviewdi_forward.1} parent=1 // pred_check_branch
      %67 = sbr.rel (0) target = $region65
    $region64: #{reviewdi_forward.1} parent=1 // pred_region
      _
    $region65: #{reviewdi_forward.1} parent=1 // pred_fallthru
      _
    // Predicated region
    $region66: #{reviewdi_forward.1} parent=1 // pred_check
      _
    $region67: #{reviewdi_forward.1} parent=1 // pred_check_branch
      %69 = sbr.rel (0) target = $region69
    $region68: #{reviewdi_forward.1} parent=1 // pred_region
      _
    $region69: #{reviewdi_forward.1} parent=1 // pred_fallthru
      _
    // Predicated region
    $region70: #{reviewdi_forward.1} parent=1 // pred_check
      _
    $region71: #{reviewdi_forward.1} parent=1 // pred_check_branch
      %71 = sbr.rel (0) target = $region73
    $region72: #{reviewdi_forward.1} parent=1 // pred_region
      _
    $region73: #{reviewdi_forward.1} parent=1 // pred_fallthru
      _
    // Predicated region
    $region74: #{reviewdi_forward.1} parent=1 // pred_check
      _
    $region75: #{reviewdi_forward.1} parent=1 // pred_check_branch
      %73 = sbr.rel (0) target = $region77
    $region76: #{reviewdi_forward.1} parent=1 // pred_region
      _
    $region77: #{reviewdi_forward.1} parent=1 // pred_fallthru
      _
    // Predicated region
    $region78: #{reviewdi_forward.1} parent=1 // pred_check
      _
    $region79: #{reviewdi_forward.1} parent=1 // pred_check_branch
      %75 = sbr.rel (0) target = $region81
    $region80: #{reviewdi_forward.1} parent=1 // pred_region
      _
    $region81: #{reviewdi_forward.1} parent=1 // pred_fallthru
      _
    // Predicated region
    $region82: #{reviewdi_forward.1} parent=1 // pred_check
      _
    $region83: #{reviewdi_forward.1} parent=1 // pred_check_branch
      %77 = sbr.rel (0) target = $region85
    $region84: #{reviewdi_forward.1} parent=1 // pred_region
      _
    $region85: #{reviewdi_forward.1} parent=1 // pred_fallthru
      _
    // Predicated region
    $region86: #{reviewdi_forward.1} parent=1 // pred_check
      _
    $region87: #{reviewdi_forward.1} parent=1 // pred_check_branch
      %79 = sbr.rel (0) target = $region89
    $region88: #{reviewdi_forward.1} parent=1 // pred_region
      _
    $region89: #{reviewdi_forward.1} parent=1 // pred_fallthru
      _
    // Predicated region
    $region90: #{reviewdi_forward.1} parent=1 // pred_check
      _
    $region91: #{reviewdi_forward.1} parent=1 // pred_check_branch
      %81 = sbr.rel (0) target = $region93
    $region92: #{reviewdi_forward.1} parent=1 // pred_region
      _
    $region93: #{reviewdi_forward.1} parent=1 // pred_fallthru
      _
    // Predicated region
    $region94: #{reviewdi_forward.1} parent=1 // pred_check
      _
    $region95: #{reviewdi_forward.1} parent=1 // pred_check_branch
      %83 = sbr.rel (0) target = $region97
    $region96: #{reviewdi_forward.1} parent=1 // pred_region
      _
    $region97: #{reviewdi_forward.1} parent=1 // pred_fallthru
      _
    %v84 = vld [vmem:[%s0] sm:$0xff]
    %v85 = vld [vmem:[%s0 + $0x8] sm:$0xff]
    %v86 = vlaneseq
    %v87 = vand.u32 %v86, 127
    %v88 = vadd.s32 %v87, 128
    %89 = vset.pattern.permute.xlu0 0
    %90 = vperm.xlu0 %89, %v84
    %v91 = vpop.permute.xlu0 %90
    %92 = vset.pattern.permute.xlu0 0
    %93 = vperm.xlu0 %92, %v85
    %v94 = vpop.permute.xlu0 %93
    %vm95 = vcmp.eq.s32.totalorder %v87, %v91
    %vm96 = vcmp.eq.s32.totalorder %v88, %v91
    %vm97 = vcmp.eq.s32.totalorder %v87, %v94
    %vm98 = vcmp.eq.s32.totalorder %v88, %v94
    %v99 = vsel %vm95, 1, 0
    %v100 = vsel %vm96, 1, 0
    %v101 = vsel %vm97, 1, 0
    %v102 = vsel %vm98, 1, 0
    %v103 = vcvt.s32.f32 %v99
    %v104 = vcvt.s32.f32 %v100
    %v105 = vcvt.s32.f32 %v101
    %v106 = vcvt.s32.f32 %v102
    %v107 = vld [vmem:[%s3] sm:$0xff]
    %v108 = vld [vmem:[%s3 + $0x8] sm:$0xff]
    %v109 = vld [vmem:[%s3 + $0x10] sm:$0xff]
    %v110 = vld [vmem:[%s3 + $0x18] sm:$0xff]
    %v111 = vld [vmem:[%s3 + $0x20] sm:$0xff]
    %v112 = vld [vmem:[%s3 + $0x28] sm:$0xff]
    %v113 = vld [vmem:[%s3 + $0x30] sm:$0xff]
    %v114 = vld [vmem:[%s3 + $0x38] sm:$0xff]
    %v115 = vld [vmem:[%s3 + $0x40] sm:$0xff]
    %v116 = vld [vmem:[%s3 + $0x48] sm:$0xff]
    %v117 = vld [vmem:[%s3 + $0x50] sm:$0xff]
    %v118 = vld [vmem:[%s3 + $0x58] sm:$0xff]
    %v119 = vld [vmem:[%s3 + $0x60] sm:$0xff]
    %v120 = vld [vmem:[%s3 + $0x68] sm:$0xff]
    %v121 = vld [vmem:[%s3 + $0x70] sm:$0xff]
    %v122 = vld [vmem:[%s3 + $0x78] sm:$0xff]
    %v123 = vld [vmem:[%s3 + $0x80] sm:$0xff]
    %v124 = vld [vmem:[%s3 + $0x88] sm:$0xff]
    %v125 = vld [vmem:[%s3 + $0x90] sm:$0xff]
    %v126 = vld [vmem:[%s3 + $0x98] sm:$0xff]
    %v127 = vld [vmem:[%s3 + $0xa0] sm:$0xff]
    %v128 = vld [vmem:[%s3 + $0xa8] sm:$0xff]
    %v129 = vld [vmem:[%s3 + $0xb0] sm:$0xff]
    %v130 = vld [vmem:[%s3 + $0xb8] sm:$0xff]
    %v131 = vld [vmem:[%s3 + $0xc0] sm:$0xff]
    %v132 = vld [vmem:[%s3 + $0xc8] sm:$0xff]
    %v133 = vld [vmem:[%s3 + $0xd0] sm:$0xff]
    %v134 = vld [vmem:[%s3 + $0xd8] sm:$0xff]
    %v135 = vld [vmem:[%s3 + $0xe0] sm:$0xff]
    %v136 = vld [vmem:[%s3 + $0xe8] sm:$0xff]
    %v137 = vld [vmem:[%s3 + $0xf0] sm:$0xff]
    %v138 = vld [vmem:[%s3 + $0xf8] sm:$0xff]
    %139 = vmatprep.subr.mxu0 0.0
    %140 = vmatpush1.msra.mxu0 %v107
    %141 = vmatprep.subr.mxu0 0.0
    %142 = vmatpush1.msra.mxu0 %v108
    %143 = vmatprep.subr.mxu0 0.0
    %144 = vmatpush1.msra.mxu0 %v109
    %145 = vmatprep.subr.mxu0 0.0
    %146 = vmatpush1.msra.mxu0 %v110
    %147 = vmatprep.subr.mxu0 0.0
    %148 = vmatpush1.msra.mxu0 %v111
    %149 = vmatprep.subr.mxu0 0.0
    %150 = vmatpush1.msra.mxu0 %v112
    %151 = vmatprep.subr.mxu0 0.0
    %152 = vmatpush1.msra.mxu0 %v113
    %153 = vmatprep.subr.mxu0 0.0
    %154 = vmatpush1.msra.mxu0 %v114
    %155 = vmatprep.subr.mxu0 0.0
    %156 = vmatpush1.msra.mxu0 %v115
    %157 = vmatprep.subr.mxu0 0.0
    %158 = vmatpush1.msra.mxu0 %v116
    %159 = vmatprep.subr.mxu0 0.0
    %160 = vmatpush1.msra.mxu0 %v117
    %161 = vmatprep.subr.mxu0 0.0
    %162 = vmatpush1.msra.mxu0 %v118
    %163 = vmatprep.subr.mxu0 0.0
    %164 = vmatpush1.msra.mxu0 %v119
    %165 = vmatprep.subr.mxu0 0.0
    %166 = vmatpush1.msra.mxu0 %v120
    %167 = vmatprep.subr.mxu0 0.0
    %168 = vmatpush1.msra.mxu0 %v121
    %169 = vmatprep.subr.mxu0 0.0
    %170 = vmatpush1.msra.mxu0 %v122
    %171 = vmatprep.subr.mxu0 0.0
    %172 = vmatpush1.msra.mxu0 %v123
    %173 = vmatprep.subr.mxu0 0.0
    %174 = vmatpush1.msra.mxu0 %v124
    %175 = vmatprep.subr.mxu0 0.0
    %176 = vmatpush1.msra.mxu0 %v125
    %177 = vmatprep.subr.mxu0 0.0
    %178 = vmatpush1.msra.mxu0 %v126
    %179 = vmatprep.subr.mxu0 0.0
    %180 = vmatpush1.msra.mxu0 %v127
    %181 = vmatprep.subr.mxu0 0.0
    %182 = vmatpush1.msra.mxu0 %v128
    %183 = vmatprep.subr.mxu0 0.0
    %184 = vmatpush1.msra.mxu0 %v129
    %185 = vmatprep.subr.mxu0 0.0
    %186 = vmatpush1.msra.mxu0 %v130
    %187 = vmatprep.subr.mxu0 0.0
    %188 = vmatpush1.msra.mxu0 %v131
    %189 = vmatprep.subr.mxu0 0.0
    %190 = vmatpush1.msra.mxu0 %v132
    %191 = vmatprep.subr.mxu0 0.0
    %192 = vmatpush1.msra.mxu0 %v133
    %193 = vmatprep.subr.mxu0 0.0
    %194 = vmatpush1.msra.mxu0 %v134
    %195 = vmatprep.subr.mxu0 0.0
    %196 = vmatpush1.msra.mxu0 %v135
    %197 = vmatprep.subr.mxu0 0.0
    %198 = vmatpush1.msra.mxu0 %v136
    %199 = vmatprep.subr.mxu0 0.0
    %200 = vmatpush1.msra.mxu0 %v137
    %201 = vmatprep.subr.mxu0 0.0
    %202 = vmatpush1.msra.mxu0 %v138
    %203 = vmatprep.mubr.f32.mxu0 %v104
    %204 = vmatmul.mubr.f32.gmra.mrb[0].mxu0 %v103
    %v205 = vpop.f32.mrb[0].mxu0
    %v206 = vadd.f32 0.0, %v205
    %v207 = vpop.f32.mrb[0].mxu0
    %208 = vmatprep.mubr.f32.mxu0 %v106
    %209 = vmatmul.mubr.f32.gmra.mrb[0].mxu0 %v105
    %v210 = vpop.f32.mrb[0].mxu0
    %v211 = vadd.f32 0.0, %v210
    %v212 = vpop.f32.mrb[0].mxu0
    %213 = vdwg.mxu0
    %v214 = vld [vmem:[%s4] sm:$0xff]
    %v215 = vld [vmem:[%s4 + $0x8] sm:$0xff]
    %v216 = vld [vmem:[%s4 + $0x10] sm:$0xff]
    %v217 = vld [vmem:[%s4 + $0x18] sm:$0xff]
    %v218 = vld [vmem:[%s4 + $0x20] sm:$0xff]
    %v219 = vld [vmem:[%s4 + $0x28] sm:$0xff]
    %v220 = vld [vmem:[%s4 + $0x30] sm:$0xff]
    %v221 = vld [vmem:[%s4 + $0x38] sm:$0xff]
    %v222 = vld [vmem:[%s5] sm:$0x3]
    %v224 = vlaneseq
    %v225 = vshrl.u32 %v224, 7
    %v226 = vsub.s32 0, %v225
    %v227 = vrot.slane %v222, %v226
    %v228 = vlaneseq
    %v229 = vshrl.u32 %v228, 7
    %v230 = vsub.s32 1, %v229
    %v231 = vrot.slane %v222, %v230
    %vm234 = vcmask 261120
    %v236 = vsel %vm234, %v206, 0
    %v239 = vsel %vm234, %v211, 0
    %241 = vmatprep.subr.mxu0 %v215
    %242 = vmatpush1.msra.mxu0 %v214
    %243 = vmatprep.subr.mxu0 %v217
    %244 = vmatpush1.msra.mxu0 %v216
    %245 = vmatprep.subr.mxu0 %v219
    %246 = vmatpush1.msra.mxu0 %v218
    %247 = vmatprep.subr.mxu0 %v221
    %248 = vmatpush1.msra.mxu0 %v220
    %249 = vmatprep.subr.mxu0 0.0
    %250 = vmatpush1.msra.mxu0 0.0
    %251 = vmatprep.subr.mxu0 0.0
    %252 = vmatpush1.msra.mxu0 0.0
    %253 = vmatprep.subr.mxu0 0.0
    %254 = vmatpush1.msra.mxu0 0.0
    %255 = vmatprep.subr.mxu0 0.0
    %256 = vmatpush1.msra.mxu0 0.0
    %257 = vmatprep.subr.mxu0 0.0
    %258 = vmatpush1.msra.mxu0 0.0
    %259 = vmatprep.subr.mxu0 0.0
    %260 = vmatpush1.msra.mxu0 0.0
    %261 = vmatprep.subr.mxu0 0.0
    %262 = vmatpush1.msra.mxu0 0.0
    %263 = vmatprep.subr.mxu0 0.0
    %264 = vmatpush1.msra.mxu0 0.0
    %265 = vmatprep.subr.mxu0 0.0
    %266 = vmatpush1.msra.mxu0 0.0
    %267 = vmatprep.subr.mxu0 0.0
    %268 = vmatpush1.msra.mxu0 0.0
    %269 = vmatprep.subr.mxu0 0.0
    %270 = vmatpush1.msra.mxu0 0.0
    %271 = vmatprep.subr.mxu0 0.0
    %272 = vmatpush1.msra.mxu0 0.0
    %273 = vmatprep.subr.mxu0 0.0
    %274 = vmatpush1.msra.mxu0 0.0
    %275 = vmatprep.subr.mxu0 0.0
    %276 = vmatpush1.msra.mxu0 0.0
    %277 = vmatprep.subr.mxu0 0.0
    %278 = vmatpush1.msra.mxu0 0.0
    %279 = vmatprep.subr.mxu0 0.0
    %280 = vmatpush1.msra.mxu0 0.0
    %281 = vmatprep.subr.mxu0 0.0
    %282 = vmatpush1.msra.mxu0 0.0
    %283 = vmatprep.subr.mxu0 0.0
    %284 = vmatpush1.msra.mxu0 0.0
    %285 = vmatprep.subr.mxu0 0.0
    %286 = vmatpush1.msra.mxu0 0.0
    %287 = vmatprep.subr.mxu0 0.0
    %288 = vmatpush1.msra.mxu0 0.0
    %289 = vmatprep.subr.mxu0 0.0
    %290 = vmatpush1.msra.mxu0 0.0
    %291 = vmatprep.subr.mxu0 0.0
    %292 = vmatpush1.msra.mxu0 0.0
    %293 = vmatprep.subr.mxu0 0.0
    %294 = vmatpush1.msra.mxu0 0.0
    %295 = vmatprep.subr.mxu0 0.0
    %296 = vmatpush1.msra.mxu0 0.0
    %297 = vmatprep.subr.mxu0 0.0
    %298 = vmatpush1.msra.mxu0 0.0
    %299 = vmatprep.subr.mxu0 0.0
    %300 = vmatpush1.msra.mxu0 0.0
    %301 = vmatprep.subr.mxu0 0.0
    %302 = vmatpush1.msra.mxu0 0.0
    %303 = vmatprep.subr.mxu0 0.0
    %304 = vmatpush1.msra.mxu0 0.0
    %305 = vmatprep.mubr.f32.mxu0 0.0
    %306 = vmatmul.mubr.f32.gmra.mrb[0].mxu0 %v236
    %v307 = vpop.f32.mrb[0].mxu0
    %v308 = vadd.f32 %v227, %v307
    %v309 = vpop.f32.mrb[0].mxu0
    %v310 = vadd.f32 %v231, %v309
    %311 = vmatprep.mubr.f32.mxu0 0.0
    %312 = vmatmul.mubr.f32.gmra.mrb[0].mxu0 %v239
    %v313 = vpop.f32.mrb[0].mxu0
    %v314 = vadd.f32 %v227, %v313
    %v315 = vpop.f32.mrb[0].mxu0
    %v316 = vadd.f32 %v231, %v315
    %317 = vdwg.mxu0
    %v318 = vld [vmem:[%s6] sm:$0xff]
    %v319 = vld [vmem:[%s6 + $0x8] sm:$0xff]
    %v320 = vld [vmem:[%s6 + $0x10] sm:$0xff]
    %v321 = vld [vmem:[%s6 + $0x18] sm:$0xff]
    %v322 = vld [vmem:[%s7] sm:$0xff]
    %v323 = vld [vmem:[%s7 + $0x8] sm:$0xff]
    %v324 = vld [vmem:[%s7 + $0x10] sm:$0xff]
    %v325 = vld [vmem:[%s7 + $0x18] sm:$0xff]
    %v326 = vld [vmem:[%s8] sm:$0xff]
    %v327 = vld [vmem:[%s8 + $0x8] sm:$0xff]
    %v328 = vld [vmem:[%s8 + $0x10] sm:$0xff]
    %v329 = vld [vmem:[%s8 + $0x18] sm:$0xff]
    %v330 = vld [vmem:[%s9] sm:$0xff]
    %v331 = vld [vmem:[%s9 + $0x8] sm:$0xff]
    %v332 = vld [vmem:[%s9 + $0x10] sm:$0xff]
    %v333 = vld [vmem:[%s9 + $0x18] sm:$0xff]
    %v334 = vld [vmem:[%s10] sm:$0xff]
    %v335 = vld [vmem:[%s10 + $0x8] sm:$0xff]
    %v336 = vld [vmem:[%s10 + $0x10] sm:$0xff]
    %v337 = vld [vmem:[%s10 + $0x18] sm:$0xff]
    %v338 = vld [vmem:[%s11] sm:$0xff]
    %v339 = vld [vmem:[%s11 + $0x8] sm:$0xff]
    %v340 = vld [vmem:[%s11 + $0x10] sm:$0xff]
    %v341 = vld [vmem:[%s11 + $0x18] sm:$0xff]
    %v342 = vld [vmem:[%s12] sm:$0x1]
    %v344 = vlaneseq
    %v345 = vshrl.u32 %v344, 7
    %v346 = vsub.s32 0, %v345
    %v347 = vrot.slane %v342, %v346
    %v349 = vld [vmem:[%s13] sm:$0x1]
    %v351 = vlaneseq
    %v352 = vshrl.u32 %v351, 7
    %v353 = vsub.s32 0, %v352
    %v354 = vrot.slane %v349, %v353
    %v356 = vld [vmem:[%s1] sm:$0x3]
    %v358 = vsel %vm234, 0.0, 0
    %360 = vmatprep.subr.mxu0 0.0
    %361 = vmatpush1.msra.mxu0 %v318
    %362 = vmatprep.subr.mxu0 0.0
    %363 = vmatpush1.msra.mxu0 %v319
    %364 = vmatprep.subr.mxu0 0.0
    %365 = vmatpush1.msra.mxu0 %v320
    %366 = vmatprep.subr.mxu0 0.0
    %367 = vmatpush1.msra.mxu0 %v321
    %368 = vmatprep.subr.mxu0 0.0
    %369 = vmatpush1.msra.mxu0 0.0
    %370 = vmatprep.subr.mxu0 0.0
    %371 = vmatpush1.msra.mxu0 0.0
    %372 = vmatprep.subr.mxu0 0.0
    %373 = vmatpush1.msra.mxu0 0.0
    %374 = vmatprep.subr.mxu0 0.0
    %375 = vmatpush1.msra.mxu0 0.0
    %376 = vmatprep.subr.mxu0 0.0
    %377 = vmatpush1.msra.mxu0 0.0
    %378 = vmatprep.subr.mxu0 0.0
    %379 = vmatpush1.msra.mxu0 0.0
    %380 = vmatprep.subr.mxu0 0.0
    %381 = vmatpush1.msra.mxu0 0.0
    %382 = vmatprep.subr.mxu0 0.0
    %383 = vmatpush1.msra.mxu0 0.0
    %384 = vmatprep.subr.mxu0 0.0
    %385 = vmatpush1.msra.mxu0 0.0
    %386 = vmatprep.subr.mxu0 0.0
    %387 = vmatpush1.msra.mxu0 0.0
    %388 = vmatprep.subr.mxu0 0.0
    %389 = vmatpush1.msra.mxu0 0.0
    %390 = vmatprep.subr.mxu0 0.0
    %391 = vmatpush1.msra.mxu0 0.0
    %392 = vmatprep.subr.mxu0 0.0
    %393 = vmatpush1.msra.mxu0 0.0
    %394 = vmatprep.subr.mxu0 0.0
    %395 = vmatpush1.msra.mxu0 0.0
    %396 = vmatprep.subr.mxu0 0.0
    %397 = vmatpush1.msra.mxu0 0.0
    %398 = vmatprep.subr.mxu0 0.0
    %399 = vmatpush1.msra.mxu0 0.0
    %400 = vmatprep.subr.mxu0 0.0
    %401 = vmatpush1.msra.mxu0 0.0
    %402 = vmatprep.subr.mxu0 0.0
    %403 = vmatpush1.msra.mxu0 0.0
    %404 = vmatprep.subr.mxu0 0.0
    %405 = vmatpush1.msra.mxu0 0.0
    %406 = vmatprep.subr.mxu0 0.0
    %407 = vmatpush1.msra.mxu0 0.0
    %408 = vmatprep.subr.mxu0 0.0
    %409 = vmatpush1.msra.mxu0 0.0
    %410 = vmatprep.subr.mxu0 0.0
    %411 = vmatpush1.msra.mxu0 0.0
    %412 = vmatprep.subr.mxu0 0.0
    %413 = vmatpush1.msra.mxu0 0.0
    %414 = vmatprep.subr.mxu0 0.0
    %415 = vmatpush1.msra.mxu0 0.0
    %416 = vmatprep.subr.mxu0 0.0
    %417 = vmatpush1.msra.mxu0 0.0
    %418 = vmatprep.subr.mxu0 0.0
    %419 = vmatpush1.msra.mxu0 0.0
    %420 = vmatprep.subr.mxu0 0.0
    %421 = vmatpush1.msra.mxu0 0.0
    %422 = vmatprep.subr.mxu0 0.0
    %423 = vmatpush1.msra.mxu0 0.0
    %424 = vmatprep.mubr.f32.mxu0 0.0
    %425 = vmatmul.mubr.f32.gmra.mrb[0].mxu0 %v358
    %v426 = vpop.f32.mrb[0].mxu0
    %v427 = vadd.f32 0.0, %v426
    %v428 = vpop.f32.mrb[0].mxu0
    %429 = vdwg.mxu0
    %v430 = vadd.f32 %v308, %v427
    %v431 = vxor.u32 %v430, 2147483648
    %v432 = vmul.f32 %v431, 1.442695
    %v433 = vpow.pop %v432
    %v434 = vadd.f32 %v433, 1.0
    %v435 = vrcp.pop %v434
    %v436 = vmul.f32 1.0, %v435
    %437 = vmatprep.subr.mxu0 0.0
    %438 = vmatpush1.msra.mxu0 %v322
    %439 = vmatprep.subr.mxu0 0.0
    %440 = vmatpush1.msra.mxu0 %v323
    %441 = vmatprep.subr.mxu0 0.0
    %442 = vmatpush1.msra.mxu0 %v324
    %443 = vmatprep.subr.mxu0 0.0
    %444 = vmatpush1.msra.mxu0 %v325
    %445 = vmatprep.subr.mxu0 0.0
    %446 = vmatpush1.msra.mxu0 0.0
    %447 = vmatprep.subr.mxu0 0.0
    %448 = vmatpush1.msra.mxu0 0.0
    %449 = vmatprep.subr.mxu0 0.0
    %450 = vmatpush1.msra.mxu0 0.0
    %451 = vmatprep.subr.mxu0 0.0
    %452 = vmatpush1.msra.mxu0 0.0
    %453 = vmatprep.subr.mxu0 0.0
    %454 = vmatpush1.msra.mxu0 0.0
    %455 = vmatprep.subr.mxu0 0.0
    %456 = vmatpush1.msra.mxu0 0.0
    %457 = vmatprep.subr.mxu0 0.0
    %458 = vmatpush1.msra.mxu0 0.0
    %459 = vmatprep.subr.mxu0 0.0
    %460 = vmatpush1.msra.mxu0 0.0
    %461 = vmatprep.subr.mxu0 0.0
    %462 = vmatpush1.msra.mxu0 0.0
    %463 = vmatprep.subr.mxu0 0.0
    %464 = vmatpush1.msra.mxu0 0.0
    %465 = vmatprep.subr.mxu0 0.0
    %466 = vmatpush1.msra.mxu0 0.0
    %467 = vmatprep.subr.mxu0 0.0
    %468 = vmatpush1.msra.mxu0 0.0
    %469 = vmatprep.subr.mxu0 0.0
    %470 = vmatpush1.msra.mxu0 0.0
    %471 = vmatprep.subr.mxu0 0.0
    %472 = vmatpush1.msra.mxu0 0.0
    %473 = vmatprep.subr.mxu0 0.0
    %474 = vmatpush1.msra.mxu0 0.0
    %475 = vmatprep.subr.mxu0 0.0
    %476 = vmatpush1.msra.mxu0 0.0
    %477 = vmatprep.subr.mxu0 0.0
    %478 = vmatpush1.msra.mxu0 0.0
    %479 = vmatprep.subr.mxu0 0.0
    %480 = vmatpush1.msra.mxu0 0.0
    %481 = vmatprep.subr.mxu0 0.0
    %482 = vmatpush1.msra.mxu0 0.0
    %483 = vmatprep.subr.mxu0 0.0
    %484 = vmatpush1.msra.mxu0 0.0
    %485 = vmatprep.subr.mxu0 0.0
    %486 = vmatpush1.msra.mxu0 0.0
    %487 = vmatprep.subr.mxu0 0.0
    %488 = vmatpush1.msra.mxu0 0.0
    %489 = vmatprep.subr.mxu0 0.0
    %490 = vmatpush1.msra.mxu0 0.0
    %491 = vmatprep.subr.mxu0 0.0
    %492 = vmatpush1.msra.mxu0 0.0
    %493 = vmatprep.subr.mxu0 0.0
    %494 = vmatpush1.msra.mxu0 0.0
    %495 = vmatprep.subr.mxu0 0.0
    %496 = vmatpush1.msra.mxu0 0.0
    %497 = vmatprep.subr.mxu0 0.0
    %498 = vmatpush1.msra.mxu0 0.0
    %499 = vmatprep.subr.mxu0 0.0
    %500 = vmatpush1.msra.mxu0 0.0
    %501 = vmatprep.mubr.f32.mxu0 0.0
    %502 = vmatmul.mubr.f32.gmra.mrb[0].mxu0 %v358
    %v503 = vpop.f32.mrb[0].mxu0
    %v504 = vadd.f32 0.0, %v503
    %v505 = vpop.f32.mrb[0].mxu0
    %506 = vdwg.mxu0
    %508 = vrot.lane.b32.xlu0 %v504, 32
    %v509 = vpop.permute.xlu0 %508
    %v511 = vadd.f32 %v308, %v509
    %v512 = vxor.u32 %v511, 2147483648
    %v513 = vmul.f32 %v512, 1.442695
    %v514 = vpow.pop %v513
    %v515 = vadd.f32 %v514, 1.0
    %v516 = vrcp.pop %v515
    %v517 = vmul.f32 1.0, %v516
    %518 = vmatprep.subr.mxu0 0.0
    %519 = vmatpush1.msra.mxu0 %v326
    %520 = vmatprep.subr.mxu0 0.0
    %521 = vmatpush1.msra.mxu0 %v327
    %522 = vmatprep.subr.mxu0 0.0
    %523 = vmatpush1.msra.mxu0 %v328
    %524 = vmatprep.subr.mxu0 0.0
    %525 = vmatpush1.msra.mxu0 %v329
    %526 = vmatprep.subr.mxu0 0.0
    %527 = vmatpush1.msra.mxu0 0.0
    %528 = vmatprep.subr.mxu0 0.0
    %529 = vmatpush1.msra.mxu0 0.0
    %530 = vmatprep.subr.mxu0 0.0
    %531 = vmatpush1.msra.mxu0 0.0
    %532 = vmatprep.subr.mxu0 0.0
    %533 = vmatpush1.msra.mxu0 0.0
    %534 = vmatprep.subr.mxu0 0.0
    %535 = vmatpush1.msra.mxu0 0.0
    %536 = vmatprep.subr.mxu0 0.0
    %537 = vmatpush1.msra.mxu0 0.0
    %538 = vmatprep.subr.mxu0 0.0
    %539 = vmatpush1.msra.mxu0 0.0
    %540 = vmatprep.subr.mxu0 0.0
    %541 = vmatpush1.msra.mxu0 0.0
    %542 = vmatprep.subr.mxu0 0.0
    %543 = vmatpush1.msra.mxu0 0.0
    %544 = vmatprep.subr.mxu0 0.0
    %545 = vmatpush1.msra.mxu0 0.0
    %546 = vmatprep.subr.mxu0 0.0
    %547 = vmatpush1.msra.mxu0 0.0
    %548 = vmatprep.subr.mxu0 0.0
    %549 = vmatpush1.msra.mxu0 0.0
    %550 = vmatprep.subr.mxu0 0.0
    %551 = vmatpush1.msra.mxu0 0.0
    %552 = vmatprep.subr.mxu0 0.0
    %553 = vmatpush1.msra.mxu0 0.0
    %554 = vmatprep.subr.mxu0 0.0
    %555 = vmatpush1.msra.mxu0 0.0
    %556 = vmatprep.subr.mxu0 0.0
    %557 = vmatpush1.msra.mxu0 0.0
    %558 = vmatprep.subr.mxu0 0.0
    %559 = vmatpush1.msra.mxu0 0.0
    %560 = vmatprep.subr.mxu0 0.0
    %561 = vmatpush1.msra.mxu0 0.0
    %562 = vmatprep.subr.mxu0 0.0
    %563 = vmatpush1.msra.mxu0 0.0
    %564 = vmatprep.subr.mxu0 0.0
    %565 = vmatpush1.msra.mxu0 0.0
    %566 = vmatprep.subr.mxu0 0.0
    %567 = vmatpush1.msra.mxu0 0.0
    %568 = vmatprep.subr.mxu0 0.0
    %569 = vmatpush1.msra.mxu0 0.0
    %570 = vmatprep.subr.mxu0 0.0
    %571 = vmatpush1.msra.mxu0 0.0
    %572 = vmatprep.subr.mxu0 0.0
    %573 = vmatpush1.msra.mxu0 0.0
    %574 = vmatprep.subr.mxu0 0.0
    %575 = vmatpush1.msra.mxu0 0.0
    %576 = vmatprep.subr.mxu0 0.0
    %577 = vmatpush1.msra.mxu0 0.0
    %578 = vmatprep.subr.mxu0 0.0
    %579 = vmatpush1.msra.mxu0 0.0
    %580 = vmatprep.subr.mxu0 0.0
    %581 = vmatpush1.msra.mxu0 0.0
    %582 = vmatprep.mubr.f32.mxu0 0.0
    %583 = vmatmul.mubr.f32.gmra.mrb[0].mxu0 %v358
    %v584 = vpop.f32.mrb[0].mxu0
    %v585 = vadd.f32 %v347, %v584
    %v586 = vpop.f32.mrb[0].mxu0
    %587 = vdwg.mxu0
    %v588 = vmul.f32 %v436, %v585
    %590 = vrot.lane.b32.xlu0 %v588, 64
    %v591 = vpop.permute.xlu0 %590
    %v593 = vadd.f32 %v308, %v591
    %v594 = vtanh.pop %v593
    %v595 = vsub.f32 1.0, %v517
    %597 = vrot.lane.b32.xlu0 %v594, 96
    %v598 = vpop.permute.xlu0 %597
    %v600 = vmul.f32 %v595, %v598
    %v601 = vmul.f32 %v517, 0.0
    %v602 = vadd.f32 %v600, %v601
    %603 = vmatprep.subr.mxu0 0.0
    %604 = vmatpush1.msra.mxu0 %v330
    %605 = vmatprep.subr.mxu0 0.0
    %606 = vmatpush1.msra.mxu0 %v331
    %607 = vmatprep.subr.mxu0 0.0
    %608 = vmatpush1.msra.mxu0 %v332
    %609 = vmatprep.subr.mxu0 0.0
    %610 = vmatpush1.msra.mxu0 %v333
    %611 = vmatprep.subr.mxu0 0.0
    %612 = vmatpush1.msra.mxu0 0.0
    %613 = vmatprep.subr.mxu0 0.0
    %614 = vmatpush1.msra.mxu0 0.0
    %615 = vmatprep.subr.mxu0 0.0
    %616 = vmatpush1.msra.mxu0 0.0
    %617 = vmatprep.subr.mxu0 0.0
    %618 = vmatpush1.msra.mxu0 0.0
    %619 = vmatprep.subr.mxu0 0.0
    %620 = vmatpush1.msra.mxu0 0.0
    %621 = vmatprep.subr.mxu0 0.0
    %622 = vmatpush1.msra.mxu0 0.0
    %623 = vmatprep.subr.mxu0 0.0
    %624 = vmatpush1.msra.mxu0 0.0
    %625 = vmatprep.subr.mxu0 0.0
    %626 = vmatpush1.msra.mxu0 0.0
    %627 = vmatprep.subr.mxu0 0.0
    %628 = vmatpush1.msra.mxu0 0.0
    %629 = vmatprep.subr.mxu0 0.0
    %630 = vmatpush1.msra.mxu0 0.0
    %631 = vmatprep.subr.mxu0 0.0
    %632 = vmatpush1.msra.mxu0 0.0
    %633 = vmatprep.subr.mxu0 0.0
    %634 = vmatpush1.msra.mxu0 0.0
    %635 = vmatprep.subr.mxu0 0.0
    %636 = vmatpush1.msra.mxu0 0.0
    %637 = vmatprep.subr.mxu0 0.0
    %638 = vmatpush1.msra.mxu0 0.0
    %639 = vmatprep.subr.mxu0 0.0
    %640 = vmatpush1.msra.mxu0 0.0
    %641 = vmatprep.subr.mxu0 0.0
    %642 = vmatpush1.msra.mxu0 0.0
    %643 = vmatprep.subr.mxu0 0.0
    %644 = vmatpush1.msra.mxu0 0.0
    %645 = vmatprep.subr.mxu0 0.0
    %646 = vmatpush1.msra.mxu0 0.0
    %647 = vmatprep.subr.mxu0 0.0
    %648 = vmatpush1.msra.mxu0 0.0
    %649 = vmatprep.subr.mxu0 0.0
    %650 = vmatpush1.msra.mxu0 0.0
    %651 = vmatprep.subr.mxu0 0.0
    %652 = vmatpush1.msra.mxu0 0.0
    %653 = vmatprep.subr.mxu0 0.0
    %654 = vmatpush1.msra.mxu0 0.0
    %655 = vmatprep.subr.mxu0 0.0
    %656 = vmatpush1.msra.mxu0 0.0
    %657 = vmatprep.subr.mxu0 0.0
    %658 = vmatpush1.msra.mxu0 0.0
    %659 = vmatprep.subr.mxu0 0.0
    %660 = vmatpush1.msra.mxu0 0.0
    %661 = vmatprep.subr.mxu0 0.0
    %662 = vmatpush1.msra.mxu0 0.0
    %663 = vmatprep.subr.mxu0 0.0
    %664 = vmatpush1.msra.mxu0 0.0
    %665 = vmatprep.subr.mxu0 0.0
    %666 = vmatpush1.msra.mxu0 0.0
    %667 = vmatprep.mubr.f32.mxu0 0.0
    %668 = vmatmul.mubr.f32.gmra.mrb[0].mxu0 %v358
    %v669 = vpop.f32.mrb[0].mxu0
    %v670 = vadd.f32 0.0, %v669
    %v671 = vpop.f32.mrb[0].mxu0
    %672 = vdwg.mxu0
    %v674 = vrot.slane %v670, 2
    %675 = vrot.lane.b32.xlu0 %v674, 96
    %v676 = vpop.permute.xlu0 %675
    %v678 = vadd.f32 %v314, %v676
    %v679 = vxor.u32 %v678, 2147483648
    %v680 = vmul.f32 %v679, 1.442695
    %v681 = vpow.pop %v680
    %v682 = vadd.f32 %v681, 1.0
    %v683 = vrcp.pop %v682
    %v684 = vmul.f32 1.0, %v683
    %685 = vmatprep.subr.mxu0 0.0
    %686 = vmatpush1.msra.mxu0 %v334
    %687 = vmatprep.subr.mxu0 0.0
    %688 = vmatpush1.msra.mxu0 %v335
    %689 = vmatprep.subr.mxu0 0.0
    %690 = vmatpush1.msra.mxu0 %v336
    %691 = vmatprep.subr.mxu0 0.0
    %692 = vmatpush1.msra.mxu0 %v337
    %693 = vmatprep.subr.mxu0 0.0
    %694 = vmatpush1.msra.mxu0 0.0
    %695 = vmatprep.subr.mxu0 0.0
    %696 = vmatpush1.msra.mxu0 0.0
    %697 = vmatprep.subr.mxu0 0.0
    %698 = vmatpush1.msra.mxu0 0.0
    %699 = vmatprep.subr.mxu0 0.0
    %700 = vmatpush1.msra.mxu0 0.0
    %701 = vmatprep.subr.mxu0 0.0
    %702 = vmatpush1.msra.mxu0 0.0
    %703 = vmatprep.subr.mxu0 0.0
    %704 = vmatpush1.msra.mxu0 0.0
    %705 = vmatprep.subr.mxu0 0.0
    %706 = vmatpush1.msra.mxu0 0.0
    %707 = vmatprep.subr.mxu0 0.0
    %708 = vmatpush1.msra.mxu0 0.0
    %709 = vmatprep.subr.mxu0 0.0
    %710 = vmatpush1.msra.mxu0 0.0
    %711 = vmatprep.subr.mxu0 0.0
    %712 = vmatpush1.msra.mxu0 0.0
    %713 = vmatprep.subr.mxu0 0.0
    %714 = vmatpush1.msra.mxu0 0.0
    %715 = vmatprep.subr.mxu0 0.0
    %716 = vmatpush1.msra.mxu0 0.0
    %717 = vmatprep.subr.mxu0 0.0
    %718 = vmatpush1.msra.mxu0 0.0
    %719 = vmatprep.subr.mxu0 0.0
    %720 = vmatpush1.msra.mxu0 0.0
    %721 = vmatprep.subr.mxu0 0.0
    %722 = vmatpush1.msra.mxu0 0.0
    %723 = vmatprep.subr.mxu0 0.0
    %724 = vmatpush1.msra.mxu0 0.0
    %725 = vmatprep.subr.mxu0 0.0
    %726 = vmatpush1.msra.mxu0 0.0
    %727 = vmatprep.subr.mxu0 0.0
    %728 = vmatpush1.msra.mxu0 0.0
    %729 = vmatprep.subr.mxu0 0.0
    %730 = vmatpush1.msra.mxu0 0.0
    %731 = vmatprep.subr.mxu0 0.0
    %732 = vmatpush1.msra.mxu0 0.0
    %733 = vmatprep.subr.mxu0 0.0
    %734 = vmatpush1.msra.mxu0 0.0
    %735 = vmatprep.subr.mxu0 0.0
    %736 = vmatpush1.msra.mxu0 0.0
    %737 = vmatprep.subr.mxu0 0.0
    %738 = vmatpush1.msra.mxu0 0.0
    %739 = vmatprep.subr.mxu0 0.0
    %740 = vmatpush1.msra.mxu0 0.0
    %741 = vmatprep.subr.mxu0 0.0
    %742 = vmatpush1.msra.mxu0 0.0
    %743 = vmatprep.subr.mxu0 0.0
    %744 = vmatpush1.msra.mxu0 0.0
    %745 = vmatprep.subr.mxu0 0.0
    %746 = vmatpush1.msra.mxu0 0.0
    %747 = vmatprep.subr.mxu0 0.0
    %748 = vmatpush1.msra.mxu0 0.0
    %749 = vmatprep.mubr.f32.mxu0 0.0
    %750 = vmatmul.mubr.f32.gmra.mrb[0].mxu0 %v358
    %v751 = vpop.f32.mrb[0].mxu0
    %v752 = vadd.f32 0.0, %v751
    %v753 = vpop.f32.mrb[0].mxu0
    %754 = vdwg.mxu0
    %v756 = vrot.slane %v752, 2
    %v758 = vadd.f32 %v316, %v756
    %v759 = vxor.u32 %v758, 2147483648
    %v760 = vmul.f32 %v759, 1.442695
    %v761 = vpow.pop %v760
    %v762 = vadd.f32 %v761, 1.0
    %v763 = vrcp.pop %v762
    %v764 = vmul.f32 1.0, %v763
    %765 = vmatprep.subr.mxu0 0.0
    %766 = vmatpush1.msra.mxu0 %v338
    %767 = vmatprep.subr.mxu0 0.0
    %768 = vmatpush1.msra.mxu0 %v339
    %769 = vmatprep.subr.mxu0 0.0
    %770 = vmatpush1.msra.mxu0 %v340
    %771 = vmatprep.subr.mxu0 0.0
    %772 = vmatpush1.msra.mxu0 %v341
    %773 = vmatprep.subr.mxu0 0.0
    %774 = vmatpush1.msra.mxu0 0.0
    %775 = vmatprep.subr.mxu0 0.0
    %776 = vmatpush1.msra.mxu0 0.0
    %777 = vmatprep.subr.mxu0 0.0
    %778 = vmatpush1.msra.mxu0 0.0
    %779 = vmatprep.subr.mxu0 0.0
    %780 = vmatpush1.msra.mxu0 0.0
    %781 = vmatprep.subr.mxu0 0.0
    %782 = vmatpush1.msra.mxu0 0.0
    %783 = vmatprep.subr.mxu0 0.0
    %784 = vmatpush1.msra.mxu0 0.0
    %785 = vmatprep.subr.mxu0 0.0
    %786 = vmatpush1.msra.mxu0 0.0
    %787 = vmatprep.subr.mxu0 0.0
    %788 = vmatpush1.msra.mxu0 0.0
    %789 = vmatprep.subr.mxu0 0.0
    %790 = vmatpush1.msra.mxu0 0.0
    %791 = vmatprep.subr.mxu0 0.0
    %792 = vmatpush1.msra.mxu0 0.0
    %793 = vmatprep.subr.mxu0 0.0
    %794 = vmatpush1.msra.mxu0 0.0
    %795 = vmatprep.subr.mxu0 0.0
    %796 = vmatpush1.msra.mxu0 0.0
    %797 = vmatprep.subr.mxu0 0.0
    %798 = vmatpush1.msra.mxu0 0.0
    %799 = vmatprep.subr.mxu0 0.0
    %800 = vmatpush1.msra.mxu0 0.0
    %801 = vmatprep.subr.mxu0 0.0
    %802 = vmatpush1.msra.mxu0 0.0
    %803 = vmatprep.subr.mxu0 0.0
    %804 = vmatpush1.msra.mxu0 0.0
    %805 = vmatprep.subr.mxu0 0.0
    %806 = vmatpush1.msra.mxu0 0.0
    %807 = vmatprep.subr.mxu0 0.0
    %808 = vmatpush1.msra.mxu0 0.0
    %809 = vmatprep.subr.mxu0 0.0
    %810 = vmatpush1.msra.mxu0 0.0
    %811 = vmatprep.subr.mxu0 0.0
    %812 = vmatpush1.msra.mxu0 0.0
    %813 = vmatprep.subr.mxu0 0.0
    %814 = vmatpush1.msra.mxu0 0.0
    %815 = vmatprep.subr.mxu0 0.0
    %816 = vmatpush1.msra.mxu0 0.0
    %817 = vmatprep.subr.mxu0 0.0
    %818 = vmatpush1.msra.mxu0 0.0
    %819 = vmatprep.subr.mxu0 0.0
    %820 = vmatpush1.msra.mxu0 0.0
    %821 = vmatprep.subr.mxu0 0.0
    %822 = vmatpush1.msra.mxu0 0.0
    %823 = vmatprep.subr.mxu0 0.0
    %824 = vmatpush1.msra.mxu0 0.0
    %825 = vmatprep.subr.mxu0 0.0
    %826 = vmatpush1.msra.mxu0 0.0
    %827 = vmatprep.subr.mxu0 0.0
    %828 = vmatpush1.msra.mxu0 0.0
    %829 = vmatprep.mubr.f32.mxu0 0.0
    %830 = vmatmul.mubr.f32.gmra.mrb[0].mxu0 %v358
    %v831 = vpop.f32.mrb[0].mxu0
    %v832 = vadd.f32 %v354, %v831
    %v833 = vpop.f32.mrb[0].mxu0
    %834 = vdwg.mxu0
    %v836 = vrot.slane %v832, 2
    %837 = vrot.lane.b32.xlu0 %v836, 96
    %v838 = vpop.permute.xlu0 %837
    %v840 = vmul.f32 %v684, %v838
    %842 = vrot.lane.b32.xlu0 %v840, 64
    %v843 = vpop.permute.xlu0 %842
    %v845 = vadd.f32 %v316, %v843
    %v846 = vtanh.pop %v845
    %v847 = vsub.f32 1.0, %v764
    %849 = vrot.lane.b32.xlu0 %v846, 96
    %v850 = vpop.permute.xlu0 %849
    %v852 = vmul.f32 %v847, %v850
    %v853 = vmul.f32 %v764, 0.0
    %v854 = vadd.f32 %v852, %v853
    %vm855 = vcmp.eq.s32.totalorder %v356, 1
    %v856 = vsel %vm855, 1, 0
    %v857 = vcvt.s32.f32 %v856
    %vm858 = vcmp.eq.s32.totalorder %v356, 8
    %v859 = vsel %vm858, 1, 0
    %v860 = vcvt.s32.f32 %v859
    %862 = vset.pattern.permute.xlu0 0
    %863 = vperm.xlu0 %862, %v857
    %v864 = vpop.permute.xlu0 %863
    %v866 = vmul.f32 %v864, %v602
    %v867 = vadd.f32 %v866, 0.0
    %869 = vset.pattern.permute.xlu0 0
    %870 = vperm.xlu0 %869, %v860
    %v871 = vpop.permute.xlu0 %870
    %v874 = vrot.slane %v854, 6
    %v876 = vmul.f32 %v871, %v874
    %v877 = vadd.f32 %v876, 0.0
    %879 = vrot.lane.b32.xlu0 %v602, 96
    %v880 = vpop.permute.xlu0 %879
    %v881 = vsel %vm234, %v880, 0
    %883 = vmatprep.subr.mxu0 0.0
    %884 = vmatpush1.msra.mxu0 %v318
    %885 = vmatprep.subr.mxu0 0.0
    %886 = vmatpush1.msra.mxu0 %v319
    %887 = vmatprep.subr.mxu0 0.0
    %888 = vmatpush1.msra.mxu0 %v320
    %889 = vmatprep.subr.mxu0 0.0
    %890 = vmatpush1.msra.mxu0 %v321
    %891 = vmatprep.subr.mxu0 0.0
    %892 = vmatpush1.msra.mxu0 0.0
    %893 = vmatprep.subr.mxu0 0.0
    %894 = vmatpush1.msra.mxu0 0.0
    %895 = vmatprep.subr.mxu0 0.0
    %896 = vmatpush1.msra.mxu0 0.0
    %897 = vmatprep.subr.mxu0 0.0
    %898 = vmatpush1.msra.mxu0 0.0
    %899 = vmatprep.subr.mxu0 0.0
    %900 = vmatpush1.msra.mxu0 0.0
    %901 = vmatprep.subr.mxu0 0.0
    %902 = vmatpush1.msra.mxu0 0.0
    %903 = vmatprep.subr.mxu0 0.0
    %904 = vmatpush1.msra.mxu0 0.0
    %905 = vmatprep.subr.mxu0 0.0
    %906 = vmatpush1.msra.mxu0 0.0
    %907 = vmatprep.subr.mxu0 0.0
    %908 = vmatpush1.msra.mxu0 0.0
    %909 = vmatprep.subr.mxu0 0.0
    %910 = vmatpush1.msra.mxu0 0.0
    %911 = vmatprep.subr.mxu0 0.0
    %912 = vmatpush1.msra.mxu0 0.0
    %913 = vmatprep.subr.mxu0 0.0
    %914 = vmatpush1.msra.mxu0 0.0
    %915 = vmatprep.subr.mxu0 0.0
    %916 = vmatpush1.msra.mxu0 0.0
    %917 = vmatprep.subr.mxu0 0.0
    %918 = vmatpush1.msra.mxu0 0.0
    %919 = vmatprep.subr.mxu0 0.0
    %920 = vmatpush1.msra.mxu0 0.0
    %921 = vmatprep.subr.mxu0 0.0
    %922 = vmatpush1.msra.mxu0 0.0
    %923 = vmatprep.subr.mxu0 0.0
    %924 = vmatpush1.msra.mxu0 0.0
    %925 = vmatprep.subr.mxu0 0.0
    %926 = vmatpush1.msra.mxu0 0.0
    %927 = vmatprep.subr.mxu0 0.0
    %928 = vmatpush1.msra.mxu0 0.0
    %929 = vmatprep.subr.mxu0 0.0
    %930 = vmatpush1.msra.mxu0 0.0
    %931 = vmatprep.subr.mxu0 0.0
    %932 = vmatpush1.msra.mxu0 0.0
    %933 = vmatprep.subr.mxu0 0.0
    %934 = vmatpush1.msra.mxu0 0.0
    %935 = vmatprep.subr.mxu0 0.0
    %936 = vmatpush1.msra.mxu0 0.0
    %937 = vmatprep.subr.mxu0 0.0
    %938 = vmatpush1.msra.mxu0 0.0
    %939 = vmatprep.subr.mxu0 0.0
    %940 = vmatpush1.msra.mxu0 0.0
    %941 = vmatprep.subr.mxu0 0.0
    %942 = vmatpush1.msra.mxu0 0.0
    %943 = vmatprep.subr.mxu0 0.0
    %944 = vmatpush1.msra.mxu0 0.0
    %945 = vmatprep.subr.mxu0 0.0
    %946 = vmatpush1.msra.mxu0 0.0
    %947 = vmatprep.mubr.f32.mxu0 0.0
    %948 = vmatmul.mubr.f32.gmra.mrb[0].mxu0 %v881
    %v949 = vpop.f32.mrb[0].mxu0
    %v950 = vadd.f32 0.0, %v949
    %v951 = vpop.f32.mrb[0].mxu0
    %952 = vdwg.mxu0
    %v954 = vrot.slane %v950, 6
    %v956 = vadd.f32 %v308, %v954
    %v957 = vxor.u32 %v956, 2147483648
    %v958 = vmul.f32 %v957, 1.442695
    %v959 = vpow.pop %v958
    %v960 = vadd.f32 %v959, 1.0
    %v961 = vrcp.pop %v960
    %v962 = vmul.f32 1.0, %v961
    %963 = vmatprep.subr.mxu0 0.0
    %964 = vmatpush1.msra.mxu0 %v322
    %965 = vmatprep.subr.mxu0 0.0
    %966 = vmatpush1.msra.mxu0 %v323
    %967 = vmatprep.subr.mxu0 0.0
    %968 = vmatpush1.msra.mxu0 %v324
    %969 = vmatprep.subr.mxu0 0.0
    %970 = vmatpush1.msra.mxu0 %v325
    %971 = vmatprep.subr.mxu0 0.0
    %972 = vmatpush1.msra.mxu0 0.0
    %973 = vmatprep.subr.mxu0 0.0
    %974 = vmatpush1.msra.mxu0 0.0
    %975 = vmatprep.subr.mxu0 0.0
    %976 = vmatpush1.msra.mxu0 0.0
    %977 = vmatprep.subr.mxu0 0.0
    %978 = vmatpush1.msra.mxu0 0.0
    %979 = vmatprep.subr.mxu0 0.0
    %980 = vmatpush1.msra.mxu0 0.0
    %981 = vmatprep.subr.mxu0 0.0
    %982 = vmatpush1.msra.mxu0 0.0
    %983 = vmatprep.subr.mxu0 0.0
    %984 = vmatpush1.msra.mxu0 0.0
    %985 = vmatprep.subr.mxu0 0.0
    %986 = vmatpush1.msra.mxu0 0.0
    %987 = vmatprep.subr.mxu0 0.0
    %988 = vmatpush1.msra.mxu0 0.0
    %989 = vmatprep.subr.mxu0 0.0
    %990 = vmatpush1.msra.mxu0 0.0
    %991 = vmatprep.subr.mxu0 0.0
    %992 = vmatpush1.msra.mxu0 0.0
    %993 = vmatprep.subr.mxu0 0.0
    %994 = vmatpush1.msra.mxu0 0.0
    %995 = vmatprep.subr.mxu0 0.0
    %996 = vmatpush1.msra.mxu0 0.0
    %997 = vmatprep.subr.mxu0 0.0
    %998 = vmatpush1.msra.mxu0 0.0
    %999 = vmatprep.subr.mxu0 0.0
    %1000 = vmatpush1.msra.mxu0 0.0
    %1001 = vmatprep.subr.mxu0 0.0
    %1002 = vmatpush1.msra.mxu0 0.0
    %1003 = vmatprep.subr.mxu0 0.0
    %1004 = vmatpush1.msra.mxu0 0.0
    %1005 = vmatprep.subr.mxu0 0.0
    %1006 = vmatpush1.msra.mxu0 0.0
    %1007 = vmatprep.subr.mxu0 0.0
    %1008 = vmatpush1.msra.mxu0 0.0
    %1009 = vmatprep.subr.mxu0 0.0
    %1010 = vmatpush1.msra.mxu0 0.0
    %1011 = vmatprep.subr.mxu0 0.0
    %1012 = vmatpush1.msra.mxu0 0.0
    %1013 = vmatprep.subr.mxu0 0.0
    %1014 = vmatpush1.msra.mxu0 0.0
    %1015 = vmatprep.subr.mxu0 0.0
    %1016 = vmatpush1.msra.mxu0 0.0
    %1017 = vmatprep.subr.mxu0 0.0
    %1018 = vmatpush1.msra.mxu0 0.0
    %1019 = vmatprep.subr.mxu0 0.0
    %1020 = vmatpush1.msra.mxu0 0.0
    %1021 = vmatprep.subr.mxu0 0.0
    %1022 = vmatpush1.msra.mxu0 0.0
    %1023 = vmatprep.subr.mxu0 0.0
    %1024 = vmatpush1.msra.mxu0 0.0
    %1025 = vmatprep.subr.mxu0 0.0
    %1026 = vmatpush1.msra.mxu0 0.0
    %1027 = vmatprep.mubr.f32.mxu0 0.0
    %1028 = vmatmul.mubr.f32.gmra.mrb[0].mxu0 %v881
    %v1029 = vpop.f32.mrb[0].mxu0
    %v1030 = vadd.f32 0.0, %v1029
    %v1031 = vpop.f32.mrb[0].mxu0
    %1032 = vdwg.mxu0
    %v1034 = vrot.slane %v1030, 6
    %1035 = vrot.lane.b32.xlu0 %v1034, 32
    %v1036 = vpop.permute.xlu0 %1035
    %v1038 = vadd.f32 %v308, %v1036
    %v1039 = vxor.u32 %v1038, 2147483648
    %v1040 = vmul.f32 %v1039, 1.442695
    %v1041 = vpow.pop %v1040
    %v1042 = vadd.f32 %v1041, 1.0
    %v1043 = vrcp.pop %v1042
    %v1044 = vmul.f32 1.0, %v1043
    %1045 = vmatprep.subr.mxu0 0.0
    %1046 = vmatpush1.msra.mxu0 %v326
    %1047 = vmatprep.subr.mxu0 0.0
    %1048 = vmatpush1.msra.mxu0 %v327
    %1049 = vmatprep.subr.mxu0 0.0
    %1050 = vmatpush1.msra.mxu0 %v328
    %1051 = vmatprep.subr.mxu0 0.0
    %1052 = vmatpush1.msra.mxu0 %v329
    %1053 = vmatprep.subr.mxu0 0.0
    %1054 = vmatpush1.msra.mxu0 0.0
    %1055 = vmatprep.subr.mxu0 0.0
    %1056 = vmatpush1.msra.mxu0 0.0
    %1057 = vmatprep.subr.mxu0 0.0
    %1058 = vmatpush1.msra.mxu0 0.0
    %1059 = vmatprep.subr.mxu0 0.0
    %1060 = vmatpush1.msra.mxu0 0.0
    %1061 = vmatprep.subr.mxu0 0.0
    %1062 = vmatpush1.msra.mxu0 0.0
    %1063 = vmatprep.subr.mxu0 0.0
    %1064 = vmatpush1.msra.mxu0 0.0
    %1065 = vmatprep.subr.mxu0 0.0
    %1066 = vmatpush1.msra.mxu0 0.0
    %1067 = vmatprep.subr.mxu0 0.0
    %1068 = vmatpush1.msra.mxu0 0.0
    %1069 = vmatprep.subr.mxu0 0.0
    %1070 = vmatpush1.msra.mxu0 0.0
    %1071 = vmatprep.subr.mxu0 0.0
    %1072 = vmatpush1.msra.mxu0 0.0
    %1073 = vmatprep.subr.mxu0 0.0
    %1074 = vmatpush1.msra.mxu0 0.0
    %1075 = vmatprep.subr.mxu0 0.0
    %1076 = vmatpush1.msra.mxu0 0.0
    %1077 = vmatprep.subr.mxu0 0.0
    %1078 = vmatpush1.msra.mxu0 0.0
    %1079 = vmatprep.subr.mxu0 0.0
    %1080 = vmatpush1.msra.mxu0 0.0
    %1081 = vmatprep.subr.mxu0 0.0
    %1082 = vmatpush1.msra.mxu0 0.0
    %1083 = vmatprep.subr.mxu0 0.0
    %1084 = vmatpush1.msra.mxu0 0.0
    %1085 = vmatprep.subr.mxu0 0.0
    %1086 = vmatpush1.msra.mxu0 0.0
    %1087 = vmatprep.subr.mxu0 0.0
    %1088 = vmatpush1.msra.mxu0 0.0
    %1089 = vmatprep.subr.mxu0 0.0
    %1090 = vmatpush1.msra.mxu0 0.0
    %1091 = vmatprep.subr.mxu0 0.0
    %1092 = vmatpush1.msra.mxu0 0.0
    %1093 = vmatprep.subr.mxu0 0.0
    %1094 = vmatpush1.msra.mxu0 0.0
    %1095 = vmatprep.subr.mxu0 0.0
    %1096 = vmatpush1.msra.mxu0 0.0
    %1097 = vmatprep.subr.mxu0 0.0
    %1098 = vmatpush1.msra.mxu0 0.0
    %1099 = vmatprep.subr.mxu0 0.0
    %1100 = vmatpush1.msra.mxu0 0.0
    %1101 = vmatprep.subr.mxu0 0.0
    %1102 = vmatpush1.msra.mxu0 0.0
    %1103 = vmatprep.subr.mxu0 0.0
    %1104 = vmatpush1.msra.mxu0 0.0
    %1105 = vmatprep.subr.mxu0 0.0
    %1106 = vmatpush1.msra.mxu0 0.0
    %1107 = vmatprep.subr.mxu0 0.0
    %1108 = vmatpush1.msra.mxu0 0.0
    %1109 = vmatprep.mubr.f32.mxu0 0.0
    %1110 = vmatmul.mubr.f32.gmra.mrb[0].mxu0 %v881
    %v1111 = vpop.f32.mrb[0].mxu0
    %v1112 = vadd.f32 %v347, %v1111
    %v1113 = vpop.f32.mrb[0].mxu0
    %1114 = vdwg.mxu0
    %v1116 = vrot.slane %v1112, 6
    %v1118 = vmul.f32 %v962, %v1116
    %1120 = vrot.lane.b32.xlu0 %v1118, 64
    %v1121 = vpop.permute.xlu0 %1120
    %v1123 = vadd.f32 %v308, %v1121
    %v1124 = vtanh.pop %v1123
    %v1125 = vsub.f32 1.0, %v1044
    %1127 = vrot.lane.b32.xlu0 %v1124, 96
    %v1128 = vpop.permute.xlu0 %1127
    %v1130 = vmul.f32 %v1125, %v1128
    %v1131 = vrot.slane %v602, 6
    %v1133 = vmul.f32 %v1044, %v1131
    %v1134 = vadd.f32 %v1130, %v1133
    %v1135 = vsel %vm234, %v874, 0
    %1137 = vmatprep.subr.mxu0 0.0
    %1138 = vmatpush1.msra.mxu0 %v330
    %1139 = vmatprep.subr.mxu0 0.0
    %1140 = vmatpush1.msra.mxu0 %v331
    %1141 = vmatprep.subr.mxu0 0.0
    %1142 = vmatpush1.msra.mxu0 %v332
    %1143 = vmatprep.subr.mxu0 0.0
    %1144 = vmatpush1.msra.mxu0 %v333
    %1145 = vmatprep.subr.mxu0 0.0
    %1146 = vmatpush1.msra.mxu0 0.0
    %1147 = vmatprep.subr.mxu0 0.0
    %1148 = vmatpush1.msra.mxu0 0.0
    %1149 = vmatprep.subr.mxu0 0.0
    %1150 = vmatpush1.msra.mxu0 0.0
    %1151 = vmatprep.subr.mxu0 0.0
    %1152 = vmatpush1.msra.mxu0 0.0
    %1153 = vmatprep.subr.mxu0 0.0
    %1154 = vmatpush1.msra.mxu0 0.0
    %1155 = vmatprep.subr.mxu0 0.0
    %1156 = vmatpush1.msra.mxu0 0.0
    %1157 = vmatprep.subr.mxu0 0.0
    %1158 = vmatpush1.msra.mxu0 0.0
    %1159 = vmatprep.subr.mxu0 0.0
    %1160 = vmatpush1.msra.mxu0 0.0
    %1161 = vmatprep.subr.mxu0 0.0
    %1162 = vmatpush1.msra.mxu0 0.0
    %1163 = vmatprep.subr.mxu0 0.0
    %1164 = vmatpush1.msra.mxu0 0.0
    %1165 = vmatprep.subr.mxu0 0.0
    %1166 = vmatpush1.msra.mxu0 0.0
    %1167 = vmatprep.subr.mxu0 0.0
    %1168 = vmatpush1.msra.mxu0 0.0
    %1169 = vmatprep.subr.mxu0 0.0
    %1170 = vmatpush1.msra.mxu0 0.0
    %1171 = vmatprep.subr.mxu0 0.0
    %1172 = vmatpush1.msra.mxu0 0.0
    %1173 = vmatprep.subr.mxu0 0.0
    %1174 = vmatpush1.msra.mxu0 0.0
    %1175 = vmatprep.subr.mxu0 0.0
    %1176 = vmatpush1.msra.mxu0 0.0
    %1177 = vmatprep.subr.mxu0 0.0
    %1178 = vmatpush1.msra.mxu0 0.0
    %1179 = vmatprep.subr.mxu0 0.0
    %1180 = vmatpush1.msra.mxu0 0.0
    %1181 = vmatprep.subr.mxu0 0.0
    %1182 = vmatpush1.msra.mxu0 0.0
    %1183 = vmatprep.subr.mxu0 0.0
    %1184 = vmatpush1.msra.mxu0 0.0
    %1185 = vmatprep.subr.mxu0 0.0
    %1186 = vmatpush1.msra.mxu0 0.0
    %1187 = vmatprep.subr.mxu0 0.0
    %1188 = vmatpush1.msra.mxu0 0.0
    %1189 = vmatprep.subr.mxu0 0.0
    %1190 = vmatpush1.msra.mxu0 0.0
    %1191 = vmatprep.subr.mxu0 0.0
    %1192 = vmatpush1.msra.mxu0 0.0
    %1193 = vmatprep.subr.mxu0 0.0
    %1194 = vmatpush1.msra.mxu0 0.0
    %1195 = vmatprep.subr.mxu0 0.0
    %1196 = vmatpush1.msra.mxu0 0.0
    %1197 = vmatprep.subr.mxu0 0.0
    %1198 = vmatpush1.msra.mxu0 0.0
    %1199 = vmatprep.subr.mxu0 0.0
    %1200 = vmatpush1.msra.mxu0 0.0
    %1201 = vmatprep.mubr.f32.mxu0 0.0
    %1202 = vmatmul.mubr.f32.gmra.mrb[0].mxu0 %v1135
    %v1203 = vpop.f32.mrb[0].mxu0
    %v1204 = vadd.f32 0.0, %v1203
    %v1205 = vpop.f32.mrb[0].mxu0
    %1206 = vdwg.mxu0
    %v1208 = vrot.slane %v1204, 4
    %1209 = vrot.lane.b32.xlu0 %v1208, 96
    %v1210 = vpop.permute.xlu0 %1209
    %v1212 = vadd.f32 %v314, %v1210
    %v1213 = vxor.u32 %v1212, 2147483648
    %v1214 = vmul.f32 %v1213, 1.442695
    %v1215 = vpow.pop %v1214
    %v1216 = vadd.f32 %v1215, 1.0
    %v1217 = vrcp.pop %v1216
    %v1218 = vmul.f32 1.0, %v1217
    %1219 = vmatprep.subr.mxu0 0.0
    %1220 = vmatpush1.msra.mxu0 %v334
    %1221 = vmatprep.subr.mxu0 0.0
    %1222 = vmatpush1.msra.mxu0 %v335
    %1223 = vmatprep.subr.mxu0 0.0
    %1224 = vmatpush1.msra.mxu0 %v336
    %1225 = vmatprep.subr.mxu0 0.0
    %1226 = vmatpush1.msra.mxu0 %v337
    %1227 = vmatprep.subr.mxu0 0.0
    %1228 = vmatpush1.msra.mxu0 0.0
    %1229 = vmatprep.subr.mxu0 0.0
    %1230 = vmatpush1.msra.mxu0 0.0
    %1231 = vmatprep.subr.mxu0 0.0
    %1232 = vmatpush1.msra.mxu0 0.0
    %1233 = vmatprep.subr.mxu0 0.0
    %1234 = vmatpush1.msra.mxu0 0.0
    %1235 = vmatprep.subr.mxu0 0.0
    %1236 = vmatpush1.msra.mxu0 0.0
    %1237 = vmatprep.subr.mxu0 0.0
    %1238 = vmatpush1.msra.mxu0 0.0
    %1239 = vmatprep.subr.mxu0 0.0
    %1240 = vmatpush1.msra.mxu0 0.0
    %1241 = vmatprep.subr.mxu0 0.0
    %1242 = vmatpush1.msra.mxu0 0.0
    %1243 = vmatprep.subr.mxu0 0.0
    %1244 = vmatpush1.msra.mxu0 0.0
    %1245 = vmatprep.subr.mxu0 0.0
    %1246 = vmatpush1.msra.mxu0 0.0
    %1247 = vmatprep.subr.mxu0 0.0
    %1248 = vmatpush1.msra.mxu0 0.0
    %1249 = vmatprep.subr.mxu0 0.0
    %1250 = vmatpush1.msra.mxu0 0.0
    %1251 = vmatprep.subr.mxu0 0.0
    %1252 = vmatpush1.msra.mxu0 0.0
    %1253 = vmatprep.subr.mxu0 0.0
    %1254 = vmatpush1.msra.mxu0 0.0
    %1255 = vmatprep.subr.mxu0 0.0
    %1256 = vmatpush1.msra.mxu0 0.0
    %1257 = vmatprep.subr.mxu0 0.0
    %1258 = vmatpush1.msra.mxu0 0.0
    %1259 = vmatprep.subr.mxu0 0.0
    %1260 = vmatpush1.msra.mxu0 0.0
    %1261 = vmatprep.subr.mxu0 0.0
    %1262 = vmatpush1.msra.mxu0 0.0
    %1263 = vmatprep.subr.mxu0 0.0
    %1264 = vmatpush1.msra.mxu0 0.0
    %1265 = vmatprep.subr.mxu0 0.0
    %1266 = vmatpush1.msra.mxu0 0.0
    %1267 = vmatprep.subr.mxu0 0.0
    %1268 = vmatpush1.msra.mxu0 0.0
    %1269 = vmatprep.subr.mxu0 0.0
    %1270 = vmatpush1.msra.mxu0 0.0
    %1271 = vmatprep.subr.mxu0 0.0
    %1272 = vmatpush1.msra.mxu0 0.0
    %1273 = vmatprep.subr.mxu0 0.0
    %1274 = vmatpush1.msra.mxu0 0.0
    %1275 = vmatprep.subr.mxu0 0.0
    %1276 = vmatpush1.msra.mxu0 0.0
    %1277 = vmatprep.subr.mxu0 0.0
    %1278 = vmatpush1.msra.mxu0 0.0
    %1279 = vmatprep.subr.mxu0 0.0
    %1280 = vmatpush1.msra.mxu0 0.0
    %1281 = vmatprep.subr.mxu0 0.0
    %1282 = vmatpush1.msra.mxu0 0.0
    %1283 = vmatprep.mubr.f32.mxu0 0.0
    %1284 = vmatmul.mubr.f32.gmra.mrb[0].mxu0 %v1135
    %v1285 = vpop.f32.mrb[0].mxu0
    %v1286 = vadd.f32 0.0, %v1285
    %v1287 = vpop.f32.mrb[0].mxu0
    %1288 = vdwg.mxu0
    %v1290 = vrot.slane %v1286, 4
    %v1292 = vadd.f32 %v316, %v1290
    %v1293 = vxor.u32 %v1292, 2147483648
    %v1294 = vmul.f32 %v1293, 1.442695
    %v1295 = vpow.pop %v1294
    %v1296 = vadd.f32 %v1295, 1.0
    %v1297 = vrcp.pop %v1296
    %v1298 = vmul.f32 1.0, %v1297
    %1299 = vmatprep.subr.mxu0 0.0
    %1300 = vmatpush1.msra.mxu0 %v338
    %1301 = vmatprep.subr.mxu0 0.0
    %1302 = vmatpush1.msra.mxu0 %v339
    %1303 = vmatprep.subr.mxu0 0.0
    %1304 = vmatpush1.msra.mxu0 %v340
    %1305 = vmatprep.subr.mxu0 0.0
    %1306 = vmatpush1.msra.mxu0 %v341
    %1307 = vmatprep.subr.mxu0 0.0
    %1308 = vmatpush1.msra.mxu0 0.0
    %1309 = vmatprep.subr.mxu0 0.0
    %1310 = vmatpush1.msra.mxu0 0.0
    %1311 = vmatprep.subr.mxu0 0.0
    %1312 = vmatpush1.msra.mxu0 0.0
    %1313 = vmatprep.subr.mxu0 0.0
    %1314 = vmatpush1.msra.mxu0 0.0
    %1315 = vmatprep.subr.mxu0 0.0
    %1316 = vmatpush1.msra.mxu0 0.0
    %1317 = vmatprep.subr.mxu0 0.0
    %1318 = vmatpush1.msra.mxu0 0.0
    %1319 = vmatprep.subr.mxu0 0.0
    %1320 = vmatpush1.msra.mxu0 0.0
    %1321 = vmatprep.subr.mxu0 0.0
    %1322 = vmatpush1.msra.mxu0 0.0
    %1323 = vmatprep.subr.mxu0 0.0
    %1324 = vmatpush1.msra.mxu0 0.0
    %1325 = vmatprep.subr.mxu0 0.0
    %1326 = vmatpush1.msra.mxu0 0.0
    %1327 = vmatprep.subr.mxu0 0.0
    %1328 = vmatpush1.msra.mxu0 0.0
    %1329 = vmatprep.subr.mxu0 0.0
    %1330 = vmatpush1.msra.mxu0 0.0
    %1331 = vmatprep.subr.mxu0 0.0
    %1332 = vmatpush1.msra.mxu0 0.0
    %1333 = vmatprep.subr.mxu0 0.0
    %1334 = vmatpush1.msra.mxu0 0.0
    %1335 = vmatprep.subr.mxu0 0.0
    %1336 = vmatpush1.msra.mxu0 0.0
    %1337 = vmatprep.subr.mxu0 0.0
    %1338 = vmatpush1.msra.mxu0 0.0
    %1339 = vmatprep.subr.mxu0 0.0
    %1340 = vmatpush1.msra.mxu0 0.0
    %1341 = vmatprep.subr.mxu0 0.0
    %1342 = vmatpush1.msra.mxu0 0.0
    %1343 = vmatprep.subr.mxu0 0.0
    %1344 = vmatpush1.msra.mxu0 0.0
    %1345 = vmatprep.subr.mxu0 0.0
    %1346 = vmatpush1.msra.mxu0 0.0
    %1347 = vmatprep.subr.mxu0 0.0
    %1348 = vmatpush1.msra.mxu0 0.0
    %1349 = vmatprep.subr.mxu0 0.0
    %1350 = vmatpush1.msra.mxu0 0.0
    %1351 = vmatprep.subr.mxu0 0.0
    %1352 = vmatpush1.msra.mxu0 0.0
    %1353 = vmatprep.subr.mxu0 0.0
    %1354 = vmatpush1.msra.mxu0 0.0
    %1355 = vmatprep.subr.mxu0 0.0
    %1356 = vmatpush1.msra.mxu0 0.0
    %1357 = vmatprep.subr.mxu0 0.0
    %1358 = vmatpush1.msra.mxu0 0.0
    %1359 = vmatprep.subr.mxu0 0.0
    %1360 = vmatpush1.msra.mxu0 0.0
    %1361 = vmatprep.subr.mxu0 0.0
    %1362 = vmatpush1.msra.mxu0 0.0
    %1363 = vmatprep.mubr.f32.mxu0 0.0
    %1364 = vmatmul.mubr.f32.gmra.mrb[0].mxu0 %v1135
    %v1365 = vpop.f32.mrb[0].mxu0
    %v1366 = vadd.f32 %v354, %v1365
    %v1367 = vpop.f32.mrb[0].mxu0
    %1368 = vdwg.mxu0
    %v1370 = vrot.slane %v1366, 4
    %1371 = vrot.lane.b32.xlu0 %v1370, 96
    %v1372 = vpop.permute.xlu0 %1371
    %v1374 = vmul.f32 %v1218, %v1372
    %1376 = vrot.lane.b32.xlu0 %v1374, 64
    %v1377 = vpop.permute.xlu0 %1376
    %v1379 = vadd.f32 %v316, %v1377
    %v1380 = vtanh.pop %v1379
    %v1381 = vsub.f32 1.0, %v1298
    %1383 = vrot.lane.b32.xlu0 %v1380, 96
    %v1384 = vpop.permute.xlu0 %1383
    %v1386 = vmul.f32 %v1381, %v1384
    %v1387 = vrot.slane %v854, 2
    %v1389 = vmul.f32 %v1298, %v1387
    %v1390 = vadd.f32 %v1386, %v1389
    %vm1391 = vcmp.eq.s32.totalorder %v356, 2
    %v1392 = vsel %vm1391, 1, 0
    %v1393 = vcvt.s32.f32 %v1392
    %vm1394 = vcmp.eq.s32.totalorder %v356, 7
    %v1395 = vsel %vm1394, 1, 0
    %v1396 = vcvt.s32.f32 %v1395
    %v1398 = vrot.slane %v867, 6
    %v1400 = vsub.f32 %v1134, %v1398
    %1402 = vset.pattern.permute.xlu0 0
    %1403 = vperm.xlu0 %1402, %v1393
    %v1404 = vpop.permute.xlu0 %1403
    %v1407 = vrot.slane %v1400, 2
    %1408 = vrot.lane.b32.xlu0 %v1407, 96
    %v1409 = vpop.permute.xlu0 %1408
    %v1411 = vmul.f32 %v1404, %v1409
    %1413 = vrot.lane.b32.xlu0 %v1411, 32
    %v1414 = vpop.permute.xlu0 %1413
    %v1416 = vadd.f32 %v867, %v1414
    %v1418 = vrot.slane %v877, 4
    %v1420 = vsub.f32 %v1390, %v1418
    %1422 = vset.pattern.permute.xlu0 0
    %1423 = vperm.xlu0 %1422, %v1396
    %v1424 = vpop.permute.xlu0 %1423
    %v1427 = vrot.slane %v1420, 4
    %v1429 = vmul.f32 %v1424, %v1427
    %v1430 = vadd.f32 %v877, %v1429
    %v1432 = vrot.slane %v1134, 2
    %1433 = vrot.lane.b32.xlu0 %v1432, 96
    %v1434 = vpop.permute.xlu0 %1433
    %v1435 = vsel %vm234, %v1434, 0
    %1437 = vmatprep.subr.mxu0 0.0
    %1438 = vmatpush1.msra.mxu0 %v318
    %1439 = vmatprep.subr.mxu0 0.0
    %1440 = vmatpush1.msra.mxu0 %v319
    %1441 = vmatprep.subr.mxu0 0.0
    %1442 = vmatpush1.msra.mxu0 %v320
    %1443 = vmatprep.subr.mxu0 0.0
    %1444 = vmatpush1.msra.mxu0 %v321
    %1445 = vmatprep.subr.mxu0 0.0
    %1446 = vmatpush1.msra.mxu0 0.0
    %1447 = vmatprep.subr.mxu0 0.0
    %1448 = vmatpush1.msra.mxu0 0.0
    %1449 = vmatprep.subr.mxu0 0.0
    %1450 = vmatpush1.msra.mxu0 0.0
    %1451 = vmatprep.subr.mxu0 0.0
    %1452 = vmatpush1.msra.mxu0 0.0
    %1453 = vmatprep.subr.mxu0 0.0
    %1454 = vmatpush1.msra.mxu0 0.0
    %1455 = vmatprep.subr.mxu0 0.0
    %1456 = vmatpush1.msra.mxu0 0.0
    %1457 = vmatprep.subr.mxu0 0.0
    %1458 = vmatpush1.msra.mxu0 0.0
    %1459 = vmatprep.subr.mxu0 0.0
    %1460 = vmatpush1.msra.mxu0 0.0
    %1461 = vmatprep.subr.mxu0 0.0
    %1462 = vmatpush1.msra.mxu0 0.0
    %1463 = vmatprep.subr.mxu0 0.0
    %1464 = vmatpush1.msra.mxu0 0.0
    %1465 = vmatprep.subr.mxu0 0.0
    %1466 = vmatpush1.msra.mxu0 0.0
    %1467 = vmatprep.subr.mxu0 0.0
    %1468 = vmatpush1.msra.mxu0 0.0
    %1469 = vmatprep.subr.mxu0 0.0
    %1470 = vmatpush1.msra.mxu0 0.0
    %1471 = vmatprep.subr.mxu0 0.0
    %1472 = vmatpush1.msra.mxu0 0.0
    %1473 = vmatprep.subr.mxu0 0.0
    %1474 = vmatpush1.msra.mxu0 0.0
    %1475 = vmatprep.subr.mxu0 0.0
    %1476 = vmatpush1.msra.mxu0 0.0
    %1477 = vmatprep.subr.mxu0 0.0
    %1478 = vmatpush1.msra.mxu0 0.0
    %1479 = vmatprep.subr.mxu0 0.0
    %1480 = vmatpush1.msra.mxu0 0.0
    %1481 = vmatprep.subr.mxu0 0.0
    %1482 = vmatpush1.msra.mxu0 0.0
    %1483 = vmatprep.subr.mxu0 0.0
    %1484 = vmatpush1.msra.mxu0 0.0
    %1485 = vmatprep.subr.mxu0 0.0
    %1486 = vmatpush1.msra.mxu0 0.0
    %1487 = vmatprep.subr.mxu0 0.0
    %1488 = vmatpush1.msra.mxu0 0.0
    %1489 = vmatprep.subr.mxu0 0.0
    %1490 = vmatpush1.msra.mxu0 0.0
    %1491 = vmatprep.subr.mxu0 0.0
    %1492 = vmatpush1.msra.mxu0 0.0
    %1493 = vmatprep.subr.mxu0 0.0
    %1494 = vmatpush1.msra.mxu0 0.0
    %1495 = vmatprep.subr.mxu0 0.0
    %1496 = vmatpush1.msra.mxu0 0.0
    %1497 = vmatprep.subr.mxu0 0.0
    %1498 = vmatpush1.msra.mxu0 0.0
    %1499 = vmatprep.subr.mxu0 0.0
    %1500 = vmatpush1.msra.mxu0 0.0
    %1501 = vmatprep.mubr.f32.mxu0 0.0
    %1502 = vmatmul.mubr.f32.gmra.mrb[0].mxu0 %v1435
    %v1503 = vpop.f32.mrb[0].mxu0
    %v1504 = vadd.f32 0.0, %v1503
    %v1505 = vpop.f32.mrb[0].mxu0
    %1506 = vdwg.mxu0
    %v1508 = vrot.slane %v1504, 4
    %v1510 = vadd.f32 %v308, %v1508
    %v1511 = vxor.u32 %v1510, 2147483648
    %v1512 = vmul.f32 %v1511, 1.442695
    %v1513 = vpow.pop %v1512
    %v1514 = vadd.f32 %v1513, 1.0
    %v1515 = vrcp.pop %v1514
    %v1516 = vmul.f32 1.0, %v1515
    %1517 = vmatprep.subr.mxu0 0.0
    %1518 = vmatpush1.msra.mxu0 %v322
    %1519 = vmatprep.subr.mxu0 0.0
    %1520 = vmatpush1.msra.mxu0 %v323
    %1521 = vmatprep.subr.mxu0 0.0
    %1522 = vmatpush1.msra.mxu0 %v324
    %1523 = vmatprep.subr.mxu0 0.0
    %1524 = vmatpush1.msra.mxu0 %v325
    %1525 = vmatprep.subr.mxu0 0.0
    %1526 = vmatpush1.msra.mxu0 0.0
    %1527 = vmatprep.subr.mxu0 0.0
    %1528 = vmatpush1.msra.mxu0 0.0
    %1529 = vmatprep.subr.mxu0 0.0
    %1530 = vmatpush1.msra.mxu0 0.0
    %1531 = vmatprep.subr.mxu0 0.0
    %1532 = vmatpush1.msra.mxu0 0.0
    %1533 = vmatprep.subr.mxu0 0.0
    %1534 = vmatpush1.msra.mxu0 0.0
    %1535 = vmatprep.subr.mxu0 0.0
    %1536 = vmatpush1.msra.mxu0 0.0
    %1537 = vmatprep.subr.mxu0 0.0
    %1538 = vmatpush1.msra.mxu0 0.0
    %1539 = vmatprep.subr.mxu0 0.0
    %1540 = vmatpush1.msra.mxu0 0.0
    %1541 = vmatprep.subr.mxu0 0.0
    %1542 = vmatpush1.msra.mxu0 0.0
    %1543 = vmatprep.subr.mxu0 0.0
    %1544 = vmatpush1.msra.mxu0 0.0
    %1545 = vmatprep.subr.mxu0 0.0
    %1546 = vmatpush1.msra.mxu0 0.0
    %1547 = vmatprep.subr.mxu0 0.0
    %1548 = vmatpush1.msra.mxu0 0.0
    %1549 = vmatprep.subr.mxu0 0.0
    %1550 = vmatpush1.msra.mxu0 0.0
    %1551 = vmatprep.subr.mxu0 0.0
    %1552 = vmatpush1.msra.mxu0 0.0
    %1553 = vmatprep.subr.mxu0 0.0
    %1554 = vmatpush1.msra.mxu0 0.0
    %1555 = vmatprep.subr.mxu0 0.0
    %1556 = vmatpush1.msra.mxu0 0.0
    %1557 = vmatprep.subr.mxu0 0.0
    %1558 = vmatpush1.msra.mxu0 0.0
    %1559 = vmatprep.subr.mxu0 0.0
    %1560 = vmatpush1.msra.mxu0 0.0
    %1561 = vmatprep.subr.mxu0 0.0
    %1562 = vmatpush1.msra.mxu0 0.0
    %1563 = vmatprep.subr.mxu0 0.0
    %1564 = vmatpush1.msra.mxu0 0.0
    %1565 = vmatprep.subr.mxu0 0.0
    %1566 = vmatpush1.msra.mxu0 0.0
    %1567 = vmatprep.subr.mxu0 0.0
    %1568 = vmatpush1.msra.mxu0 0.0
    %1569 = vmatprep.subr.mxu0 0.0
    %1570 = vmatpush1.msra.mxu0 0.0
    %1571 = vmatprep.subr.mxu0 0.0
    %1572 = vmatpush1.msra.mxu0 0.0
    %1573 = vmatprep.subr.mxu0 0.0
    %1574 = vmatpush1.msra.mxu0 0.0
    %1575 = vmatprep.subr.mxu0 0.0
    %1576 = vmatpush1.msra.mxu0 0.0
    %1577 = vmatprep.subr.mxu0 0.0
    %1578 = vmatpush1.msra.mxu0 0.0
    %1579 = vmatprep.subr.mxu0 0.0
    %1580 = vmatpush1.msra.mxu0 0.0
    %1581 = vmatprep.mubr.f32.mxu0 0.0
    %1582 = vmatmul.mubr.f32.gmra.mrb[0].mxu0 %v1435
    %v1583 = vpop.f32.mrb[0].mxu0
    %v1584 = vadd.f32 0.0, %v1583
    %v1585 = vpop.f32.mrb[0].mxu0
    %1586 = vdwg.mxu0
    %v1588 = vrot.slane %v1584, 4
    %1589 = vrot.lane.b32.xlu0 %v1588, 32
    %v1590 = vpop.permute.xlu0 %1589
    %v1592 = vadd.f32 %v308, %v1590
    %v1593 = vxor.u32 %v1592, 2147483648
    %v1594 = vmul.f32 %v1593, 1.442695
    %v1595 = vpow.pop %v1594
    %v1596 = vadd.f32 %v1595, 1.0
    %v1597 = vrcp.pop %v1596
    %v1598 = vmul.f32 1.0, %v1597
    %1599 = vmatprep.subr.mxu0 0.0
    %1600 = vmatpush1.msra.mxu0 %v326
    %1601 = vmatprep.subr.mxu0 0.0
    %1602 = vmatpush1.msra.mxu0 %v327
    %1603 = vmatprep.subr.mxu0 0.0
    %1604 = vmatpush1.msra.mxu0 %v328
    %1605 = vmatprep.subr.mxu0 0.0
    %1606 = vmatpush1.msra.mxu0 %v329
    %1607 = vmatprep.subr.mxu0 0.0
    %1608 = vmatpush1.msra.mxu0 0.0
    %1609 = vmatprep.subr.mxu0 0.0
    %1610 = vmatpush1.msra.mxu0 0.0
    %1611 = vmatprep.subr.mxu0 0.0
    %1612 = vmatpush1.msra.mxu0 0.0
    %1613 = vmatprep.subr.mxu0 0.0
    %1614 = vmatpush1.msra.mxu0 0.0
    %1615 = vmatprep.subr.mxu0 0.0
    %1616 = vmatpush1.msra.mxu0 0.0
    %1617 = vmatprep.subr.mxu0 0.0
    %1618 = vmatpush1.msra.mxu0 0.0
    %1619 = vmatprep.subr.mxu0 0.0
    %1620 = vmatpush1.msra.mxu0 0.0
    %1621 = vmatprep.subr.mxu0 0.0
    %1622 = vmatpush1.msra.mxu0 0.0
    %1623 = vmatprep.subr.mxu0 0.0
    %1624 = vmatpush1.msra.mxu0 0.0
    %1625 = vmatprep.subr.mxu0 0.0
    %1626 = vmatpush1.msra.mxu0 0.0
    %1627 = vmatprep.subr.mxu0 0.0
    %1628 = vmatpush1.msra.mxu0 0.0
    %1629 = vmatprep.subr.mxu0 0.0
    %1630 = vmatpush1.msra.mxu0 0.0
    %1631 = vmatprep.subr.mxu0 0.0
    %1632 = vmatpush1.msra.mxu0 0.0
    %1633 = vmatprep.subr.mxu0 0.0
    %1634 = vmatpush1.msra.mxu0 0.0
    %1635 = vmatprep.subr.mxu0 0.0
    %1636 = vmatpush1.msra.mxu0 0.0
    %1637 = vmatprep.subr.mxu0 0.0
    %1638 = vmatpush1.msra.mxu0 0.0
    %1639 = vmatprep.subr.mxu0 0.0
    %1640 = vmatpush1.msra.mxu0 0.0
    %1641 = vmatprep.subr.mxu0 0.0
    %1642 = vmatpush1.msra.mxu0 0.0
    %1643 = vmatprep.subr.mxu0 0.0
    %1644 = vmatpush1.msra.mxu0 0.0
    %1645 = vmatprep.subr.mxu0 0.0
    %1646 = vmatpush1.msra.mxu0 0.0
    %1647 = vmatprep.subr.mxu0 0.0
    %1648 = vmatpush1.msra.mxu0 0.0
    %1649 = vmatprep.subr.mxu0 0.0
    %1650 = vmatpush1.msra.mxu0 0.0
    %1651 = vmatprep.subr.mxu0 0.0
    %1652 = vmatpush1.msra.mxu0 0.0
    %1653 = vmatprep.subr.mxu0 0.0
    %1654 = vmatpush1.msra.mxu0 0.0
    %1655 = vmatprep.subr.mxu0 0.0
    %1656 = vmatpush1.msra.mxu0 0.0
    %1657 = vmatprep.subr.mxu0 0.0
    %1658 = vmatpush1.msra.mxu0 0.0
    %1659 = vmatprep.subr.mxu0 0.0
    %1660 = vmatpush1.msra.mxu0 0.0
    %1661 = vmatprep.subr.mxu0 0.0
    %1662 = vmatpush1.msra.mxu0 0.0
    %1663 = vmatprep.mubr.f32.mxu0 0.0
    %1664 = vmatmul.mubr.f32.gmra.mrb[0].mxu0 %v1435
    %v1665 = vpop.f32.mrb[0].mxu0
    %v1666 = vadd.f32 %v347, %v1665
    %v1667 = vpop.f32.mrb[0].mxu0
    %1668 = vdwg.mxu0
    %v1670 = vrot.slane %v1666, 4
    %v1672 = vmul.f32 %v1516, %v1670
    %1674 = vrot.lane.b32.xlu0 %v1672, 64
    %v1675 = vpop.permute.xlu0 %1674
    %v1677 = vadd.f32 %v308, %v1675
    %v1678 = vtanh.pop %v1677
    %v1679 = vsub.f32 1.0, %v1598
    %1681 = vrot.lane.b32.xlu0 %v1678, 96
    %v1682 = vpop.permute.xlu0 %1681
    %v1684 = vmul.f32 %v1679, %v1682
    %v1685 = vrot.slane %v1134, 6
    %v1687 = vmul.f32 %v1598, %v1685
    %v1688 = vadd.f32 %v1684, %v1687
    %v1690 = vrot.slane %v1390, 4
    %v1691 = vsel %vm234, %v1690, 0
    %1693 = vmatprep.subr.mxu0 0.0
    %1694 = vmatpush1.msra.mxu0 %v330
    %1695 = vmatprep.subr.mxu0 0.0
    %1696 = vmatpush1.msra.mxu0 %v331
    %1697 = vmatprep.subr.mxu0 0.0
    %1698 = vmatpush1.msra.mxu0 %v332
    %1699 = vmatprep.subr.mxu0 0.0
    %1700 = vmatpush1.msra.mxu0 %v333
    %1701 = vmatprep.subr.mxu0 0.0
    %1702 = vmatpush1.msra.mxu0 0.0
    %1703 = vmatprep.subr.mxu0 0.0
    %1704 = vmatpush1.msra.mxu0 0.0
    %1705 = vmatprep.subr.mxu0 0.0
    %1706 = vmatpush1.msra.mxu0 0.0
    %1707 = vmatprep.subr.mxu0 0.0
    %1708 = vmatpush1.msra.mxu0 0.0
    %1709 = vmatprep.subr.mxu0 0.0
    %1710 = vmatpush1.msra.mxu0 0.0
    %1711 = vmatprep.subr.mxu0 0.0
    %1712 = vmatpush1.msra.mxu0 0.0
    %1713 = vmatprep.subr.mxu0 0.0
    %1714 = vmatpush1.msra.mxu0 0.0
    %1715 = vmatprep.subr.mxu0 0.0
    %1716 = vmatpush1.msra.mxu0 0.0
    %1717 = vmatprep.subr.mxu0 0.0
    %1718 = vmatpush1.msra.mxu0 0.0
    %1719 = vmatprep.subr.mxu0 0.0
    %1720 = vmatpush1.msra.mxu0 0.0
    %1721 = vmatprep.subr.mxu0 0.0
    %1722 = vmatpush1.msra.mxu0 0.0
    %1723 = vmatprep.subr.mxu0 0.0
    %1724 = vmatpush1.msra.mxu0 0.0
    %1725 = vmatprep.subr.mxu0 0.0
    %1726 = vmatpush1.msra.mxu0 0.0
    %1727 = vmatprep.subr.mxu0 0.0
    %1728 = vmatpush1.msra.mxu0 0.0
    %1729 = vmatprep.subr.mxu0 0.0
    %1730 = vmatpush1.msra.mxu0 0.0
    %1731 = vmatprep.subr.mxu0 0.0
    %1732 = vmatpush1.msra.mxu0 0.0
    %1733 = vmatprep.subr.mxu0 0.0
    %1734 = vmatpush1.msra.mxu0 0.0
    %1735 = vmatprep.subr.mxu0 0.0
    %1736 = vmatpush1.msra.mxu0 0.0
    %1737 = vmatprep.subr.mxu0 0.0
    %1738 = vmatpush1.msra.mxu0 0.0
    %1739 = vmatprep.subr.mxu0 0.0
    %1740 = vmatpush1.msra.mxu0 0.0
    %1741 = vmatprep.subr.mxu0 0.0
    %1742 = vmatpush1.msra.mxu0 0.0
    %1743 = vmatprep.subr.mxu0 0.0
    %1744 = vmatpush1.msra.mxu0 0.0
    %1745 = vmatprep.subr.mxu0 0.0
    %1746 = vmatpush1.msra.mxu0 0.0
    %1747 = vmatprep.subr.mxu0 0.0
    %1748 = vmatpush1.msra.mxu0 0.0
    %1749 = vmatprep.subr.mxu0 0.0
    %1750 = vmatpush1.msra.mxu0 0.0
    %1751 = vmatprep.subr.mxu0 0.0
    %1752 = vmatpush1.msra.mxu0 0.0
    %1753 = vmatprep.subr.mxu0 0.0
    %1754 = vmatpush1.msra.mxu0 0.0
    %1755 = vmatprep.subr.mxu0 0.0
    %1756 = vmatpush1.msra.mxu0 0.0
    %1757 = vmatprep.mubr.f32.mxu0 0.0
    %1758 = vmatmul.mubr.f32.gmra.mrb[0].mxu0 %v1691
    %v1759 = vpop.f32.mrb[0].mxu0
    %v1760 = vadd.f32 0.0, %v1759
    %v1761 = vpop.f32.mrb[0].mxu0
    %1762 = vdwg.mxu0
    %v1764 = vrot.slane %v1760, 6
    %1765 = vrot.lane.b32.xlu0 %v1764, 96
    %v1766 = vpop.permute.xlu0 %1765
    %v1768 = vadd.f32 %v314, %v1766
    %v1769 = vxor.u32 %v1768, 2147483648
    %v1770 = vmul.f32 %v1769, 1.442695
    %v1771 = vpow.pop %v1770
    %v1772 = vadd.f32 %v1771, 1.0
    %v1773 = vrcp.pop %v1772
    %v1774 = vmul.f32 1.0, %v1773
    %1775 = vmatprep.subr.mxu0 0.0
    %1776 = vmatpush1.msra.mxu0 %v334
    %1777 = vmatprep.subr.mxu0 0.0
    %1778 = vmatpush1.msra.mxu0 %v335
    %1779 = vmatprep.subr.mxu0 0.0
    %1780 = vmatpush1.msra.mxu0 %v336
    %1781 = vmatprep.subr.mxu0 0.0
    %1782 = vmatpush1.msra.mxu0 %v337
    %1783 = vmatprep.subr.mxu0 0.0
    %1784 = vmatpush1.msra.mxu0 0.0
    %1785 = vmatprep.subr.mxu0 0.0
    %1786 = vmatpush1.msra.mxu0 0.0
    %1787 = vmatprep.subr.mxu0 0.0
    %1788 = vmatpush1.msra.mxu0 0.0
    %1789 = vmatprep.subr.mxu0 0.0
    %1790 = vmatpush1.msra.mxu0 0.0
    %1791 = vmatprep.subr.mxu0 0.0
    %1792 = vmatpush1.msra.mxu0 0.0
    %1793 = vmatprep.subr.mxu0 0.0
    %1794 = vmatpush1.msra.mxu0 0.0
    %1795 = vmatprep.subr.mxu0 0.0
    %1796 = vmatpush1.msra.mxu0 0.0
    %1797 = vmatprep.subr.mxu0 0.0
    %1798 = vmatpush1.msra.mxu0 0.0
    %1799 = vmatprep.subr.mxu0 0.0
    %1800 = vmatpush1.msra.mxu0 0.0
    %1801 = vmatprep.subr.mxu0 0.0
    %1802 = vmatpush1.msra.mxu0 0.0
    %1803 = vmatprep.subr.mxu0 0.0
    %1804 = vmatpush1.msra.mxu0 0.0
    %1805 = vmatprep.subr.mxu0 0.0
    %1806 = vmatpush1.msra.mxu0 0.0
    %1807 = vmatprep.subr.mxu0 0.0
    %1808 = vmatpush1.msra.mxu0 0.0
    %1809 = vmatprep.subr.mxu0 0.0
    %1810 = vmatpush1.msra.mxu0 0.0
    %1811 = vmatprep.subr.mxu0 0.0
    %1812 = vmatpush1.msra.mxu0 0.0
    %1813 = vmatprep.subr.mxu0 0.0
    %1814 = vmatpush1.msra.mxu0 0.0
    %1815 = vmatprep.subr.mxu0 0.0
    %1816 = vmatpush1.msra.mxu0 0.0
    %1817 = vmatprep.subr.mxu0 0.0
    %1818 = vmatpush1.msra.mxu0 0.0
    %1819 = vmatprep.subr.mxu0 0.0
    %1820 = vmatpush1.msra.mxu0 0.0
    %1821 = vmatprep.subr.mxu0 0.0
    %1822 = vmatpush1.msra.mxu0 0.0
    %1823 = vmatprep.subr.mxu0 0.0
    %1824 = vmatpush1.msra.mxu0 0.0
    %1825 = vmatprep.subr.mxu0 0.0
    %1826 = vmatpush1.msra.mxu0 0.0
    %1827 = vmatprep.subr.mxu0 0.0
    %1828 = vmatpush1.msra.mxu0 0.0
    %1829 = vmatprep.subr.mxu0 0.0
    %1830 = vmatpush1.msra.mxu0 0.0
    %1831 = vmatprep.subr.mxu0 0.0
    %1832 = vmatpush1.msra.mxu0 0.0
    %1833 = vmatprep.subr.mxu0 0.0
    %1834 = vmatpush1.msra.mxu0 0.0
    %1835 = vmatprep.subr.mxu0 0.0
    %1836 = vmatpush1.msra.mxu0 0.0
    %1837 = vmatprep.subr.mxu0 0.0
    %1838 = vmatpush1.msra.mxu0 0.0
    %1839 = vmatprep.mubr.f32.mxu0 0.0
    %1840 = vmatmul.mubr.f32.gmra.mrb[0].mxu0 %v1691
    %v1841 = vpop.f32.mrb[0].mxu0
    %v1842 = vadd.f32 0.0, %v1841
    %v1843 = vpop.f32.mrb[0].mxu0
    %1844 = vdwg.mxu0
    %v1846 = vrot.slane %v1842, 6
    %v1848 = vadd.f32 %v316, %v1846
    %v1849 = vxor.u32 %v1848, 2147483648
    %v1850 = vmul.f32 %v1849, 1.442695
    %v1851 = vpow.pop %v1850
    %v1852 = vadd.f32 %v1851, 1.0
    %v1853 = vrcp.pop %v1852
    %v1854 = vmul.f32 1.0, %v1853
    %1855 = vmatprep.subr.mxu0 0.0
    %1856 = vmatpush1.msra.mxu0 %v338
    %1857 = vmatprep.subr.mxu0 0.0
    %1858 = vmatpush1.msra.mxu0 %v339
    %1859 = vmatprep.subr.mxu0 0.0
    %1860 = vmatpush1.msra.mxu0 %v340
    %1861 = vmatprep.subr.mxu0 0.0
    %1862 = vmatpush1.msra.mxu0 %v341
    %1863 = vmatprep.subr.mxu0 0.0
    %1864 = vmatpush1.msra.mxu0 0.0
    %1865 = vmatprep.subr.mxu0 0.0
    %1866 = vmatpush1.msra.mxu0 0.0
    %1867 = vmatprep.subr.mxu0 0.0
    %1868 = vmatpush1.msra.mxu0 0.0
    %1869 = vmatprep.subr.mxu0 0.0
    %1870 = vmatpush1.msra.mxu0 0.0
    %1871 = vmatprep.subr.mxu0 0.0
    %1872 = vmatpush1.msra.mxu0 0.0
    %1873 = vmatprep.subr.mxu0 0.0
    %1874 = vmatpush1.msra.mxu0 0.0
    %1875 = vmatprep.subr.mxu0 0.0
    %1876 = vmatpush1.msra.mxu0 0.0
    %1877 = vmatprep.subr.mxu0 0.0
    %1878 = vmatpush1.msra.mxu0 0.0
    %1879 = vmatprep.subr.mxu0 0.0
    %1880 = vmatpush1.msra.mxu0 0.0
    %1881 = vmatprep.subr.mxu0 0.0
    %1882 = vmatpush1.msra.mxu0 0.0
    %1883 = vmatprep.subr.mxu0 0.0
    %1884 = vmatpush1.msra.mxu0 0.0
    %1885 = vmatprep.subr.mxu0 0.0
    %1886 = vmatpush1.msra.mxu0 0.0
    %1887 = vmatprep.subr.mxu0 0.0
    %1888 = vmatpush1.msra.mxu0 0.0
    %1889 = vmatprep.subr.mxu0 0.0
    %1890 = vmatpush1.msra.mxu0 0.0
    %1891 = vmatprep.subr.mxu0 0.0
    %1892 = vmatpush1.msra.mxu0 0.0
    %1893 = vmatprep.subr.mxu0 0.0
    %1894 = vmatpush1.msra.mxu0 0.0
    %1895 = vmatprep.subr.mxu0 0.0
    %1896 = vmatpush1.msra.mxu0 0.0
    %1897 = vmatprep.subr.mxu0 0.0
    %1898 = vmatpush1.msra.mxu0 0.0
    %1899 = vmatprep.subr.mxu0 0.0
    %1900 = vmatpush1.msra.mxu0 0.0
    %1901 = vmatprep.subr.mxu0 0.0
    %1902 = vmatpush1.msra.mxu0 0.0
    %1903 = vmatprep.subr.mxu0 0.0
    %1904 = vmatpush1.msra.mxu0 0.0
    %1905 = vmatprep.subr.mxu0 0.0
    %1906 = vmatpush1.msra.mxu0 0.0
    %1907 = vmatprep.subr.mxu0 0.0
    %1908 = vmatpush1.msra.mxu0 0.0
    %1909 = vmatprep.subr.mxu0 0.0
    %1910 = vmatpush1.msra.mxu0 0.0
    %1911 = vmatprep.subr.mxu0 0.0
    %1912 = vmatpush1.msra.mxu0 0.0
    %1913 = vmatprep.subr.mxu0 0.0
    %1914 = vmatpush1.msra.mxu0 0.0
    %1915 = vmatprep.subr.mxu0 0.0
    %1916 = vmatpush1.msra.mxu0 0.0
    %1917 = vmatprep.subr.mxu0 0.0
    %1918 = vmatpush1.msra.mxu0 0.0
    %1919 = vmatprep.mubr.f32.mxu0 0.0
    %1920 = vmatmul.mubr.f32.gmra.mrb[0].mxu0 %v1691
    %v1921 = vpop.f32.mrb[0].mxu0
    %v1922 = vadd.f32 %v354, %v1921
    %v1923 = vpop.f32.mrb[0].mxu0
    %1924 = vdwg.mxu0
    %v1926 = vrot.slane %v1922, 6
    %1927 = vrot.lane.b32.xlu0 %v1926, 96
    %v1928 = vpop.permute.xlu0 %1927
    %v1930 = vmul.f32 %v1774, %v1928
    %1932 = vrot.lane.b32.xlu0 %v1930, 64
    %v1933 = vpop.permute.xlu0 %1932
    %v1935 = vadd.f32 %v316, %v1933
    %v1936 = vtanh.pop %v1935
    %v1937 = vsub.f32 1.0, %v1854
    %1939 = vrot.lane.b32.xlu0 %v1936, 96
    %v1940 = vpop.permute.xlu0 %1939
    %v1942 = vmul.f32 %v1937, %v1940
    %v1943 = vrot.slane %v1390, 2
    %v1945 = vmul.f32 %v1854, %v1943
    %v1946 = vadd.f32 %v1942, %v1945
    %vm1947 = vcmp.eq.s32.totalorder %v356, 3
    %v1948 = vsel %vm1947, 1, 0
    %v1949 = vcvt.s32.f32 %v1948
    %vm1950 = vcmp.eq.s32.totalorder %v356, 6
    %v1951 = vsel %vm1950, 1, 0
    %v1952 = vcvt.s32.f32 %v1951
    %v1954 = vrot.slane %v1416, 4
    %v1956 = vsub.f32 %v1688, %v1954
    %1958 = vset.pattern.permute.xlu0 0
    %1959 = vperm.xlu0 %1958, %v1949
    %v1960 = vpop.permute.xlu0 %1959
    %v1963 = vrot.slane %v1956, 4
    %1964 = vrot.lane.b32.xlu0 %v1963, 96
    %v1965 = vpop.permute.xlu0 %1964
    %v1967 = vmul.f32 %v1960, %v1965
    %1969 = vrot.lane.b32.xlu0 %v1967, 32
    %v1970 = vpop.permute.xlu0 %1969
    %v1972 = vadd.f32 %v1416, %v1970
    %v1974 = vrot.slane %v1430, 6
    %v1976 = vsub.f32 %v1946, %v1974
    %1978 = vset.pattern.permute.xlu0 0
    %1979 = vperm.xlu0 %1978, %v1952
    %v1980 = vpop.permute.xlu0 %1979
    %v1983 = vrot.slane %v1976, 2
    %v1985 = vmul.f32 %v1980, %v1983
    %v1986 = vadd.f32 %v1430, %v1985
    %v1988 = vrot.slane %v1688, 4
    %1989 = vrot.lane.b32.xlu0 %v1988, 96
    %v1990 = vpop.permute.xlu0 %1989
    %v1991 = vsel %vm234, %v1990, 0
    %1993 = vmatprep.subr.mxu0 0.0
    %1994 = vmatpush1.msra.mxu0 %v318
    %1995 = vmatprep.subr.mxu0 0.0
    %1996 = vmatpush1.msra.mxu0 %v319
    %1997 = vmatprep.subr.mxu0 0.0
    %1998 = vmatpush1.msra.mxu0 %v320
    %1999 = vmatprep.subr.mxu0 0.0
    %2000 = vmatpush1.msra.mxu0 %v321
    %2001 = vmatprep.subr.mxu0 0.0
    %2002 = vmatpush1.msra.mxu0 0.0
    %2003 = vmatprep.subr.mxu0 0.0
    %2004 = vmatpush1.msra.mxu0 0.0
    %2005 = vmatprep.subr.mxu0 0.0
    %2006 = vmatpush1.msra.mxu0 0.0
    %2007 = vmatprep.subr.mxu0 0.0
    %2008 = vmatpush1.msra.mxu0 0.0
    %2009 = vmatprep.subr.mxu0 0.0
    %2010 = vmatpush1.msra.mxu0 0.0
    %2011 = vmatprep.subr.mxu0 0.0
    %2012 = vmatpush1.msra.mxu0 0.0
    %2013 = vmatprep.subr.mxu0 0.0
    %2014 = vmatpush1.msra.mxu0 0.0
    %2015 = vmatprep.subr.mxu0 0.0
    %2016 = vmatpush1.msra.mxu0 0.0
    %2017 = vmatprep.subr.mxu0 0.0
    %2018 = vmatpush1.msra.mxu0 0.0
    %2019 = vmatprep.subr.mxu0 0.0
    %2020 = vmatpush1.msra.mxu0 0.0
    %2021 = vmatprep.subr.mxu0 0.0
    %2022 = vmatpush1.msra.mxu0 0.0
    %2023 = vmatprep.subr.mxu0 0.0
    %2024 = vmatpush1.msra.mxu0 0.0
    %2025 = vmatprep.subr.mxu0 0.0
    %2026 = vmatpush1.msra.mxu0 0.0
    %2027 = vmatprep.subr.mxu0 0.0
    %2028 = vmatpush1.msra.mxu0 0.0
    %2029 = vmatprep.subr.mxu0 0.0
    %2030 = vmatpush1.msra.mxu0 0.0
    %2031 = vmatprep.subr.mxu0 0.0
    %2032 = vmatpush1.msra.mxu0 0.0
    %2033 = vmatprep.subr.mxu0 0.0
    %2034 = vmatpush1.msra.mxu0 0.0
    %2035 = vmatprep.subr.mxu0 0.0
    %2036 = vmatpush1.msra.mxu0 0.0
    %2037 = vmatprep.subr.mxu0 0.0
    %2038 = vmatpush1.msra.mxu0 0.0
    %2039 = vmatprep.subr.mxu0 0.0
    %2040 = vmatpush1.msra.mxu0 0.0
    %2041 = vmatprep.subr.mxu0 0.0
    %2042 = vmatpush1.msra.mxu0 0.0
    %2043 = vmatprep.subr.mxu0 0.0
    %2044 = vmatpush1.msra.mxu0 0.0
    %2045 = vmatprep.subr.mxu0 0.0
    %2046 = vmatpush1.msra.mxu0 0.0
    %2047 = vmatprep.subr.mxu0 0.0
    %2048 = vmatpush1.msra.mxu0 0.0
    %2049 = vmatprep.subr.mxu0 0.0
    %2050 = vmatpush1.msra.mxu0 0.0
    %2051 = vmatprep.subr.mxu0 0.0
    %2052 = vmatpush1.msra.mxu0 0.0
    %2053 = vmatprep.subr.mxu0 0.0
    %2054 = vmatpush1.msra.mxu0 0.0
    %2055 = vmatprep.subr.mxu0 0.0
    %2056 = vmatpush1.msra.mxu0 0.0
    %2057 = vmatprep.mubr.f32.mxu0 0.0
    %2058 = vmatmul.mubr.f32.gmra.mrb[0].mxu0 %v1991
    %v2059 = vpop.f32.mrb[0].mxu0
    %v2060 = vadd.f32 0.0, %v2059
    %v2061 = vpop.f32.mrb[0].mxu0
    %2062 = vdwg.mxu0
    %v2064 = vrot.slane %v2060, 2
    %v2066 = vadd.f32 %v308, %v2064
    %v2067 = vxor.u32 %v2066, 2147483648
    %v2068 = vmul.f32 %v2067, 1.442695
    %v2069 = vpow.pop %v2068
    %v2070 = vadd.f32 %v2069, 1.0
    %v2071 = vrcp.pop %v2070
    %v2072 = vmul.f32 1.0, %v2071
    %2073 = vmatprep.subr.mxu0 0.0
    %2074 = vmatpush1.msra.mxu0 %v322
    %2075 = vmatprep.subr.mxu0 0.0
    %2076 = vmatpush1.msra.mxu0 %v323
    %2077 = vmatprep.subr.mxu0 0.0
    %2078 = vmatpush1.msra.mxu0 %v324
    %2079 = vmatprep.subr.mxu0 0.0
    %2080 = vmatpush1.msra.mxu0 %v325
    %2081 = vmatprep.subr.mxu0 0.0
    %2082 = vmatpush1.msra.mxu0 0.0
    %2083 = vmatprep.subr.mxu0 0.0
    %2084 = vmatpush1.msra.mxu0 0.0
    %2085 = vmatprep.subr.mxu0 0.0
    %2086 = vmatpush1.msra.mxu0 0.0
    %2087 = vmatprep.subr.mxu0 0.0
    %2088 = vmatpush1.msra.mxu0 0.0
    %2089 = vmatprep.subr.mxu0 0.0
    %2090 = vmatpush1.msra.mxu0 0.0
    %2091 = vmatprep.subr.mxu0 0.0
    %2092 = vmatpush1.msra.mxu0 0.0
    %2093 = vmatprep.subr.mxu0 0.0
    %2094 = vmatpush1.msra.mxu0 0.0
    %2095 = vmatprep.subr.mxu0 0.0
    %2096 = vmatpush1.msra.mxu0 0.0
    %2097 = vmatprep.subr.mxu0 0.0
    %2098 = vmatpush1.msra.mxu0 0.0
    %2099 = vmatprep.subr.mxu0 0.0
    %2100 = vmatpush1.msra.mxu0 0.0
    %2101 = vmatprep.subr.mxu0 0.0
    %2102 = vmatpush1.msra.mxu0 0.0
    %2103 = vmatprep.subr.mxu0 0.0
    %2104 = vmatpush1.msra.mxu0 0.0
    %2105 = vmatprep.subr.mxu0 0.0
    %2106 = vmatpush1.msra.mxu0 0.0
    %2107 = vmatprep.subr.mxu0 0.0
    %2108 = vmatpush1.msra.mxu0 0.0
    %2109 = vmatprep.subr.mxu0 0.0
    %2110 = vmatpush1.msra.mxu0 0.0
    %2111 = vmatprep.subr.mxu0 0.0
    %2112 = vmatpush1.msra.mxu0 0.0
    %2113 = vmatprep.subr.mxu0 0.0
    %2114 = vmatpush1.msra.mxu0 0.0
    %2115 = vmatprep.subr.mxu0 0.0
    %2116 = vmatpush1.msra.mxu0 0.0
    %2117 = vmatprep.subr.mxu0 0.0
    %2118 = vmatpush1.msra.mxu0 0.0
    %2119 = vmatprep.subr.mxu0 0.0
    %2120 = vmatpush1.msra.mxu0 0.0
    %2121 = vmatprep.subr.mxu0 0.0
    %2122 = vmatpush1.msra.mxu0 0.0
    %2123 = vmatprep.subr.mxu0 0.0
    %2124 = vmatpush1.msra.mxu0 0.0
    %2125 = vmatprep.subr.mxu0 0.0
    %2126 = vmatpush1.msra.mxu0 0.0
    %2127 = vmatprep.subr.mxu0 0.0
    %2128 = vmatpush1.msra.mxu0 0.0
    %2129 = vmatprep.subr.mxu0 0.0
    %2130 = vmatpush1.msra.mxu0 0.0
    %2131 = vmatprep.subr.mxu0 0.0
    %2132 = vmatpush1.msra.mxu0 0.0
    %2133 = vmatprep.subr.mxu0 0.0
    %2134 = vmatpush1.msra.mxu0 0.0
    %2135 = vmatprep.subr.mxu0 0.0
    %2136 = vmatpush1.msra.mxu0 0.0
    %2137 = vmatprep.mubr.f32.mxu0 0.0
    %2138 = vmatmul.mubr.f32.gmra.mrb[0].mxu0 %v1991
    %v2139 = vpop.f32.mrb[0].mxu0
    %v2140 = vadd.f32 0.0, %v2139
    %v2141 = vpop.f32.mrb[0].mxu0
    %2142 = vdwg.mxu0
    %v2144 = vrot.slane %v2140, 2
    %2145 = vrot.lane.b32.xlu0 %v2144, 32
    %v2146 = vpop.permute.xlu0 %2145
    %v2148 = vadd.f32 %v308, %v2146
    %v2149 = vxor.u32 %v2148, 2147483648
    %v2150 = vmul.f32 %v2149, 1.442695
    %v2151 = vpow.pop %v2150
    %v2152 = vadd.f32 %v2151, 1.0
    %v2153 = vrcp.pop %v2152
    %v2154 = vmul.f32 1.0, %v2153
    %2155 = vmatprep.subr.mxu0 0.0
    %2156 = vmatpush1.msra.mxu0 %v326
    %2157 = vmatprep.subr.mxu0 0.0
    %2158 = vmatpush1.msra.mxu0 %v327
    %2159 = vmatprep.subr.mxu0 0.0
    %2160 = vmatpush1.msra.mxu0 %v328
    %2161 = vmatprep.subr.mxu0 0.0
    %2162 = vmatpush1.msra.mxu0 %v329
    %2163 = vmatprep.subr.mxu0 0.0
    %2164 = vmatpush1.msra.mxu0 0.0
    %2165 = vmatprep.subr.mxu0 0.0
    %2166 = vmatpush1.msra.mxu0 0.0
    %2167 = vmatprep.subr.mxu0 0.0
    %2168 = vmatpush1.msra.mxu0 0.0
    %2169 = vmatprep.subr.mxu0 0.0
    %2170 = vmatpush1.msra.mxu0 0.0
    %2171 = vmatprep.subr.mxu0 0.0
    %2172 = vmatpush1.msra.mxu0 0.0
    %2173 = vmatprep.subr.mxu0 0.0
    %2174 = vmatpush1.msra.mxu0 0.0
    %2175 = vmatprep.subr.mxu0 0.0
    %2176 = vmatpush1.msra.mxu0 0.0
    %2177 = vmatprep.subr.mxu0 0.0
    %2178 = vmatpush1.msra.mxu0 0.0
    %2179 = vmatprep.subr.mxu0 0.0
    %2180 = vmatpush1.msra.mxu0 0.0
    %2181 = vmatprep.subr.mxu0 0.0
    %2182 = vmatpush1.msra.mxu0 0.0
    %2183 = vmatprep.subr.mxu0 0.0
    %2184 = vmatpush1.msra.mxu0 0.0
    %2185 = vmatprep.subr.mxu0 0.0
    %2186 = vmatpush1.msra.mxu0 0.0
    %2187 = vmatprep.subr.mxu0 0.0
    %2188 = vmatpush1.msra.mxu0 0.0
    %2189 = vmatprep.subr.mxu0 0.0
    %2190 = vmatpush1.msra.mxu0 0.0
    %2191 = vmatprep.subr.mxu0 0.0
    %2192 = vmatpush1.msra.mxu0 0.0
    %2193 = vmatprep.subr.mxu0 0.0
    %2194 = vmatpush1.msra.mxu0 0.0
    %2195 = vmatprep.subr.mxu0 0.0
    %2196 = vmatpush1.msra.mxu0 0.0
    %2197 = vmatprep.subr.mxu0 0.0
    %2198 = vmatpush1.msra.mxu0 0.0
    %2199 = vmatprep.subr.mxu0 0.0
    %2200 = vmatpush1.msra.mxu0 0.0
    %2201 = vmatprep.subr.mxu0 0.0
    %2202 = vmatpush1.msra.mxu0 0.0
    %2203 = vmatprep.subr.mxu0 0.0
    %2204 = vmatpush1.msra.mxu0 0.0
    %2205 = vmatprep.subr.mxu0 0.0
    %2206 = vmatpush1.msra.mxu0 0.0
    %2207 = vmatprep.subr.mxu0 0.0
    %2208 = vmatpush1.msra.mxu0 0.0
    %2209 = vmatprep.subr.mxu0 0.0
    %2210 = vmatpush1.msra.mxu0 0.0
    %2211 = vmatprep.subr.mxu0 0.0
    %2212 = vmatpush1.msra.mxu0 0.0
    %2213 = vmatprep.subr.mxu0 0.0
    %2214 = vmatpush1.msra.mxu0 0.0
    %2215 = vmatprep.subr.mxu0 0.0
    %2216 = vmatpush1.msra.mxu0 0.0
    %2217 = vmatprep.subr.mxu0 0.0
    %2218 = vmatpush1.msra.mxu0 0.0
    %2219 = vmatprep.mubr.f32.mxu0 0.0
    %2220 = vmatmul.mubr.f32.gmra.mrb[0].mxu0 %v1991
    %v2221 = vpop.f32.mrb[0].mxu0
    %v2222 = vadd.f32 %v347, %v2221
    %v2223 = vpop.f32.mrb[0].mxu0
    %2224 = vdwg.mxu0
    %v2226 = vrot.slane %v2222, 2
    %v2228 = vmul.f32 %v2072, %v2226
    %2230 = vrot.lane.b32.xlu0 %v2228, 64
    %v2231 = vpop.permute.xlu0 %2230
    %v2233 = vadd.f32 %v308, %v2231
    %v2234 = vtanh.pop %v2233
    %v2235 = vsub.f32 1.0, %v2154
    %2237 = vrot.lane.b32.xlu0 %v2234, 96
    %v2238 = vpop.permute.xlu0 %2237
    %v2240 = vmul.f32 %v2235, %v2238
    %v2241 = vrot.slane %v1688, 6
    %v2243 = vmul.f32 %v2154, %v2241
    %v2244 = vadd.f32 %v2240, %v2243
    %v2246 = vrot.slane %v1946, 2
    %v2247 = vsel %vm234, %v2246, 0
    %2249 = vmatprep.subr.mxu0 0.0
    %2250 = vmatpush1.msra.mxu0 %v330
    %2251 = vmatprep.subr.mxu0 0.0
    %2252 = vmatpush1.msra.mxu0 %v331
    %2253 = vmatprep.subr.mxu0 0.0
    %2254 = vmatpush1.msra.mxu0 %v332
    %2255 = vmatprep.subr.mxu0 0.0
    %2256 = vmatpush1.msra.mxu0 %v333
    %2257 = vmatprep.subr.mxu0 0.0
    %2258 = vmatpush1.msra.mxu0 0.0
    %2259 = vmatprep.subr.mxu0 0.0
    %2260 = vmatpush1.msra.mxu0 0.0
    %2261 = vmatprep.subr.mxu0 0.0
    %2262 = vmatpush1.msra.mxu0 0.0
    %2263 = vmatprep.subr.mxu0 0.0
    %2264 = vmatpush1.msra.mxu0 0.0
    %2265 = vmatprep.subr.mxu0 0.0
    %2266 = vmatpush1.msra.mxu0 0.0
    %2267 = vmatprep.subr.mxu0 0.0
    %2268 = vmatpush1.msra.mxu0 0.0
    %2269 = vmatprep.subr.mxu0 0.0
    %2270 = vmatpush1.msra.mxu0 0.0
    %2271 = vmatprep.subr.mxu0 0.0
    %2272 = vmatpush1.msra.mxu0 0.0
    %2273 = vmatprep.subr.mxu0 0.0
    %2274 = vmatpush1.msra.mxu0 0.0
    %2275 = vmatprep.subr.mxu0 0.0
    %2276 = vmatpush1.msra.mxu0 0.0
    %2277 = vmatprep.subr.mxu0 0.0
    %2278 = vmatpush1.msra.mxu0 0.0
    %2279 = vmatprep.subr.mxu0 0.0
    %2280 = vmatpush1.msra.mxu0 0.0
    %2281 = vmatprep.subr.mxu0 0.0
    %2282 = vmatpush1.msra.mxu0 0.0
    %2283 = vmatprep.subr.mxu0 0.0
    %2284 = vmatpush1.msra.mxu0 0.0
    %2285 = vmatprep.subr.mxu0 0.0
    %2286 = vmatpush1.msra.mxu0 0.0
    %2287 = vmatprep.subr.mxu0 0.0
    %2288 = vmatpush1.msra.mxu0 0.0
    %2289 = vmatprep.subr.mxu0 0.0
    %2290 = vmatpush1.msra.mxu0 0.0
    %2291 = vmatprep.subr.mxu0 0.0
    %2292 = vmatpush1.msra.mxu0 0.0
    %2293 = vmatprep.subr.mxu0 0.0
    %2294 = vmatpush1.msra.mxu0 0.0
    %2295 = vmatprep.subr.mxu0 0.0
    %2296 = vmatpush1.msra.mxu0 0.0
    %2297 = vmatprep.subr.mxu0 0.0
    %2298 = vmatpush1.msra.mxu0 0.0
    %2299 = vmatprep.subr.mxu0 0.0
    %2300 = vmatpush1.msra.mxu0 0.0
    %2301 = vmatprep.subr.mxu0 0.0
    %2302 = vmatpush1.msra.mxu0 0.0
    %2303 = vmatprep.subr.mxu0 0.0
    %2304 = vmatpush1.msra.mxu0 0.0
    %2305 = vmatprep.subr.mxu0 0.0
    %2306 = vmatpush1.msra.mxu0 0.0
    %2307 = vmatprep.subr.mxu0 0.0
    %2308 = vmatpush1.msra.mxu0 0.0
    %2309 = vmatprep.subr.mxu0 0.0
    %2310 = vmatpush1.msra.mxu0 0.0
    %2311 = vmatprep.subr.mxu0 0.0
    %2312 = vmatpush1.msra.mxu0 0.0
    %2313 = vmatprep.mubr.f32.mxu0 0.0
    %2314 = vmatmul.mubr.f32.gmra.mrb[0].mxu0 %v2247
    %v2315 = vpop.f32.mrb[0].mxu0
    %v2316 = vadd.f32 0.0, %v2315
    %v2317 = vpop.f32.mrb[0].mxu0
    %2318 = vdwg.mxu0
    %2320 = vrot.lane.b32.xlu0 %v2316, 96
    %v2321 = vpop.permute.xlu0 %2320
    %v2323 = vadd.f32 %v314, %v2321
    %v2324 = vxor.u32 %v2323, 2147483648
    %v2325 = vmul.f32 %v2324, 1.442695
    %v2326 = vpow.pop %v2325
    %v2327 = vadd.f32 %v2326, 1.0
    %v2328 = vrcp.pop %v2327
    %v2329 = vmul.f32 1.0, %v2328
    %2330 = vmatprep.subr.mxu0 0.0
    %2331 = vmatpush1.msra.mxu0 %v334
    %2332 = vmatprep.subr.mxu0 0.0
    %2333 = vmatpush1.msra.mxu0 %v335
    %2334 = vmatprep.subr.mxu0 0.0
    %2335 = vmatpush1.msra.mxu0 %v336
    %2336 = vmatprep.subr.mxu0 0.0
    %2337 = vmatpush1.msra.mxu0 %v337
    %2338 = vmatprep.subr.mxu0 0.0
    %2339 = vmatpush1.msra.mxu0 0.0
    %2340 = vmatprep.subr.mxu0 0.0
    %2341 = vmatpush1.msra.mxu0 0.0
    %2342 = vmatprep.subr.mxu0 0.0
    %2343 = vmatpush1.msra.mxu0 0.0
    %2344 = vmatprep.subr.mxu0 0.0
    %2345 = vmatpush1.msra.mxu0 0.0
    %2346 = vmatprep.subr.mxu0 0.0
    %2347 = vmatpush1.msra.mxu0 0.0
    %2348 = vmatprep.subr.mxu0 0.0
    %2349 = vmatpush1.msra.mxu0 0.0
    %2350 = vmatprep.subr.mxu0 0.0
    %2351 = vmatpush1.msra.mxu0 0.0
    %2352 = vmatprep.subr.mxu0 0.0
    %2353 = vmatpush1.msra.mxu0 0.0
    %2354 = vmatprep.subr.mxu0 0.0
    %2355 = vmatpush1.msra.mxu0 0.0
    %2356 = vmatprep.subr.mxu0 0.0
    %2357 = vmatpush1.msra.mxu0 0.0
    %2358 = vmatprep.subr.mxu0 0.0
    %2359 = vmatpush1.msra.mxu0 0.0
    %2360 = vmatprep.subr.mxu0 0.0
    %2361 = vmatpush1.msra.mxu0 0.0
    %2362 = vmatprep.subr.mxu0 0.0
    %2363 = vmatpush1.msra.mxu0 0.0
    %2364 = vmatprep.subr.mxu0 0.0
    %2365 = vmatpush1.msra.mxu0 0.0
    %2366 = vmatprep.subr.mxu0 0.0
    %2367 = vmatpush1.msra.mxu0 0.0
    %2368 = vmatprep.subr.mxu0 0.0
    %2369 = vmatpush1.msra.mxu0 0.0
    %2370 = vmatprep.subr.mxu0 0.0
    %2371 = vmatpush1.msra.mxu0 0.0
    %2372 = vmatprep.subr.mxu0 0.0
    %2373 = vmatpush1.msra.mxu0 0.0
    %2374 = vmatprep.subr.mxu0 0.0
    %2375 = vmatpush1.msra.mxu0 0.0
    %2376 = vmatprep.subr.mxu0 0.0
    %2377 = vmatpush1.msra.mxu0 0.0
    %2378 = vmatprep.subr.mxu0 0.0
    %2379 = vmatpush1.msra.mxu0 0.0
    %2380 = vmatprep.subr.mxu0 0.0
    %2381 = vmatpush1.msra.mxu0 0.0
    %2382 = vmatprep.subr.mxu0 0.0
    %2383 = vmatpush1.msra.mxu0 0.0
    %2384 = vmatprep.subr.mxu0 0.0
    %2385 = vmatpush1.msra.mxu0 0.0
    %2386 = vmatprep.subr.mxu0 0.0
    %2387 = vmatpush1.msra.mxu0 0.0
    %2388 = vmatprep.subr.mxu0 0.0
    %2389 = vmatpush1.msra.mxu0 0.0
    %2390 = vmatprep.subr.mxu0 0.0
    %2391 = vmatpush1.msra.mxu0 0.0
    %2392 = vmatprep.subr.mxu0 0.0
    %2393 = vmatpush1.msra.mxu0 0.0
    %2394 = vmatprep.mubr.f32.mxu0 0.0
    %2395 = vmatmul.mubr.f32.gmra.mrb[0].mxu0 %v2247
    %v2396 = vpop.f32.mrb[0].mxu0
    %v2397 = vadd.f32 0.0, %v2396
    %v2398 = vpop.f32.mrb[0].mxu0
    %2399 = vdwg.mxu0
    %v2400 = vadd.f32 %v316, %v2397
    %v2401 = vxor.u32 %v2400, 2147483648
    %v2402 = vmul.f32 %v2401, 1.442695
    %v2403 = vpow.pop %v2402
    %v2404 = vadd.f32 %v2403, 1.0
    %v2405 = vrcp.pop %v2404
    %v2406 = vmul.f32 1.0, %v2405
    %2407 = vmatprep.subr.mxu0 0.0
    %2408 = vmatpush1.msra.mxu0 %v338
    %2409 = vmatprep.subr.mxu0 0.0
    %2410 = vmatpush1.msra.mxu0 %v339
    %2411 = vmatprep.subr.mxu0 0.0
    %2412 = vmatpush1.msra.mxu0 %v340
    %2413 = vmatprep.subr.mxu0 0.0
    %2414 = vmatpush1.msra.mxu0 %v341
    %2415 = vmatprep.subr.mxu0 0.0
    %2416 = vmatpush1.msra.mxu0 0.0
    %2417 = vmatprep.subr.mxu0 0.0
    %2418 = vmatpush1.msra.mxu0 0.0
    %2419 = vmatprep.subr.mxu0 0.0
    %2420 = vmatpush1.msra.mxu0 0.0
    %2421 = vmatprep.subr.mxu0 0.0
    %2422 = vmatpush1.msra.mxu0 0.0
    %2423 = vmatprep.subr.mxu0 0.0
    %2424 = vmatpush1.msra.mxu0 0.0
    %2425 = vmatprep.subr.mxu0 0.0
    %2426 = vmatpush1.msra.mxu0 0.0
    %2427 = vmatprep.subr.mxu0 0.0
    %2428 = vmatpush1.msra.mxu0 0.0
    %2429 = vmatprep.subr.mxu0 0.0
    %2430 = vmatpush1.msra.mxu0 0.0
    %2431 = vmatprep.subr.mxu0 0.0
    %2432 = vmatpush1.msra.mxu0 0.0
    %2433 = vmatprep.subr.mxu0 0.0
    %2434 = vmatpush1.msra.mxu0 0.0
    %2435 = vmatprep.subr.mxu0 0.0
    %2436 = vmatpush1.msra.mxu0 0.0
    %2437 = vmatprep.subr.mxu0 0.0
    %2438 = vmatpush1.msra.mxu0 0.0
    %2439 = vmatprep.subr.mxu0 0.0
    %2440 = vmatpush1.msra.mxu0 0.0
    %2441 = vmatprep.subr.mxu0 0.0
    %2442 = vmatpush1.msra.mxu0 0.0
    %2443 = vmatprep.subr.mxu0 0.0
    %2444 = vmatpush1.msra.mxu0 0.0
    %2445 = vmatprep.subr.mxu0 0.0
    %2446 = vmatpush1.msra.mxu0 0.0
    %2447 = vmatprep.subr.mxu0 0.0
    %2448 = vmatpush1.msra.mxu0 0.0
    %2449 = vmatprep.subr.mxu0 0.0
    %2450 = vmatpush1.msra.mxu0 0.0
    %2451 = vmatprep.subr.mxu0 0.0
    %2452 = vmatpush1.msra.mxu0 0.0
    %2453 = vmatprep.subr.mxu0 0.0
    %2454 = vmatpush1.msra.mxu0 0.0
    %2455 = vmatprep.subr.mxu0 0.0
    %2456 = vmatpush1.msra.mxu0 0.0
    %2457 = vmatprep.subr.mxu0 0.0
    %2458 = vmatpush1.msra.mxu0 0.0
    %2459 = vmatprep.subr.mxu0 0.0
    %2460 = vmatpush1.msra.mxu0 0.0
    %2461 = vmatprep.subr.mxu0 0.0
    %2462 = vmatpush1.msra.mxu0 0.0
    %2463 = vmatprep.subr.mxu0 0.0
    %2464 = vmatpush1.msra.mxu0 0.0
    %2465 = vmatprep.subr.mxu0 0.0
    %2466 = vmatpush1.msra.mxu0 0.0
    %2467 = vmatprep.subr.mxu0 0.0
    %2468 = vmatpush1.msra.mxu0 0.0
    %2469 = vmatprep.subr.mxu0 0.0
    %2470 = vmatpush1.msra.mxu0 0.0
    %2471 = vmatprep.mubr.f32.mxu0 0.0
    %2472 = vmatmul.mubr.f32.gmra.mrb[0].mxu0 %v2247
    %v2473 = vpop.f32.mrb[0].mxu0
    %v2474 = vadd.f32 %v354, %v2473
    %v2475 = vpop.f32.mrb[0].mxu0
    %2476 = vdwg.mxu0
    %2478 = vrot.lane.b32.xlu0 %v2474, 96
    %v2479 = vpop.permute.xlu0 %2478
    %v2481 = vmul.f32 %v2329, %v2479
    %2483 = vrot.lane.b32.xlu0 %v2481, 64
    %v2484 = vpop.permute.xlu0 %2483
    %v2486 = vadd.f32 %v316, %v2484
    %v2487 = vtanh.pop %v2486
    %v2488 = vsub.f32 1.0, %v2406
    %2490 = vrot.lane.b32.xlu0 %v2487, 96
    %v2491 = vpop.permute.xlu0 %2490
    %v2493 = vmul.f32 %v2488, %v2491
    %v2495 = vmul.f32 %v2406, %v2246
    %v2496 = vadd.f32 %v2493, %v2495
    %vm2497 = vcmp.eq.s32.totalorder %v356, 4
    %v2498 = vsel %vm2497, 1, 0
    %v2499 = vcvt.s32.f32 %v2498
    %vm2500 = vcmp.eq.s32.totalorder %v356, 5
    %v2501 = vsel %vm2500, 1, 0
    %v2502 = vcvt.s32.f32 %v2501
    %v2504 = vrot.slane %v1972, 2
    %v2506 = vsub.f32 %v2244, %v2504
    %2508 = vset.pattern.permute.xlu0 0
    %2509 = vperm.xlu0 %2508, %v2499
    %v2510 = vpop.permute.xlu0 %2509
    %v2513 = vrot.slane %v2506, 6
    %2514 = vrot.lane.b32.xlu0 %v2513, 96
    %v2515 = vpop.permute.xlu0 %2514
    %v2517 = vmul.f32 %v2510, %v2515
    %2519 = vrot.lane.b32.xlu0 %v2517, 32
    %v2520 = vpop.permute.xlu0 %2519
    %v2522 = vadd.f32 %v1972, %v2520
    %v2523 = vsub.f32 %v2496, %v1986
    %2525 = vset.pattern.permute.xlu0 0
    %2526 = vperm.xlu0 %2525, %v2502
    %v2527 = vpop.permute.xlu0 %2526
    %v2529 = vmul.f32 %v2527, %v2523
    %v2530 = vadd.f32 %v1986, %v2529
    %v2532 = vrot.slane %v2244, 6
    %2533 = vrot.lane.b32.xlu0 %v2532, 96
    %v2534 = vpop.permute.xlu0 %2533
    %v2535 = vsel %vm234, %v2534, 0
    %2537 = vmatprep.subr.mxu0 0.0
    %2538 = vmatpush1.msra.mxu0 %v318
    %2539 = vmatprep.subr.mxu0 0.0
    %2540 = vmatpush1.msra.mxu0 %v319
    %2541 = vmatprep.subr.mxu0 0.0
    %2542 = vmatpush1.msra.mxu0 %v320
    %2543 = vmatprep.subr.mxu0 0.0
    %2544 = vmatpush1.msra.mxu0 %v321
    %2545 = vmatprep.subr.mxu0 0.0
    %2546 = vmatpush1.msra.mxu0 0.0
    %2547 = vmatprep.subr.mxu0 0.0
    %2548 = vmatpush1.msra.mxu0 0.0
    %2549 = vmatprep.subr.mxu0 0.0
    %2550 = vmatpush1.msra.mxu0 0.0
    %2551 = vmatprep.subr.mxu0 0.0
    %2552 = vmatpush1.msra.mxu0 0.0
    %2553 = vmatprep.subr.mxu0 0.0
    %2554 = vmatpush1.msra.mxu0 0.0
    %2555 = vmatprep.subr.mxu0 0.0
    %2556 = vmatpush1.msra.mxu0 0.0
    %2557 = vmatprep.subr.mxu0 0.0
    %2558 = vmatpush1.msra.mxu0 0.0
    %2559 = vmatprep.subr.mxu0 0.0
    %2560 = vmatpush1.msra.mxu0 0.0
    %2561 = vmatprep.subr.mxu0 0.0
    %2562 = vmatpush1.msra.mxu0 0.0
    %2563 = vmatprep.subr.mxu0 0.0
    %2564 = vmatpush1.msra.mxu0 0.0
    %2565 = vmatprep.subr.mxu0 0.0
    %2566 = vmatpush1.msra.mxu0 0.0
    %2567 = vmatprep.subr.mxu0 0.0
    %2568 = vmatpush1.msra.mxu0 0.0
    %2569 = vmatprep.subr.mxu0 0.0
    %2570 = vmatpush1.msra.mxu0 0.0
    %2571 = vmatprep.subr.mxu0 0.0
    %2572 = vmatpush1.msra.mxu0 0.0
    %2573 = vmatprep.subr.mxu0 0.0
    %2574 = vmatpush1.msra.mxu0 0.0
    %2575 = vmatprep.subr.mxu0 0.0
    %2576 = vmatpush1.msra.mxu0 0.0
    %2577 = vmatprep.subr.mxu0 0.0
    %2578 = vmatpush1.msra.mxu0 0.0
    %2579 = vmatprep.subr.mxu0 0.0
    %2580 = vmatpush1.msra.mxu0 0.0
    %2581 = vmatprep.subr.mxu0 0.0
    %2582 = vmatpush1.msra.mxu0 0.0
    %2583 = vmatprep.subr.mxu0 0.0
    %2584 = vmatpush1.msra.mxu0 0.0
    %2585 = vmatprep.subr.mxu0 0.0
    %2586 = vmatpush1.msra.mxu0 0.0
    %2587 = vmatprep.subr.mxu0 0.0
    %2588 = vmatpush1.msra.mxu0 0.0
    %2589 = vmatprep.subr.mxu0 0.0
    %2590 = vmatpush1.msra.mxu0 0.0
    %2591 = vmatprep.subr.mxu0 0.0
    %2592 = vmatpush1.msra.mxu0 0.0
    %2593 = vmatprep.subr.mxu0 0.0
    %2594 = vmatpush1.msra.mxu0 0.0
    %2595 = vmatprep.subr.mxu0 0.0
    %2596 = vmatpush1.msra.mxu0 0.0
    %2597 = vmatprep.subr.mxu0 0.0
    %2598 = vmatpush1.msra.mxu0 0.0
    %2599 = vmatprep.subr.mxu0 0.0
    %2600 = vmatpush1.msra.mxu0 0.0
    %2601 = vmatprep.mubr.f32.mxu0 0.0
    %2602 = vmatmul.mubr.f32.gmra.mrb[0].mxu0 %v2535
    %v2603 = vpop.f32.mrb[0].mxu0
    %v2604 = vadd.f32 0.0, %v2603
    %v2605 = vpop.f32.mrb[0].mxu0
    %2606 = vdwg.mxu0
    %v2607 = vadd.f32 %v314, %v2604
    %v2608 = vxor.u32 %v2607, 2147483648
    %v2609 = vmul.f32 %v2608, 1.442695
    %v2610 = vpow.pop %v2609
    %v2611 = vadd.f32 %v2610, 1.0
    %v2612 = vrcp.pop %v2611
    %v2613 = vmul.f32 1.0, %v2612
    %2614 = vmatprep.subr.mxu0 0.0
    %2615 = vmatpush1.msra.mxu0 %v322
    %2616 = vmatprep.subr.mxu0 0.0
    %2617 = vmatpush1.msra.mxu0 %v323
    %2618 = vmatprep.subr.mxu0 0.0
    %2619 = vmatpush1.msra.mxu0 %v324
    %2620 = vmatprep.subr.mxu0 0.0
    %2621 = vmatpush1.msra.mxu0 %v325
    %2622 = vmatprep.subr.mxu0 0.0
    %2623 = vmatpush1.msra.mxu0 0.0
    %2624 = vmatprep.subr.mxu0 0.0
    %2625 = vmatpush1.msra.mxu0 0.0
    %2626 = vmatprep.subr.mxu0 0.0
    %2627 = vmatpush1.msra.mxu0 0.0
    %2628 = vmatprep.subr.mxu0 0.0
    %2629 = vmatpush1.msra.mxu0 0.0
    %2630 = vmatprep.subr.mxu0 0.0
    %2631 = vmatpush1.msra.mxu0 0.0
    %2632 = vmatprep.subr.mxu0 0.0
    %2633 = vmatpush1.msra.mxu0 0.0
    %2634 = vmatprep.subr.mxu0 0.0
    %2635 = vmatpush1.msra.mxu0 0.0
    %2636 = vmatprep.subr.mxu0 0.0
    %2637 = vmatpush1.msra.mxu0 0.0
    %2638 = vmatprep.subr.mxu0 0.0
    %2639 = vmatpush1.msra.mxu0 0.0
    %2640 = vmatprep.subr.mxu0 0.0
    %2641 = vmatpush1.msra.mxu0 0.0
    %2642 = vmatprep.subr.mxu0 0.0
    %2643 = vmatpush1.msra.mxu0 0.0
    %2644 = vmatprep.subr.mxu0 0.0
    %2645 = vmatpush1.msra.mxu0 0.0
    %2646 = vmatprep.subr.mxu0 0.0
    %2647 = vmatpush1.msra.mxu0 0.0
    %2648 = vmatprep.subr.mxu0 0.0
    %2649 = vmatpush1.msra.mxu0 0.0
    %2650 = vmatprep.subr.mxu0 0.0
    %2651 = vmatpush1.msra.mxu0 0.0
    %2652 = vmatprep.subr.mxu0 0.0
    %2653 = vmatpush1.msra.mxu0 0.0
    %2654 = vmatprep.subr.mxu0 0.0
    %2655 = vmatpush1.msra.mxu0 0.0
    %2656 = vmatprep.subr.mxu0 0.0
    %2657 = vmatpush1.msra.mxu0 0.0
    %2658 = vmatprep.subr.mxu0 0.0
    %2659 = vmatpush1.msra.mxu0 0.0
    %2660 = vmatprep.subr.mxu0 0.0
    %2661 = vmatpush1.msra.mxu0 0.0
    %2662 = vmatprep.subr.mxu0 0.0
    %2663 = vmatpush1.msra.mxu0 0.0
    %2664 = vmatprep.subr.mxu0 0.0
    %2665 = vmatpush1.msra.mxu0 0.0
    %2666 = vmatprep.subr.mxu0 0.0
    %2667 = vmatpush1.msra.mxu0 0.0
    %2668 = vmatprep.subr.mxu0 0.0
    %2669 = vmatpush1.msra.mxu0 0.0
    %2670 = vmatprep.subr.mxu0 0.0
    %2671 = vmatpush1.msra.mxu0 0.0
    %2672 = vmatprep.subr.mxu0 0.0
    %2673 = vmatpush1.msra.mxu0 0.0
    %2674 = vmatprep.subr.mxu0 0.0
    %2675 = vmatpush1.msra.mxu0 0.0
    %2676 = vmatprep.subr.mxu0 0.0
    %2677 = vmatpush1.msra.mxu0 0.0
    %2678 = vmatprep.mubr.f32.mxu0 0.0
    %2679 = vmatmul.mubr.f32.gmra.mrb[0].mxu0 %v2535
    %v2680 = vpop.f32.mrb[0].mxu0
    %v2681 = vadd.f32 0.0, %v2680
    %v2682 = vpop.f32.mrb[0].mxu0
    %2683 = vdwg.mxu0
    %2685 = vrot.lane.b32.xlu0 %v2681, 32
    %v2686 = vpop.permute.xlu0 %2685
    %v2688 = vadd.f32 %v314, %v2686
    %v2689 = vxor.u32 %v2688, 2147483648
    %v2690 = vmul.f32 %v2689, 1.442695
    %v2691 = vpow.pop %v2690
    %v2692 = vadd.f32 %v2691, 1.0
    %v2693 = vrcp.pop %v2692
    %v2694 = vmul.f32 1.0, %v2693
    %2695 = vmatprep.subr.mxu0 0.0
    %2696 = vmatpush1.msra.mxu0 %v326
    %2697 = vmatprep.subr.mxu0 0.0
    %2698 = vmatpush1.msra.mxu0 %v327
    %2699 = vmatprep.subr.mxu0 0.0
    %2700 = vmatpush1.msra.mxu0 %v328
    %2701 = vmatprep.subr.mxu0 0.0
    %2702 = vmatpush1.msra.mxu0 %v329
    %2703 = vmatprep.subr.mxu0 0.0
    %2704 = vmatpush1.msra.mxu0 0.0
    %2705 = vmatprep.subr.mxu0 0.0
    %2706 = vmatpush1.msra.mxu0 0.0
    %2707 = vmatprep.subr.mxu0 0.0
    %2708 = vmatpush1.msra.mxu0 0.0
    %2709 = vmatprep.subr.mxu0 0.0
    %2710 = vmatpush1.msra.mxu0 0.0
    %2711 = vmatprep.subr.mxu0 0.0
    %2712 = vmatpush1.msra.mxu0 0.0
    %2713 = vmatprep.subr.mxu0 0.0
    %2714 = vmatpush1.msra.mxu0 0.0
    %2715 = vmatprep.subr.mxu0 0.0
    %2716 = vmatpush1.msra.mxu0 0.0
    %2717 = vmatprep.subr.mxu0 0.0
    %2718 = vmatpush1.msra.mxu0 0.0
    %2719 = vmatprep.subr.mxu0 0.0
    %2720 = vmatpush1.msra.mxu0 0.0
    %2721 = vmatprep.subr.mxu0 0.0
    %2722 = vmatpush1.msra.mxu0 0.0
    %2723 = vmatprep.subr.mxu0 0.0
    %2724 = vmatpush1.msra.mxu0 0.0
    %2725 = vmatprep.subr.mxu0 0.0
    %2726 = vmatpush1.msra.mxu0 0.0
    %2727 = vmatprep.subr.mxu0 0.0
    %2728 = vmatpush1.msra.mxu0 0.0
    %2729 = vmatprep.subr.mxu0 0.0
    %2730 = vmatpush1.msra.mxu0 0.0
    %2731 = vmatprep.subr.mxu0 0.0
    %2732 = vmatpush1.msra.mxu0 0.0
    %2733 = vmatprep.subr.mxu0 0.0
    %2734 = vmatpush1.msra.mxu0 0.0
    %2735 = vmatprep.subr.mxu0 0.0
    %2736 = vmatpush1.msra.mxu0 0.0
    %2737 = vmatprep.subr.mxu0 0.0
    %2738 = vmatpush1.msra.mxu0 0.0
    %2739 = vmatprep.subr.mxu0 0.0
    %2740 = vmatpush1.msra.mxu0 0.0
    %2741 = vmatprep.subr.mxu0 0.0
    %2742 = vmatpush1.msra.mxu0 0.0
    %2743 = vmatprep.subr.mxu0 0.0
    %2744 = vmatpush1.msra.mxu0 0.0
    %2745 = vmatprep.subr.mxu0 0.0
    %2746 = vmatpush1.msra.mxu0 0.0
    %2747 = vmatprep.subr.mxu0 0.0
    %2748 = vmatpush1.msra.mxu0 0.0
    %2749 = vmatprep.subr.mxu0 0.0
    %2750 = vmatpush1.msra.mxu0 0.0
    %2751 = vmatprep.subr.mxu0 0.0
    %2752 = vmatpush1.msra.mxu0 0.0
    %2753 = vmatprep.subr.mxu0 0.0
    %2754 = vmatpush1.msra.mxu0 0.0
    %2755 = vmatprep.subr.mxu0 0.0
    %2756 = vmatpush1.msra.mxu0 0.0
    %2757 = vmatprep.subr.mxu0 0.0
    %2758 = vmatpush1.msra.mxu0 0.0
    %2759 = vmatprep.mubr.f32.mxu0 0.0
    %2760 = vmatmul.mubr.f32.gmra.mrb[0].mxu0 %v2535
    %v2761 = vpop.f32.mrb[0].mxu0
    %v2762 = vadd.f32 %v347, %v2761
    %v2763 = vpop.f32.mrb[0].mxu0
    %2764 = vdwg.mxu0
    %v2765 = vmul.f32 %v2613, %v2762
    %2767 = vrot.lane.b32.xlu0 %v2765, 64
    %v2768 = vpop.permute.xlu0 %2767
    %v2770 = vadd.f32 %v314, %v2768
    %v2771 = vtanh.pop %v2770
    %v2772 = vsub.f32 1.0, %v2694
    %2774 = vrot.lane.b32.xlu0 %v2771, 96
    %v2775 = vpop.permute.xlu0 %2774
    %v2777 = vmul.f32 %v2772, %v2775
    %v2779 = vmul.f32 %v2694, %v2532
    %v2780 = vadd.f32 %v2777, %v2779
    %v2782 = vsel %vm234, %v2496, 0
    %2784 = vmatprep.subr.mxu0 0.0
    %2785 = vmatpush1.msra.mxu0 %v330
    %2786 = vmatprep.subr.mxu0 0.0
    %2787 = vmatpush1.msra.mxu0 %v331
    %2788 = vmatprep.subr.mxu0 0.0
    %2789 = vmatpush1.msra.mxu0 %v332
    %2790 = vmatprep.subr.mxu0 0.0
    %2791 = vmatpush1.msra.mxu0 %v333
    %2792 = vmatprep.subr.mxu0 0.0
    %2793 = vmatpush1.msra.mxu0 0.0
    %2794 = vmatprep.subr.mxu0 0.0
    %2795 = vmatpush1.msra.mxu0 0.0
    %2796 = vmatprep.subr.mxu0 0.0
    %2797 = vmatpush1.msra.mxu0 0.0
    %2798 = vmatprep.subr.mxu0 0.0
    %2799 = vmatpush1.msra.mxu0 0.0
    %2800 = vmatprep.subr.mxu0 0.0
    %2801 = vmatpush1.msra.mxu0 0.0
    %2802 = vmatprep.subr.mxu0 0.0
    %2803 = vmatpush1.msra.mxu0 0.0
    %2804 = vmatprep.subr.mxu0 0.0
    %2805 = vmatpush1.msra.mxu0 0.0
    %2806 = vmatprep.subr.mxu0 0.0
    %2807 = vmatpush1.msra.mxu0 0.0
    %2808 = vmatprep.subr.mxu0 0.0
    %2809 = vmatpush1.msra.mxu0 0.0
    %2810 = vmatprep.subr.mxu0 0.0
    %2811 = vmatpush1.msra.mxu0 0.0
    %2812 = vmatprep.subr.mxu0 0.0
    %2813 = vmatpush1.msra.mxu0 0.0
    %2814 = vmatprep.subr.mxu0 0.0
    %2815 = vmatpush1.msra.mxu0 0.0
    %2816 = vmatprep.subr.mxu0 0.0
    %2817 = vmatpush1.msra.mxu0 0.0
    %2818 = vmatprep.subr.mxu0 0.0
    %2819 = vmatpush1.msra.mxu0 0.0
    %2820 = vmatprep.subr.mxu0 0.0
    %2821 = vmatpush1.msra.mxu0 0.0
    %2822 = vmatprep.subr.mxu0 0.0
    %2823 = vmatpush1.msra.mxu0 0.0
    %2824 = vmatprep.subr.mxu0 0.0
    %2825 = vmatpush1.msra.mxu0 0.0
    %2826 = vmatprep.subr.mxu0 0.0
    %2827 = vmatpush1.msra.mxu0 0.0
    %2828 = vmatprep.subr.mxu0 0.0
    %2829 = vmatpush1.msra.mxu0 0.0
    %2830 = vmatprep.subr.mxu0 0.0
    %2831 = vmatpush1.msra.mxu0 0.0
    %2832 = vmatprep.subr.mxu0 0.0
    %2833 = vmatpush1.msra.mxu0 0.0
    %2834 = vmatprep.subr.mxu0 0.0
    %2835 = vmatpush1.msra.mxu0 0.0
    %2836 = vmatprep.subr.mxu0 0.0
    %2837 = vmatpush1.msra.mxu0 0.0
    %2838 = vmatprep.subr.mxu0 0.0
    %2839 = vmatpush1.msra.mxu0 0.0
    %2840 = vmatprep.subr.mxu0 0.0
    %2841 = vmatpush1.msra.mxu0 0.0
    %2842 = vmatprep.subr.mxu0 0.0
    %2843 = vmatpush1.msra.mxu0 0.0
    %2844 = vmatprep.subr.mxu0 0.0
    %2845 = vmatpush1.msra.mxu0 0.0
    %2846 = vmatprep.subr.mxu0 0.0
    %2847 = vmatpush1.msra.mxu0 0.0
    %2848 = vmatprep.mubr.f32.mxu0 0.0
    %2849 = vmatmul.mubr.f32.gmra.mrb[0].mxu0 %v2782
    %v2850 = vpop.f32.mrb[0].mxu0
    %v2851 = vadd.f32 0.0, %v2850
    %v2852 = vpop.f32.mrb[0].mxu0
    %2853 = vdwg.mxu0
    %v2855 = vrot.slane %v2851, 2
    %2856 = vrot.lane.b32.xlu0 %v2855, 96
    %v2857 = vpop.permute.xlu0 %2856
    %v2859 = vadd.f32 %v308, %v2857
    %v2860 = vxor.u32 %v2859, 2147483648
    %v2861 = vmul.f32 %v2860, 1.442695
    %v2862 = vpow.pop %v2861
    %v2863 = vadd.f32 %v2862, 1.0
    %v2864 = vrcp.pop %v2863
    %v2865 = vmul.f32 1.0, %v2864
    %2866 = vmatprep.subr.mxu0 0.0
    %2867 = vmatpush1.msra.mxu0 %v334
    %2868 = vmatprep.subr.mxu0 0.0
    %2869 = vmatpush1.msra.mxu0 %v335
    %2870 = vmatprep.subr.mxu0 0.0
    %2871 = vmatpush1.msra.mxu0 %v336
    %2872 = vmatprep.subr.mxu0 0.0
    %2873 = vmatpush1.msra.mxu0 %v337
    %2874 = vmatprep.subr.mxu0 0.0
    %2875 = vmatpush1.msra.mxu0 0.0
    %2876 = vmatprep.subr.mxu0 0.0
    %2877 = vmatpush1.msra.mxu0 0.0
    %2878 = vmatprep.subr.mxu0 0.0
    %2879 = vmatpush1.msra.mxu0 0.0
    %2880 = vmatprep.subr.mxu0 0.0
    %2881 = vmatpush1.msra.mxu0 0.0
    %2882 = vmatprep.subr.mxu0 0.0
    %2883 = vmatpush1.msra.mxu0 0.0
    %2884 = vmatprep.subr.mxu0 0.0
    %2885 = vmatpush1.msra.mxu0 0.0
    %2886 = vmatprep.subr.mxu0 0.0
    %2887 = vmatpush1.msra.mxu0 0.0
    %2888 = vmatprep.subr.mxu0 0.0
    %2889 = vmatpush1.msra.mxu0 0.0
    %2890 = vmatprep.subr.mxu0 0.0
    %2891 = vmatpush1.msra.mxu0 0.0
    %2892 = vmatprep.subr.mxu0 0.0
    %2893 = vmatpush1.msra.mxu0 0.0
    %2894 = vmatprep.subr.mxu0 0.0
    %2895 = vmatpush1.msra.mxu0 0.0
    %2896 = vmatprep.subr.mxu0 0.0
    %2897 = vmatpush1.msra.mxu0 0.0
    %2898 = vmatprep.subr.mxu0 0.0
    %2899 = vmatpush1.msra.mxu0 0.0
    %2900 = vmatprep.subr.mxu0 0.0
    %2901 = vmatpush1.msra.mxu0 0.0
    %2902 = vmatprep.subr.mxu0 0.0
    %2903 = vmatpush1.msra.mxu0 0.0
    %2904 = vmatprep.subr.mxu0 0.0
    %2905 = vmatpush1.msra.mxu0 0.0
    %2906 = vmatprep.subr.mxu0 0.0
    %2907 = vmatpush1.msra.mxu0 0.0
    %2908 = vmatprep.subr.mxu0 0.0
    %2909 = vmatpush1.msra.mxu0 0.0
    %2910 = vmatprep.subr.mxu0 0.0
    %2911 = vmatpush1.msra.mxu0 0.0
    %2912 = vmatprep.subr.mxu0 0.0
    %2913 = vmatpush1.msra.mxu0 0.0
    %2914 = vmatprep.subr.mxu0 0.0
    %2915 = vmatpush1.msra.mxu0 0.0
    %2916 = vmatprep.subr.mxu0 0.0
    %2917 = vmatpush1.msra.mxu0 0.0
    %2918 = vmatprep.subr.mxu0 0.0
    %2919 = vmatpush1.msra.mxu0 0.0
    %2920 = vmatprep.subr.mxu0 0.0
    %2921 = vmatpush1.msra.mxu0 0.0
    %2922 = vmatprep.subr.mxu0 0.0
    %2923 = vmatpush1.msra.mxu0 0.0
    %2924 = vmatprep.subr.mxu0 0.0
    %2925 = vmatpush1.msra.mxu0 0.0
    %2926 = vmatprep.subr.mxu0 0.0
    %2927 = vmatpush1.msra.mxu0 0.0
    %2928 = vmatprep.subr.mxu0 0.0
    %2929 = vmatpush1.msra.mxu0 0.0
    %2930 = vmatprep.mubr.f32.mxu0 0.0
    %2931 = vmatmul.mubr.f32.gmra.mrb[0].mxu0 %v2782
    %v2932 = vpop.f32.mrb[0].mxu0
    %v2933 = vadd.f32 0.0, %v2932
    %v2934 = vpop.f32.mrb[0].mxu0
    %2935 = vdwg.mxu0
    %v2937 = vrot.slane %v2933, 2
    %v2939 = vadd.f32 %v310, %v2937
    %v2940 = vxor.u32 %v2939, 2147483648
    %v2941 = vmul.f32 %v2940, 1.442695
    %v2942 = vpow.pop %v2941
    %v2943 = vadd.f32 %v2942, 1.0
    %v2944 = vrcp.pop %v2943
    %v2945 = vmul.f32 1.0, %v2944
    %2946 = vmatprep.subr.mxu0 0.0
    %2947 = vmatpush1.msra.mxu0 %v338
    %2948 = vmatprep.subr.mxu0 0.0
    %2949 = vmatpush1.msra.mxu0 %v339
    %2950 = vmatprep.subr.mxu0 0.0
    %2951 = vmatpush1.msra.mxu0 %v340
    %2952 = vmatprep.subr.mxu0 0.0
    %2953 = vmatpush1.msra.mxu0 %v341
    %2954 = vmatprep.subr.mxu0 0.0
    %2955 = vmatpush1.msra.mxu0 0.0
    %2956 = vmatprep.subr.mxu0 0.0
    %2957 = vmatpush1.msra.mxu0 0.0
    %2958 = vmatprep.subr.mxu0 0.0
    %2959 = vmatpush1.msra.mxu0 0.0
    %2960 = vmatprep.subr.mxu0 0.0
    %2961 = vmatpush1.msra.mxu0 0.0
    %2962 = vmatprep.subr.mxu0 0.0
    %2963 = vmatpush1.msra.mxu0 0.0
    %2964 = vmatprep.subr.mxu0 0.0
    %2965 = vmatpush1.msra.mxu0 0.0
    %2966 = vmatprep.subr.mxu0 0.0
    %2967 = vmatpush1.msra.mxu0 0.0
    %2968 = vmatprep.subr.mxu0 0.0
    %2969 = vmatpush1.msra.mxu0 0.0
    %2970 = vmatprep.subr.mxu0 0.0
    %2971 = vmatpush1.msra.mxu0 0.0
    %2972 = vmatprep.subr.mxu0 0.0
    %2973 = vmatpush1.msra.mxu0 0.0
    %2974 = vmatprep.subr.mxu0 0.0
    %2975 = vmatpush1.msra.mxu0 0.0
    %2976 = vmatprep.subr.mxu0 0.0
    %2977 = vmatpush1.msra.mxu0 0.0
    %2978 = vmatprep.subr.mxu0 0.0
    %2979 = vmatpush1.msra.mxu0 0.0
    %2980 = vmatprep.subr.mxu0 0.0
    %2981 = vmatpush1.msra.mxu0 0.0
    %2982 = vmatprep.subr.mxu0 0.0
    %2983 = vmatpush1.msra.mxu0 0.0
    %2984 = vmatprep.subr.mxu0 0.0
    %2985 = vmatpush1.msra.mxu0 0.0
    %2986 = vmatprep.subr.mxu0 0.0
    %2987 = vmatpush1.msra.mxu0 0.0
    %2988 = vmatprep.subr.mxu0 0.0
    %2989 = vmatpush1.msra.mxu0 0.0
    %2990 = vmatprep.subr.mxu0 0.0
    %2991 = vmatpush1.msra.mxu0 0.0
    %2992 = vmatprep.subr.mxu0 0.0
    %2993 = vmatpush1.msra.mxu0 0.0
    %2994 = vmatprep.subr.mxu0 0.0
    %2995 = vmatpush1.msra.mxu0 0.0
    %2996 = vmatprep.subr.mxu0 0.0
    %2997 = vmatpush1.msra.mxu0 0.0
    %2998 = vmatprep.subr.mxu0 0.0
    %2999 = vmatpush1.msra.mxu0 0.0
    %3000 = vmatprep.subr.mxu0 0.0
    %3001 = vmatpush1.msra.mxu0 0.0
    %3002 = vmatprep.subr.mxu0 0.0
    %3003 = vmatpush1.msra.mxu0 0.0
    %3004 = vmatprep.subr.mxu0 0.0
    %3005 = vmatpush1.msra.mxu0 0.0
    %3006 = vmatprep.subr.mxu0 0.0
    %3007 = vmatpush1.msra.mxu0 0.0
    %3008 = vmatprep.subr.mxu0 0.0
    %3009 = vmatpush1.msra.mxu0 0.0
    %3010 = vmatprep.mubr.f32.mxu0 0.0
    %3011 = vmatmul.mubr.f32.gmra.mrb[0].mxu0 %v2782
    %v3012 = vpop.f32.mrb[0].mxu0
    %v3013 = vadd.f32 %v354, %v3012
    %v3014 = vpop.f32.mrb[0].mxu0
    %3015 = vdwg.mxu0
    %v3017 = vrot.slane %v3013, 2
    %3018 = vrot.lane.b32.xlu0 %v3017, 96
    %v3019 = vpop.permute.xlu0 %3018
    %v3021 = vmul.f32 %v2865, %v3019
    %3023 = vrot.lane.b32.xlu0 %v3021, 64
    %v3024 = vpop.permute.xlu0 %3023
    %v3026 = vadd.f32 %v310, %v3024
    %v3027 = vtanh.pop %v3026
    %v3028 = vsub.f32 1.0, %v2945
    %3030 = vrot.lane.b32.xlu0 %v3027, 96
    %v3031 = vpop.permute.xlu0 %3030
    %v3033 = vmul.f32 %v3028, %v3031
    %v3034 = vrot.slane %v2496, 2
    %v3036 = vmul.f32 %v2945, %v3034
    %v3037 = vadd.f32 %v3033, %v3036
    %v3038 = vsub.f32 %v2780, %v2522
    %v3039 = vmul.f32 %v2527, %v3038
    %v3040 = vadd.f32 %v2522, %v3039
    %v3042 = vrot.slane %v2530, 2
    %v3044 = vsub.f32 %v3037, %v3042
    %v3046 = vrot.slane %v3044, 6
    %v3048 = vmul.f32 %v2510, %v3046
    %v3049 = vadd.f32 %v2530, %v3048
    %3051 = vrot.lane.b32.xlu0 %v2780, 96
    %v3052 = vpop.permute.xlu0 %3051
    %v3053 = vsel %vm234, %v3052, 0
    %3055 = vmatprep.subr.mxu0 0.0
    %3056 = vmatpush1.msra.mxu0 %v318
    %3057 = vmatprep.subr.mxu0 0.0
    %3058 = vmatpush1.msra.mxu0 %v319
    %3059 = vmatprep.subr.mxu0 0.0
    %3060 = vmatpush1.msra.mxu0 %v320
    %3061 = vmatprep.subr.mxu0 0.0
    %3062 = vmatpush1.msra.mxu0 %v321
    %3063 = vmatprep.subr.mxu0 0.0
    %3064 = vmatpush1.msra.mxu0 0.0
    %3065 = vmatprep.subr.mxu0 0.0
    %3066 = vmatpush1.msra.mxu0 0.0
    %3067 = vmatprep.subr.mxu0 0.0
    %3068 = vmatpush1.msra.mxu0 0.0
    %3069 = vmatprep.subr.mxu0 0.0
    %3070 = vmatpush1.msra.mxu0 0.0
    %3071 = vmatprep.subr.mxu0 0.0
    %3072 = vmatpush1.msra.mxu0 0.0
    %3073 = vmatprep.subr.mxu0 0.0
    %3074 = vmatpush1.msra.mxu0 0.0
    %3075 = vmatprep.subr.mxu0 0.0
    %3076 = vmatpush1.msra.mxu0 0.0
    %3077 = vmatprep.subr.mxu0 0.0
    %3078 = vmatpush1.msra.mxu0 0.0
    %3079 = vmatprep.subr.mxu0 0.0
    %3080 = vmatpush1.msra.mxu0 0.0
    %3081 = vmatprep.subr.mxu0 0.0
    %3082 = vmatpush1.msra.mxu0 0.0
    %3083 = vmatprep.subr.mxu0 0.0
    %3084 = vmatpush1.msra.mxu0 0.0
    %3085 = vmatprep.subr.mxu0 0.0
    %3086 = vmatpush1.msra.mxu0 0.0
    %3087 = vmatprep.subr.mxu0 0.0
    %3088 = vmatpush1.msra.mxu0 0.0
    %3089 = vmatprep.subr.mxu0 0.0
    %3090 = vmatpush1.msra.mxu0 0.0
    %3091 = vmatprep.subr.mxu0 0.0
    %3092 = vmatpush1.msra.mxu0 0.0
    %3093 = vmatprep.subr.mxu0 0.0
    %3094 = vmatpush1.msra.mxu0 0.0
    %3095 = vmatprep.subr.mxu0 0.0
    %3096 = vmatpush1.msra.mxu0 0.0
    %3097 = vmatprep.subr.mxu0 0.0
    %3098 = vmatpush1.msra.mxu0 0.0
    %3099 = vmatprep.subr.mxu0 0.0
    %3100 = vmatpush1.msra.mxu0 0.0
    %3101 = vmatprep.subr.mxu0 0.0
    %3102 = vmatpush1.msra.mxu0 0.0
    %3103 = vmatprep.subr.mxu0 0.0
    %3104 = vmatpush1.msra.mxu0 0.0
    %3105 = vmatprep.subr.mxu0 0.0
    %3106 = vmatpush1.msra.mxu0 0.0
    %3107 = vmatprep.subr.mxu0 0.0
    %3108 = vmatpush1.msra.mxu0 0.0
    %3109 = vmatprep.subr.mxu0 0.0
    %3110 = vmatpush1.msra.mxu0 0.0
    %3111 = vmatprep.subr.mxu0 0.0
    %3112 = vmatpush1.msra.mxu0 0.0
    %3113 = vmatprep.subr.mxu0 0.0
    %3114 = vmatpush1.msra.mxu0 0.0
    %3115 = vmatprep.subr.mxu0 0.0
    %3116 = vmatpush1.msra.mxu0 0.0
    %3117 = vmatprep.subr.mxu0 0.0
    %3118 = vmatpush1.msra.mxu0 0.0
    %3119 = vmatprep.mubr.f32.mxu0 0.0
    %3120 = vmatmul.mubr.f32.gmra.mrb[0].mxu0 %v3053
    %v3121 = vpop.f32.mrb[0].mxu0
    %v3122 = vadd.f32 0.0, %v3121
    %v3123 = vpop.f32.mrb[0].mxu0
    %3124 = vdwg.mxu0
    %v3126 = vrot.slane %v3122, 6
    %v3128 = vadd.f32 %v314, %v3126
    %v3129 = vxor.u32 %v3128, 2147483648
    %v3130 = vmul.f32 %v3129, 1.442695
    %v3131 = vpow.pop %v3130
    %v3132 = vadd.f32 %v3131, 1.0
    %v3133 = vrcp.pop %v3132
    %v3134 = vmul.f32 1.0, %v3133
    %3135 = vmatprep.subr.mxu0 0.0
    %3136 = vmatpush1.msra.mxu0 %v322
    %3137 = vmatprep.subr.mxu0 0.0
    %3138 = vmatpush1.msra.mxu0 %v323
    %3139 = vmatprep.subr.mxu0 0.0
    %3140 = vmatpush1.msra.mxu0 %v324
    %3141 = vmatprep.subr.mxu0 0.0
    %3142 = vmatpush1.msra.mxu0 %v325
    %3143 = vmatprep.subr.mxu0 0.0
    %3144 = vmatpush1.msra.mxu0 0.0
    %3145 = vmatprep.subr.mxu0 0.0
    %3146 = vmatpush1.msra.mxu0 0.0
    %3147 = vmatprep.subr.mxu0 0.0
    %3148 = vmatpush1.msra.mxu0 0.0
    %3149 = vmatprep.subr.mxu0 0.0
    %3150 = vmatpush1.msra.mxu0 0.0
    %3151 = vmatprep.subr.mxu0 0.0
    %3152 = vmatpush1.msra.mxu0 0.0
    %3153 = vmatprep.subr.mxu0 0.0
    %3154 = vmatpush1.msra.mxu0 0.0
    %3155 = vmatprep.subr.mxu0 0.0
    %3156 = vmatpush1.msra.mxu0 0.0
    %3157 = vmatprep.subr.mxu0 0.0
    %3158 = vmatpush1.msra.mxu0 0.0
    %3159 = vmatprep.subr.mxu0 0.0
    %3160 = vmatpush1.msra.mxu0 0.0
    %3161 = vmatprep.subr.mxu0 0.0
    %3162 = vmatpush1.msra.mxu0 0.0
    %3163 = vmatprep.subr.mxu0 0.0
    %3164 = vmatpush1.msra.mxu0 0.0
    %3165 = vmatprep.subr.mxu0 0.0
    %3166 = vmatpush1.msra.mxu0 0.0
    %3167 = vmatprep.subr.mxu0 0.0
    %3168 = vmatpush1.msra.mxu0 0.0
    %3169 = vmatprep.subr.mxu0 0.0
    %3170 = vmatpush1.msra.mxu0 0.0
    %3171 = vmatprep.subr.mxu0 0.0
    %3172 = vmatpush1.msra.mxu0 0.0
    %3173 = vmatprep.subr.mxu0 0.0
    %3174 = vmatpush1.msra.mxu0 0.0
    %3175 = vmatprep.subr.mxu0 0.0
    %3176 = vmatpush1.msra.mxu0 0.0
    %3177 = vmatprep.subr.mxu0 0.0
    %3178 = vmatpush1.msra.mxu0 0.0
    %3179 = vmatprep.subr.mxu0 0.0
    %3180 = vmatpush1.msra.mxu0 0.0
    %3181 = vmatprep.subr.mxu0 0.0
    %3182 = vmatpush1.msra.mxu0 0.0
    %3183 = vmatprep.subr.mxu0 0.0
    %3184 = vmatpush1.msra.mxu0 0.0
    %3185 = vmatprep.subr.mxu0 0.0
    %3186 = vmatpush1.msra.mxu0 0.0
    %3187 = vmatprep.subr.mxu0 0.0
    %3188 = vmatpush1.msra.mxu0 0.0
    %3189 = vmatprep.subr.mxu0 0.0
    %3190 = vmatpush1.msra.mxu0 0.0
    %3191 = vmatprep.subr.mxu0 0.0
    %3192 = vmatpush1.msra.mxu0 0.0
    %3193 = vmatprep.subr.mxu0 0.0
    %3194 = vmatpush1.msra.mxu0 0.0
    %3195 = vmatprep.subr.mxu0 0.0
    %3196 = vmatpush1.msra.mxu0 0.0
    %3197 = vmatprep.subr.mxu0 0.0
    %3198 = vmatpush1.msra.mxu0 0.0
    %3199 = vmatprep.mubr.f32.mxu0 0.0
    %3200 = vmatmul.mubr.f32.gmra.mrb[0].mxu0 %v3053
    %v3201 = vpop.f32.mrb[0].mxu0
    %v3202 = vadd.f32 0.0, %v3201
    %v3203 = vpop.f32.mrb[0].mxu0
    %3204 = vdwg.mxu0
    %v3206 = vrot.slane %v3202, 6
    %3207 = vrot.lane.b32.xlu0 %v3206, 32
    %v3208 = vpop.permute.xlu0 %3207
    %v3210 = vadd.f32 %v314, %v3208
    %v3211 = vxor.u32 %v3210, 2147483648
    %v3212 = vmul.f32 %v3211, 1.442695
    %v3213 = vpow.pop %v3212
    %v3214 = vadd.f32 %v3213, 1.0
    %v3215 = vrcp.pop %v3214
    %v3216 = vmul.f32 1.0, %v3215
    %3217 = vmatprep.subr.mxu0 0.0
    %3218 = vmatpush1.msra.mxu0 %v326
    %3219 = vmatprep.subr.mxu0 0.0
    %3220 = vmatpush1.msra.mxu0 %v327
    %3221 = vmatprep.subr.mxu0 0.0
    %3222 = vmatpush1.msra.mxu0 %v328
    %3223 = vmatprep.subr.mxu0 0.0
    %3224 = vmatpush1.msra.mxu0 %v329
    %3225 = vmatprep.subr.mxu0 0.0
    %3226 = vmatpush1.msra.mxu0 0.0
    %3227 = vmatprep.subr.mxu0 0.0
    %3228 = vmatpush1.msra.mxu0 0.0
    %3229 = vmatprep.subr.mxu0 0.0
    %3230 = vmatpush1.msra.mxu0 0.0
    %3231 = vmatprep.subr.mxu0 0.0
    %3232 = vmatpush1.msra.mxu0 0.0
    %3233 = vmatprep.subr.mxu0 0.0
    %3234 = vmatpush1.msra.mxu0 0.0
    %3235 = vmatprep.subr.mxu0 0.0
    %3236 = vmatpush1.msra.mxu0 0.0
    %3237 = vmatprep.subr.mxu0 0.0
    %3238 = vmatpush1.msra.mxu0 0.0
    %3239 = vmatprep.subr.mxu0 0.0
    %3240 = vmatpush1.msra.mxu0 0.0
    %3241 = vmatprep.subr.mxu0 0.0
    %3242 = vmatpush1.msra.mxu0 0.0
    %3243 = vmatprep.subr.mxu0 0.0
    %3244 = vmatpush1.msra.mxu0 0.0
    %3245 = vmatprep.subr.mxu0 0.0
    %3246 = vmatpush1.msra.mxu0 0.0
    %3247 = vmatprep.subr.mxu0 0.0
    %3248 = vmatpush1.msra.mxu0 0.0
    %3249 = vmatprep.subr.mxu0 0.0
    %3250 = vmatpush1.msra.mxu0 0.0
    %3251 = vmatprep.subr.mxu0 0.0
    %3252 = vmatpush1.msra.mxu0 0.0
    %3253 = vmatprep.subr.mxu0 0.0
    %3254 = vmatpush1.msra.mxu0 0.0
    %3255 = vmatprep.subr.mxu0 0.0
    %3256 = vmatpush1.msra.mxu0 0.0
    %3257 = vmatprep.subr.mxu0 0.0
    %3258 = vmatpush1.msra.mxu0 0.0
    %3259 = vmatprep.subr.mxu0 0.0
    %3260 = vmatpush1.msra.mxu0 0.0
    %3261 = vmatprep.subr.mxu0 0.0
    %3262 = vmatpush1.msra.mxu0 0.0
    %3263 = vmatprep.subr.mxu0 0.0
    %3264 = vmatpush1.msra.mxu0 0.0
    %3265 = vmatprep.subr.mxu0 0.0
    %3266 = vmatpush1.msra.mxu0 0.0
    %3267 = vmatprep.subr.mxu0 0.0
    %3268 = vmatpush1.msra.mxu0 0.0
    %3269 = vmatprep.subr.mxu0 0.0
    %3270 = vmatpush1.msra.mxu0 0.0
    %3271 = vmatprep.subr.mxu0 0.0
    %3272 = vmatpush1.msra.mxu0 0.0
    %3273 = vmatprep.subr.mxu0 0.0
    %3274 = vmatpush1.msra.mxu0 0.0
    %3275 = vmatprep.subr.mxu0 0.0
    %3276 = vmatpush1.msra.mxu0 0.0
    %3277 = vmatprep.subr.mxu0 0.0
    %3278 = vmatpush1.msra.mxu0 0.0
    %3279 = vmatprep.subr.mxu0 0.0
    %3280 = vmatpush1.msra.mxu0 0.0
    %3281 = vmatprep.mubr.f32.mxu0 0.0
    %3282 = vmatmul.mubr.f32.gmra.mrb[0].mxu0 %v3053
    %v3283 = vpop.f32.mrb[0].mxu0
    %v3284 = vadd.f32 %v347, %v3283
    %v3285 = vpop.f32.mrb[0].mxu0
    %3286 = vdwg.mxu0
    %v3288 = vrot.slane %v3284, 6
    %v3290 = vmul.f32 %v3134, %v3288
    %3292 = vrot.lane.b32.xlu0 %v3290, 64
    %v3293 = vpop.permute.xlu0 %3292
    %v3295 = vadd.f32 %v314, %v3293
    %v3296 = vtanh.pop %v3295
    %v3297 = vsub.f32 1.0, %v3216
    %3299 = vrot.lane.b32.xlu0 %v3296, 96
    %v3300 = vpop.permute.xlu0 %3299
    %v3302 = vmul.f32 %v3297, %v3300
    %v3303 = vrot.slane %v2780, 6
    %v3305 = vmul.f32 %v3216, %v3303
    %v3306 = vadd.f32 %v3302, %v3305
    %v3308 = vrot.slane %v3037, 6
    %v3309 = vsel %vm234, %v3308, 0
    %3311 = vmatprep.subr.mxu0 0.0
    %3312 = vmatpush1.msra.mxu0 %v330
    %3313 = vmatprep.subr.mxu0 0.0
    %3314 = vmatpush1.msra.mxu0 %v331
    %3315 = vmatprep.subr.mxu0 0.0
    %3316 = vmatpush1.msra.mxu0 %v332
    %3317 = vmatprep.subr.mxu0 0.0
    %3318 = vmatpush1.msra.mxu0 %v333
    %3319 = vmatprep.subr.mxu0 0.0
    %3320 = vmatpush1.msra.mxu0 0.0
    %3321 = vmatprep.subr.mxu0 0.0
    %3322 = vmatpush1.msra.mxu0 0.0
    %3323 = vmatprep.subr.mxu0 0.0
    %3324 = vmatpush1.msra.mxu0 0.0
    %3325 = vmatprep.subr.mxu0 0.0
    %3326 = vmatpush1.msra.mxu0 0.0
    %3327 = vmatprep.subr.mxu0 0.0
    %3328 = vmatpush1.msra.mxu0 0.0
    %3329 = vmatprep.subr.mxu0 0.0
    %3330 = vmatpush1.msra.mxu0 0.0
    %3331 = vmatprep.subr.mxu0 0.0
    %3332 = vmatpush1.msra.mxu0 0.0
    %3333 = vmatprep.subr.mxu0 0.0
    %3334 = vmatpush1.msra.mxu0 0.0
    %3335 = vmatprep.subr.mxu0 0.0
    %3336 = vmatpush1.msra.mxu0 0.0
    %3337 = vmatprep.subr.mxu0 0.0
    %3338 = vmatpush1.msra.mxu0 0.0
    %3339 = vmatprep.subr.mxu0 0.0
    %3340 = vmatpush1.msra.mxu0 0.0
    %3341 = vmatprep.subr.mxu0 0.0
    %3342 = vmatpush1.msra.mxu0 0.0
    %3343 = vmatprep.subr.mxu0 0.0
    %3344 = vmatpush1.msra.mxu0 0.0
    %3345 = vmatprep.subr.mxu0 0.0
    %3346 = vmatpush1.msra.mxu0 0.0
    %3347 = vmatprep.subr.mxu0 0.0
    %3348 = vmatpush1.msra.mxu0 0.0
    %3349 = vmatprep.subr.mxu0 0.0
    %3350 = vmatpush1.msra.mxu0 0.0
    %3351 = vmatprep.subr.mxu0 0.0
    %3352 = vmatpush1.msra.mxu0 0.0
    %3353 = vmatprep.subr.mxu0 0.0
    %3354 = vmatpush1.msra.mxu0 0.0
    %3355 = vmatprep.subr.mxu0 0.0
    %3356 = vmatpush1.msra.mxu0 0.0
    %3357 = vmatprep.subr.mxu0 0.0
    %3358 = vmatpush1.msra.mxu0 0.0
    %3359 = vmatprep.subr.mxu0 0.0
    %3360 = vmatpush1.msra.mxu0 0.0
    %3361 = vmatprep.subr.mxu0 0.0
    %3362 = vmatpush1.msra.mxu0 0.0
    %3363 = vmatprep.subr.mxu0 0.0
    %3364 = vmatpush1.msra.mxu0 0.0
    %3365 = vmatprep.subr.mxu0 0.0
    %3366 = vmatpush1.msra.mxu0 0.0
    %3367 = vmatprep.subr.mxu0 0.0
    %3368 = vmatpush1.msra.mxu0 0.0
    %3369 = vmatprep.subr.mxu0 0.0
    %3370 = vmatpush1.msra.mxu0 0.0
    %3371 = vmatprep.subr.mxu0 0.0
    %3372 = vmatpush1.msra.mxu0 0.0
    %3373 = vmatprep.subr.mxu0 0.0
    %3374 = vmatpush1.msra.mxu0 0.0
    %3375 = vmatprep.mubr.f32.mxu0 0.0
    %3376 = vmatmul.mubr.f32.gmra.mrb[0].mxu0 %v3309
    %v3377 = vpop.f32.mrb[0].mxu0
    %v3378 = vadd.f32 0.0, %v3377
    %v3379 = vpop.f32.mrb[0].mxu0
    %3380 = vdwg.mxu0
    %v3382 = vrot.slane %v3378, 4
    %3383 = vrot.lane.b32.xlu0 %v3382, 96
    %v3384 = vpop.permute.xlu0 %3383
    %v3386 = vadd.f32 %v308, %v3384
    %v3387 = vxor.u32 %v3386, 2147483648
    %v3388 = vmul.f32 %v3387, 1.442695
    %v3389 = vpow.pop %v3388
    %v3390 = vadd.f32 %v3389, 1.0
    %v3391 = vrcp.pop %v3390
    %v3392 = vmul.f32 1.0, %v3391
    %3393 = vmatprep.subr.mxu0 0.0
    %3394 = vmatpush1.msra.mxu0 %v334
    %3395 = vmatprep.subr.mxu0 0.0
    %3396 = vmatpush1.msra.mxu0 %v335
    %3397 = vmatprep.subr.mxu0 0.0
    %3398 = vmatpush1.msra.mxu0 %v336
    %3399 = vmatprep.subr.mxu0 0.0
    %3400 = vmatpush1.msra.mxu0 %v337
    %3401 = vmatprep.subr.mxu0 0.0
    %3402 = vmatpush1.msra.mxu0 0.0
    %3403 = vmatprep.subr.mxu0 0.0
    %3404 = vmatpush1.msra.mxu0 0.0
    %3405 = vmatprep.subr.mxu0 0.0
    %3406 = vmatpush1.msra.mxu0 0.0
    %3407 = vmatprep.subr.mxu0 0.0
    %3408 = vmatpush1.msra.mxu0 0.0
    %3409 = vmatprep.subr.mxu0 0.0
    %3410 = vmatpush1.msra.mxu0 0.0
    %3411 = vmatprep.subr.mxu0 0.0
    %3412 = vmatpush1.msra.mxu0 0.0
    %3413 = vmatprep.subr.mxu0 0.0
    %3414 = vmatpush1.msra.mxu0 0.0
    %3415 = vmatprep.subr.mxu0 0.0
    %3416 = vmatpush1.msra.mxu0 0.0
    %3417 = vmatprep.subr.mxu0 0.0
    %3418 = vmatpush1.msra.mxu0 0.0
    %3419 = vmatprep.subr.mxu0 0.0
    %3420 = vmatpush1.msra.mxu0 0.0
    %3421 = vmatprep.subr.mxu0 0.0
    %3422 = vmatpush1.msra.mxu0 0.0
    %3423 = vmatprep.subr.mxu0 0.0
    %3424 = vmatpush1.msra.mxu0 0.0
    %3425 = vmatprep.subr.mxu0 0.0
    %3426 = vmatpush1.msra.mxu0 0.0
    %3427 = vmatprep.subr.mxu0 0.0
    %3428 = vmatpush1.msra.mxu0 0.0
    %3429 = vmatprep.subr.mxu0 0.0
    %3430 = vmatpush1.msra.mxu0 0.0
    %3431 = vmatprep.subr.mxu0 0.0
    %3432 = vmatpush1.msra.mxu0 0.0
    %3433 = vmatprep.subr.mxu0 0.0
    %3434 = vmatpush1.msra.mxu0 0.0
    %3435 = vmatprep.subr.mxu0 0.0
    %3436 = vmatpush1.msra.mxu0 0.0
    %3437 = vmatprep.subr.mxu0 0.0
    %3438 = vmatpush1.msra.mxu0 0.0
    %3439 = vmatprep.subr.mxu0 0.0
    %3440 = vmatpush1.msra.mxu0 0.0
    %3441 = vmatprep.subr.mxu0 0.0
    %3442 = vmatpush1.msra.mxu0 0.0
    %3443 = vmatprep.subr.mxu0 0.0
    %3444 = vmatpush1.msra.mxu0 0.0
    %3445 = vmatprep.subr.mxu0 0.0
    %3446 = vmatpush1.msra.mxu0 0.0
    %3447 = vmatprep.subr.mxu0 0.0
    %3448 = vmatpush1.msra.mxu0 0.0
    %3449 = vmatprep.subr.mxu0 0.0
    %3450 = vmatpush1.msra.mxu0 0.0
    %3451 = vmatprep.subr.mxu0 0.0
    %3452 = vmatpush1.msra.mxu0 0.0
    %3453 = vmatprep.subr.mxu0 0.0
    %3454 = vmatpush1.msra.mxu0 0.0
    %3455 = vmatprep.subr.mxu0 0.0
    %3456 = vmatpush1.msra.mxu0 0.0
    %3457 = vmatprep.mubr.f32.mxu0 0.0
    %3458 = vmatmul.mubr.f32.gmra.mrb[0].mxu0 %v3309
    %v3459 = vpop.f32.mrb[0].mxu0
    %v3460 = vadd.f32 0.0, %v3459
    %v3461 = vpop.f32.mrb[0].mxu0
    %3462 = vdwg.mxu0
    %v3464 = vrot.slane %v3460, 4
    %v3466 = vadd.f32 %v310, %v3464
    %v3467 = vxor.u32 %v3466, 2147483648
    %v3468 = vmul.f32 %v3467, 1.442695
    %v3469 = vpow.pop %v3468
    %v3470 = vadd.f32 %v3469, 1.0
    %v3471 = vrcp.pop %v3470
    %v3472 = vmul.f32 1.0, %v3471
    %3473 = vmatprep.subr.mxu0 0.0
    %3474 = vmatpush1.msra.mxu0 %v338
    %3475 = vmatprep.subr.mxu0 0.0
    %3476 = vmatpush1.msra.mxu0 %v339
    %3477 = vmatprep.subr.mxu0 0.0
    %3478 = vmatpush1.msra.mxu0 %v340
    %3479 = vmatprep.subr.mxu0 0.0
    %3480 = vmatpush1.msra.mxu0 %v341
    %3481 = vmatprep.subr.mxu0 0.0
    %3482 = vmatpush1.msra.mxu0 0.0
    %3483 = vmatprep.subr.mxu0 0.0
    %3484 = vmatpush1.msra.mxu0 0.0
    %3485 = vmatprep.subr.mxu0 0.0
    %3486 = vmatpush1.msra.mxu0 0.0
    %3487 = vmatprep.subr.mxu0 0.0
    %3488 = vmatpush1.msra.mxu0 0.0
    %3489 = vmatprep.subr.mxu0 0.0
    %3490 = vmatpush1.msra.mxu0 0.0
    %3491 = vmatprep.subr.mxu0 0.0
    %3492 = vmatpush1.msra.mxu0 0.0
    %3493 = vmatprep.subr.mxu0 0.0
    %3494 = vmatpush1.msra.mxu0 0.0
    %3495 = vmatprep.subr.mxu0 0.0
    %3496 = vmatpush1.msra.mxu0 0.0
    %3497 = vmatprep.subr.mxu0 0.0
    %3498 = vmatpush1.msra.mxu0 0.0
    %3499 = vmatprep.subr.mxu0 0.0
    %3500 = vmatpush1.msra.mxu0 0.0
    %3501 = vmatprep.subr.mxu0 0.0
    %3502 = vmatpush1.msra.mxu0 0.0
    %3503 = vmatprep.subr.mxu0 0.0
    %3504 = vmatpush1.msra.mxu0 0.0
    %3505 = vmatprep.subr.mxu0 0.0
    %3506 = vmatpush1.msra.mxu0 0.0
    %3507 = vmatprep.subr.mxu0 0.0
    %3508 = vmatpush1.msra.mxu0 0.0
    %3509 = vmatprep.subr.mxu0 0.0
    %3510 = vmatpush1.msra.mxu0 0.0
    %3511 = vmatprep.subr.mxu0 0.0
    %3512 = vmatpush1.msra.mxu0 0.0
    %3513 = vmatprep.subr.mxu0 0.0
    %3514 = vmatpush1.msra.mxu0 0.0
    %3515 = vmatprep.subr.mxu0 0.0
    %3516 = vmatpush1.msra.mxu0 0.0
    %3517 = vmatprep.subr.mxu0 0.0
    %3518 = vmatpush1.msra.mxu0 0.0
    %3519 = vmatprep.subr.mxu0 0.0
    %3520 = vmatpush1.msra.mxu0 0.0
    %3521 = vmatprep.subr.mxu0 0.0
    %3522 = vmatpush1.msra.mxu0 0.0
    %3523 = vmatprep.subr.mxu0 0.0
    %3524 = vmatpush1.msra.mxu0 0.0
    %3525 = vmatprep.subr.mxu0 0.0
    %3526 = vmatpush1.msra.mxu0 0.0
    %3527 = vmatprep.subr.mxu0 0.0
    %3528 = vmatpush1.msra.mxu0 0.0
    %3529 = vmatprep.subr.mxu0 0.0
    %3530 = vmatpush1.msra.mxu0 0.0
    %3531 = vmatprep.subr.mxu0 0.0
    %3532 = vmatpush1.msra.mxu0 0.0
    %3533 = vmatprep.subr.mxu0 0.0
    %3534 = vmatpush1.msra.mxu0 0.0
    %3535 = vmatprep.subr.mxu0 0.0
    %3536 = vmatpush1.msra.mxu0 0.0
    %3537 = vmatprep.mubr.f32.mxu0 0.0
    %3538 = vmatmul.mubr.f32.gmra.mrb[0].mxu0 %v3309
    %v3539 = vpop.f32.mrb[0].mxu0
    %v3540 = vadd.f32 %v354, %v3539
    %v3541 = vpop.f32.mrb[0].mxu0
    %3542 = vdwg.mxu0
    %v3544 = vrot.slane %v3540, 4
    %3545 = vrot.lane.b32.xlu0 %v3544, 96
    %v3546 = vpop.permute.xlu0 %3545
    %v3548 = vmul.f32 %v3392, %v3546
    %3550 = vrot.lane.b32.xlu0 %v3548, 64
    %v3551 = vpop.permute.xlu0 %3550
    %v3553 = vadd.f32 %v310, %v3551
    %v3554 = vtanh.pop %v3553
    %v3555 = vsub.f32 1.0, %v3472
    %3557 = vrot.lane.b32.xlu0 %v3554, 96
    %v3558 = vpop.permute.xlu0 %3557
    %v3560 = vmul.f32 %v3555, %v3558
    %v3561 = vrot.slane %v3037, 2
    %v3563 = vmul.f32 %v3472, %v3561
    %v3564 = vadd.f32 %v3560, %v3563
    %v3566 = vrot.slane %v3040, 6
    %v3568 = vsub.f32 %v3306, %v3566
    %v3570 = vrot.slane %v3568, 2
    %3571 = vrot.lane.b32.xlu0 %v3570, 96
    %v3572 = vpop.permute.xlu0 %3571
    %v3574 = vmul.f32 %v1980, %v3572
    %3576 = vrot.lane.b32.xlu0 %v3574, 32
    %v3577 = vpop.permute.xlu0 %3576
    %v3579 = vadd.f32 %v3040, %v3577
    %v3581 = vrot.slane %v3049, 4
    %v3583 = vsub.f32 %v3564, %v3581
    %v3585 = vrot.slane %v3583, 4
    %v3587 = vmul.f32 %v1960, %v3585
    %v3588 = vadd.f32 %v3049, %v3587
    %v3590 = vrot.slane %v3306, 2
    %3591 = vrot.lane.b32.xlu0 %v3590, 96
    %v3592 = vpop.permute.xlu0 %3591
    %v3593 = vsel %vm234, %v3592, 0
    %3595 = vmatprep.subr.mxu0 0.0
    %3596 = vmatpush1.msra.mxu0 %v318
    %3597 = vmatprep.subr.mxu0 0.0
    %3598 = vmatpush1.msra.mxu0 %v319
    %3599 = vmatprep.subr.mxu0 0.0
    %3600 = vmatpush1.msra.mxu0 %v320
    %3601 = vmatprep.subr.mxu0 0.0
    %3602 = vmatpush1.msra.mxu0 %v321
    %3603 = vmatprep.subr.mxu0 0.0
    %3604 = vmatpush1.msra.mxu0 0.0
    %3605 = vmatprep.subr.mxu0 0.0
    %3606 = vmatpush1.msra.mxu0 0.0
    %3607 = vmatprep.subr.mxu0 0.0
    %3608 = vmatpush1.msra.mxu0 0.0
    %3609 = vmatprep.subr.mxu0 0.0
    %3610 = vmatpush1.msra.mxu0 0.0
    %3611 = vmatprep.subr.mxu0 0.0
    %3612 = vmatpush1.msra.mxu0 0.0
    %3613 = vmatprep.subr.mxu0 0.0
    %3614 = vmatpush1.msra.mxu0 0.0
    %3615 = vmatprep.subr.mxu0 0.0
    %3616 = vmatpush1.msra.mxu0 0.0
    %3617 = vmatprep.subr.mxu0 0.0
    %3618 = vmatpush1.msra.mxu0 0.0
    %3619 = vmatprep.subr.mxu0 0.0
    %3620 = vmatpush1.msra.mxu0 0.0
    %3621 = vmatprep.subr.mxu0 0.0
    %3622 = vmatpush1.msra.mxu0 0.0
    %3623 = vmatprep.subr.mxu0 0.0
    %3624 = vmatpush1.msra.mxu0 0.0
    %3625 = vmatprep.subr.mxu0 0.0
    %3626 = vmatpush1.msra.mxu0 0.0
    %3627 = vmatprep.subr.mxu0 0.0
    %3628 = vmatpush1.msra.mxu0 0.0
    %3629 = vmatprep.subr.mxu0 0.0
    %3630 = vmatpush1.msra.mxu0 0.0
    %3631 = vmatprep.subr.mxu0 0.0
    %3632 = vmatpush1.msra.mxu0 0.0
    %3633 = vmatprep.subr.mxu0 0.0
    %3634 = vmatpush1.msra.mxu0 0.0
    %3635 = vmatprep.subr.mxu0 0.0
    %3636 = vmatpush1.msra.mxu0 0.0
    %3637 = vmatprep.subr.mxu0 0.0
    %3638 = vmatpush1.msra.mxu0 0.0
    %3639 = vmatprep.subr.mxu0 0.0
    %3640 = vmatpush1.msra.mxu0 0.0
    %3641 = vmatprep.subr.mxu0 0.0
    %3642 = vmatpush1.msra.mxu0 0.0
    %3643 = vmatprep.subr.mxu0 0.0
    %3644 = vmatpush1.msra.mxu0 0.0
    %3645 = vmatprep.subr.mxu0 0.0
    %3646 = vmatpush1.msra.mxu0 0.0
    %3647 = vmatprep.subr.mxu0 0.0
    %3648 = vmatpush1.msra.mxu0 0.0
    %3649 = vmatprep.subr.mxu0 0.0
    %3650 = vmatpush1.msra.mxu0 0.0
    %3651 = vmatprep.subr.mxu0 0.0
    %3652 = vmatpush1.msra.mxu0 0.0
    %3653 = vmatprep.subr.mxu0 0.0
    %3654 = vmatpush1.msra.mxu0 0.0
    %3655 = vmatprep.subr.mxu0 0.0
    %3656 = vmatpush1.msra.mxu0 0.0
    %3657 = vmatprep.subr.mxu0 0.0
    %3658 = vmatpush1.msra.mxu0 0.0
    %3659 = vmatprep.mubr.f32.mxu0 0.0
    %3660 = vmatmul.mubr.f32.gmra.mrb[0].mxu0 %v3593
    %v3661 = vpop.f32.mrb[0].mxu0
    %v3662 = vadd.f32 0.0, %v3661
    %v3663 = vpop.f32.mrb[0].mxu0
    %3664 = vdwg.mxu0
    %v3666 = vrot.slane %v3662, 4
    %v3668 = vadd.f32 %v314, %v3666
    %v3669 = vxor.u32 %v3668, 2147483648
    %v3670 = vmul.f32 %v3669, 1.442695
    %v3671 = vpow.pop %v3670
    %v3672 = vadd.f32 %v3671, 1.0
    %v3673 = vrcp.pop %v3672
    %v3674 = vmul.f32 1.0, %v3673
    %3675 = vmatprep.subr.mxu0 0.0
    %3676 = vmatpush1.msra.mxu0 %v322
    %3677 = vmatprep.subr.mxu0 0.0
    %3678 = vmatpush1.msra.mxu0 %v323
    %3679 = vmatprep.subr.mxu0 0.0
    %3680 = vmatpush1.msra.mxu0 %v324
    %3681 = vmatprep.subr.mxu0 0.0
    %3682 = vmatpush1.msra.mxu0 %v325
    %3683 = vmatprep.subr.mxu0 0.0
    %3684 = vmatpush1.msra.mxu0 0.0
    %3685 = vmatprep.subr.mxu0 0.0
    %3686 = vmatpush1.msra.mxu0 0.0
    %3687 = vmatprep.subr.mxu0 0.0
    %3688 = vmatpush1.msra.mxu0 0.0
    %3689 = vmatprep.subr.mxu0 0.0
    %3690 = vmatpush1.msra.mxu0 0.0
    %3691 = vmatprep.subr.mxu0 0.0
    %3692 = vmatpush1.msra.mxu0 0.0
    %3693 = vmatprep.subr.mxu0 0.0
    %3694 = vmatpush1.msra.mxu0 0.0
    %3695 = vmatprep.subr.mxu0 0.0
    %3696 = vmatpush1.msra.mxu0 0.0
    %3697 = vmatprep.subr.mxu0 0.0
    %3698 = vmatpush1.msra.mxu0 0.0
    %3699 = vmatprep.subr.mxu0 0.0
    %3700 = vmatpush1.msra.mxu0 0.0
    %3701 = vmatprep.subr.mxu0 0.0
    %3702 = vmatpush1.msra.mxu0 0.0
    %3703 = vmatprep.subr.mxu0 0.0
    %3704 = vmatpush1.msra.mxu0 0.0
    %3705 = vmatprep.subr.mxu0 0.0
    %3706 = vmatpush1.msra.mxu0 0.0
    %3707 = vmatprep.subr.mxu0 0.0
    %3708 = vmatpush1.msra.mxu0 0.0
    %3709 = vmatprep.subr.mxu0 0.0
    %3710 = vmatpush1.msra.mxu0 0.0
    %3711 = vmatprep.subr.mxu0 0.0
    %3712 = vmatpush1.msra.mxu0 0.0
    %3713 = vmatprep.subr.mxu0 0.0
    %3714 = vmatpush1.msra.mxu0 0.0
    %3715 = vmatprep.subr.mxu0 0.0
    %3716 = vmatpush1.msra.mxu0 0.0
    %3717 = vmatprep.subr.mxu0 0.0
    %3718 = vmatpush1.msra.mxu0 0.0
    %3719 = vmatprep.subr.mxu0 0.0
    %3720 = vmatpush1.msra.mxu0 0.0
    %3721 = vmatprep.subr.mxu0 0.0
    %3722 = vmatpush1.msra.mxu0 0.0
    %3723 = vmatprep.subr.mxu0 0.0
    %3724 = vmatpush1.msra.mxu0 0.0
    %3725 = vmatprep.subr.mxu0 0.0
    %3726 = vmatpush1.msra.mxu0 0.0
    %3727 = vmatprep.subr.mxu0 0.0
    %3728 = vmatpush1.msra.mxu0 0.0
    %3729 = vmatprep.subr.mxu0 0.0
    %3730 = vmatpush1.msra.mxu0 0.0
    %3731 = vmatprep.subr.mxu0 0.0
    %3732 = vmatpush1.msra.mxu0 0.0
    %3733 = vmatprep.subr.mxu0 0.0
    %3734 = vmatpush1.msra.mxu0 0.0
    %3735 = vmatprep.subr.mxu0 0.0
    %3736 = vmatpush1.msra.mxu0 0.0
    %3737 = vmatprep.subr.mxu0 0.0
    %3738 = vmatpush1.msra.mxu0 0.0
    %3739 = vmatprep.mubr.f32.mxu0 0.0
    %3740 = vmatmul.mubr.f32.gmra.mrb[0].mxu0 %v3593
    %v3741 = vpop.f32.mrb[0].mxu0
    %v3742 = vadd.f32 0.0, %v3741
    %v3743 = vpop.f32.mrb[0].mxu0
    %3744 = vdwg.mxu0
    %v3746 = vrot.slane %v3742, 4
    %3747 = vrot.lane.b32.xlu0 %v3746, 32
    %v3748 = vpop.permute.xlu0 %3747
    %v3750 = vadd.f32 %v314, %v3748
    %v3751 = vxor.u32 %v3750, 2147483648
    %v3752 = vmul.f32 %v3751, 1.442695
    %v3753 = vpow.pop %v3752
    %v3754 = vadd.f32 %v3753, 1.0
    %v3755 = vrcp.pop %v3754
    %v3756 = vmul.f32 1.0, %v3755
    %3757 = vmatprep.subr.mxu0 0.0
    %3758 = vmatpush1.msra.mxu0 %v326
    %3759 = vmatprep.subr.mxu0 0.0
    %3760 = vmatpush1.msra.mxu0 %v327
    %3761 = vmatprep.subr.mxu0 0.0
    %3762 = vmatpush1.msra.mxu0 %v328
    %3763 = vmatprep.subr.mxu0 0.0
    %3764 = vmatpush1.msra.mxu0 %v329
    %3765 = vmatprep.subr.mxu0 0.0
    %3766 = vmatpush1.msra.mxu0 0.0
    %3767 = vmatprep.subr.mxu0 0.0
    %3768 = vmatpush1.msra.mxu0 0.0
    %3769 = vmatprep.subr.mxu0 0.0
    %3770 = vmatpush1.msra.mxu0 0.0
    %3771 = vmatprep.subr.mxu0 0.0
    %3772 = vmatpush1.msra.mxu0 0.0
    %3773 = vmatprep.subr.mxu0 0.0
    %3774 = vmatpush1.msra.mxu0 0.0
    %3775 = vmatprep.subr.mxu0 0.0
    %3776 = vmatpush1.msra.mxu0 0.0
    %3777 = vmatprep.subr.mxu0 0.0
    %3778 = vmatpush1.msra.mxu0 0.0
    %3779 = vmatprep.subr.mxu0 0.0
    %3780 = vmatpush1.msra.mxu0 0.0
    %3781 = vmatprep.subr.mxu0 0.0
    %3782 = vmatpush1.msra.mxu0 0.0
    %3783 = vmatprep.subr.mxu0 0.0
    %3784 = vmatpush1.msra.mxu0 0.0
    %3785 = vmatprep.subr.mxu0 0.0
    %3786 = vmatpush1.msra.mxu0 0.0
    %3787 = vmatprep.subr.mxu0 0.0
    %3788 = vmatpush1.msra.mxu0 0.0
    %3789 = vmatprep.subr.mxu0 0.0
    %3790 = vmatpush1.msra.mxu0 0.0
    %3791 = vmatprep.subr.mxu0 0.0
    %3792 = vmatpush1.msra.mxu0 0.0
    %3793 = vmatprep.subr.mxu0 0.0
    %3794 = vmatpush1.msra.mxu0 0.0
    %3795 = vmatprep.subr.mxu0 0.0
    %3796 = vmatpush1.msra.mxu0 0.0
    %3797 = vmatprep.subr.mxu0 0.0
    %3798 = vmatpush1.msra.mxu0 0.0
    %3799 = vmatprep.subr.mxu0 0.0
    %3800 = vmatpush1.msra.mxu0 0.0
    %3801 = vmatprep.subr.mxu0 0.0
    %3802 = vmatpush1.msra.mxu0 0.0
    %3803 = vmatprep.subr.mxu0 0.0
    %3804 = vmatpush1.msra.mxu0 0.0
    %3805 = vmatprep.subr.mxu0 0.0
    %3806 = vmatpush1.msra.mxu0 0.0
    %3807 = vmatprep.subr.mxu0 0.0
    %3808 = vmatpush1.msra.mxu0 0.0
    %3809 = vmatprep.subr.mxu0 0.0
    %3810 = vmatpush1.msra.mxu0 0.0
    %3811 = vmatprep.subr.mxu0 0.0
    %3812 = vmatpush1.msra.mxu0 0.0
    %3813 = vmatprep.subr.mxu0 0.0
    %3814 = vmatpush1.msra.mxu0 0.0
    %3815 = vmatprep.subr.mxu0 0.0
    %3816 = vmatpush1.msra.mxu0 0.0
    %3817 = vmatprep.subr.mxu0 0.0
    %3818 = vmatpush1.msra.mxu0 0.0
    %3819 = vmatprep.subr.mxu0 0.0
    %3820 = vmatpush1.msra.mxu0 0.0
    %3821 = vmatprep.mubr.f32.mxu0 0.0
    %3822 = vmatmul.mubr.f32.gmra.mrb[0].mxu0 %v3593
    %v3823 = vpop.f32.mrb[0].mxu0
    %v3824 = vadd.f32 %v347, %v3823
    %v3825 = vpop.f32.mrb[0].mxu0
    %3826 = vdwg.mxu0
    %v3828 = vrot.slane %v3824, 4
    %v3830 = vmul.f32 %v3674, %v3828
    %3832 = vrot.lane.b32.xlu0 %v3830, 64
    %v3833 = vpop.permute.xlu0 %3832
    %v3835 = vadd.f32 %v314, %v3833
    %v3836 = vtanh.pop %v3835
    %v3837 = vsub.f32 1.0, %v3756
    %3839 = vrot.lane.b32.xlu0 %v3836, 96
    %v3840 = vpop.permute.xlu0 %3839
    %v3842 = vmul.f32 %v3837, %v3840
    %v3843 = vrot.slane %v3306, 6
    %v3845 = vmul.f32 %v3756, %v3843
    %v3846 = vadd.f32 %v3842, %v3845
    %v3848 = vrot.slane %v3564, 4
    %v3849 = vsel %vm234, %v3848, 0
    %3851 = vmatprep.subr.mxu0 0.0
    %3852 = vmatpush1.msra.mxu0 %v330
    %3853 = vmatprep.subr.mxu0 0.0
    %3854 = vmatpush1.msra.mxu0 %v331
    %3855 = vmatprep.subr.mxu0 0.0
    %3856 = vmatpush1.msra.mxu0 %v332
    %3857 = vmatprep.subr.mxu0 0.0
    %3858 = vmatpush1.msra.mxu0 %v333
    %3859 = vmatprep.subr.mxu0 0.0
    %3860 = vmatpush1.msra.mxu0 0.0
    %3861 = vmatprep.subr.mxu0 0.0
    %3862 = vmatpush1.msra.mxu0 0.0
    %3863 = vmatprep.subr.mxu0 0.0
    %3864 = vmatpush1.msra.mxu0 0.0
    %3865 = vmatprep.subr.mxu0 0.0
    %3866 = vmatpush1.msra.mxu0 0.0
    %3867 = vmatprep.subr.mxu0 0.0
    %3868 = vmatpush1.msra.mxu0 0.0
    %3869 = vmatprep.subr.mxu0 0.0
    %3870 = vmatpush1.msra.mxu0 0.0
    %3871 = vmatprep.subr.mxu0 0.0
    %3872 = vmatpush1.msra.mxu0 0.0
    %3873 = vmatprep.subr.mxu0 0.0
    %3874 = vmatpush1.msra.mxu0 0.0
    %3875 = vmatprep.subr.mxu0 0.0
    %3876 = vmatpush1.msra.mxu0 0.0
    %3877 = vmatprep.subr.mxu0 0.0
    %3878 = vmatpush1.msra.mxu0 0.0
    %3879 = vmatprep.subr.mxu0 0.0
    %3880 = vmatpush1.msra.mxu0 0.0
    %3881 = vmatprep.subr.mxu0 0.0
    %3882 = vmatpush1.msra.mxu0 0.0
    %3883 = vmatprep.subr.mxu0 0.0
    %3884 = vmatpush1.msra.mxu0 0.0
    %3885 = vmatprep.subr.mxu0 0.0
    %3886 = vmatpush1.msra.mxu0 0.0
    %3887 = vmatprep.subr.mxu0 0.0
    %3888 = vmatpush1.msra.mxu0 0.0
    %3889 = vmatprep.subr.mxu0 0.0
    %3890 = vmatpush1.msra.mxu0 0.0
    %3891 = vmatprep.subr.mxu0 0.0
    %3892 = vmatpush1.msra.mxu0 0.0
    %3893 = vmatprep.subr.mxu0 0.0
    %3894 = vmatpush1.msra.mxu0 0.0
    %3895 = vmatprep.subr.mxu0 0.0
    %3896 = vmatpush1.msra.mxu0 0.0
    %3897 = vmatprep.subr.mxu0 0.0
    %3898 = vmatpush1.msra.mxu0 0.0
    %3899 = vmatprep.subr.mxu0 0.0
    %3900 = vmatpush1.msra.mxu0 0.0
    %3901 = vmatprep.subr.mxu0 0.0
    %3902 = vmatpush1.msra.mxu0 0.0
    %3903 = vmatprep.subr.mxu0 0.0
    %3904 = vmatpush1.msra.mxu0 0.0
    %3905 = vmatprep.subr.mxu0 0.0
    %3906 = vmatpush1.msra.mxu0 0.0
    %3907 = vmatprep.subr.mxu0 0.0
    %3908 = vmatpush1.msra.mxu0 0.0
    %3909 = vmatprep.subr.mxu0 0.0
    %3910 = vmatpush1.msra.mxu0 0.0
    %3911 = vmatprep.subr.mxu0 0.0
    %3912 = vmatpush1.msra.mxu0 0.0
    %3913 = vmatprep.subr.mxu0 0.0
    %3914 = vmatpush1.msra.mxu0 0.0
    %3915 = vmatprep.mubr.f32.mxu0 0.0
    %3916 = vmatmul.mubr.f32.gmra.mrb[0].mxu0 %v3849
    %v3917 = vpop.f32.mrb[0].mxu0
    %v3918 = vadd.f32 0.0, %v3917
    %v3919 = vpop.f32.mrb[0].mxu0
    %3920 = vdwg.mxu0
    %v3922 = vrot.slane %v3918, 6
    %3923 = vrot.lane.b32.xlu0 %v3922, 96
    %v3924 = vpop.permute.xlu0 %3923
    %v3926 = vadd.f32 %v308, %v3924
    %v3927 = vxor.u32 %v3926, 2147483648
    %v3928 = vmul.f32 %v3927, 1.442695
    %v3929 = vpow.pop %v3928
    %v3930 = vadd.f32 %v3929, 1.0
    %v3931 = vrcp.pop %v3930
    %v3932 = vmul.f32 1.0, %v3931
    %3933 = vmatprep.subr.mxu0 0.0
    %3934 = vmatpush1.msra.mxu0 %v334
    %3935 = vmatprep.subr.mxu0 0.0
    %3936 = vmatpush1.msra.mxu0 %v335
    %3937 = vmatprep.subr.mxu0 0.0
    %3938 = vmatpush1.msra.mxu0 %v336
    %3939 = vmatprep.subr.mxu0 0.0
    %3940 = vmatpush1.msra.mxu0 %v337
    %3941 = vmatprep.subr.mxu0 0.0
    %3942 = vmatpush1.msra.mxu0 0.0
    %3943 = vmatprep.subr.mxu0 0.0
    %3944 = vmatpush1.msra.mxu0 0.0
    %3945 = vmatprep.subr.mxu0 0.0
    %3946 = vmatpush1.msra.mxu0 0.0
    %3947 = vmatprep.subr.mxu0 0.0
    %3948 = vmatpush1.msra.mxu0 0.0
    %3949 = vmatprep.subr.mxu0 0.0
    %3950 = vmatpush1.msra.mxu0 0.0
    %3951 = vmatprep.subr.mxu0 0.0
    %3952 = vmatpush1.msra.mxu0 0.0
    %3953 = vmatprep.subr.mxu0 0.0
    %3954 = vmatpush1.msra.mxu0 0.0
    %3955 = vmatprep.subr.mxu0 0.0
    %3956 = vmatpush1.msra.mxu0 0.0
    %3957 = vmatprep.subr.mxu0 0.0
    %3958 = vmatpush1.msra.mxu0 0.0
    %3959 = vmatprep.subr.mxu0 0.0
    %3960 = vmatpush1.msra.mxu0 0.0
    %3961 = vmatprep.subr.mxu0 0.0
    %3962 = vmatpush1.msra.mxu0 0.0
    %3963 = vmatprep.subr.mxu0 0.0
    %3964 = vmatpush1.msra.mxu0 0.0
    %3965 = vmatprep.subr.mxu0 0.0
    %3966 = vmatpush1.msra.mxu0 0.0
    %3967 = vmatprep.subr.mxu0 0.0
    %3968 = vmatpush1.msra.mxu0 0.0
    %3969 = vmatprep.subr.mxu0 0.0
    %3970 = vmatpush1.msra.mxu0 0.0
    %3971 = vmatprep.subr.mxu0 0.0
    %3972 = vmatpush1.msra.mxu0 0.0
    %3973 = vmatprep.subr.mxu0 0.0
    %3974 = vmatpush1.msra.mxu0 0.0
    %3975 = vmatprep.subr.mxu0 0.0
    %3976 = vmatpush1.msra.mxu0 0.0
    %3977 = vmatprep.subr.mxu0 0.0
    %3978 = vmatpush1.msra.mxu0 0.0
    %3979 = vmatprep.subr.mxu0 0.0
    %3980 = vmatpush1.msra.mxu0 0.0
    %3981 = vmatprep.subr.mxu0 0.0
    %3982 = vmatpush1.msra.mxu0 0.0
    %3983 = vmatprep.subr.mxu0 0.0
    %3984 = vmatpush1.msra.mxu0 0.0
    %3985 = vmatprep.subr.mxu0 0.0
    %3986 = vmatpush1.msra.mxu0 0.0
    %3987 = vmatprep.subr.mxu0 0.0
    %3988 = vmatpush1.msra.mxu0 0.0
    %3989 = vmatprep.subr.mxu0 0.0
    %3990 = vmatpush1.msra.mxu0 0.0
    %3991 = vmatprep.subr.mxu0 0.0
    %3992 = vmatpush1.msra.mxu0 0.0
    %3993 = vmatprep.subr.mxu0 0.0
    %3994 = vmatpush1.msra.mxu0 0.0
    %3995 = vmatprep.subr.mxu0 0.0
    %3996 = vmatpush1.msra.mxu0 0.0
    %3997 = vmatprep.mubr.f32.mxu0 0.0
    %3998 = vmatmul.mubr.f32.gmra.mrb[0].mxu0 %v3849
    %v3999 = vpop.f32.mrb[0].mxu0
    %v4000 = vadd.f32 0.0, %v3999
    %v4001 = vpop.f32.mrb[0].mxu0
    %4002 = vdwg.mxu0
    %v4004 = vrot.slane %v4000, 6
    %v4006 = vadd.f32 %v310, %v4004
    %v4007 = vxor.u32 %v4006, 2147483648
    %v4008 = vmul.f32 %v4007, 1.442695
    %v4009 = vpow.pop %v4008
    %v4010 = vadd.f32 %v4009, 1.0
    %v4011 = vrcp.pop %v4010
    %v4012 = vmul.f32 1.0, %v4011
    %4013 = vmatprep.subr.mxu0 0.0
    %4014 = vmatpush1.msra.mxu0 %v338
    %4015 = vmatprep.subr.mxu0 0.0
    %4016 = vmatpush1.msra.mxu0 %v339
    %4017 = vmatprep.subr.mxu0 0.0
    %4018 = vmatpush1.msra.mxu0 %v340
    %4019 = vmatprep.subr.mxu0 0.0
    %4020 = vmatpush1.msra.mxu0 %v341
    %4021 = vmatprep.subr.mxu0 0.0
    %4022 = vmatpush1.msra.mxu0 0.0
    %4023 = vmatprep.subr.mxu0 0.0
    %4024 = vmatpush1.msra.mxu0 0.0
    %4025 = vmatprep.subr.mxu0 0.0
    %4026 = vmatpush1.msra.mxu0 0.0
    %4027 = vmatprep.subr.mxu0 0.0
    %4028 = vmatpush1.msra.mxu0 0.0
    %4029 = vmatprep.subr.mxu0 0.0
    %4030 = vmatpush1.msra.mxu0 0.0
    %4031 = vmatprep.subr.mxu0 0.0
    %4032 = vmatpush1.msra.mxu0 0.0
    %4033 = vmatprep.subr.mxu0 0.0
    %4034 = vmatpush1.msra.mxu0 0.0
    %4035 = vmatprep.subr.mxu0 0.0
    %4036 = vmatpush1.msra.mxu0 0.0
    %4037 = vmatprep.subr.mxu0 0.0
    %4038 = vmatpush1.msra.mxu0 0.0
    %4039 = vmatprep.subr.mxu0 0.0
    %4040 = vmatpush1.msra.mxu0 0.0
    %4041 = vmatprep.subr.mxu0 0.0
    %4042 = vmatpush1.msra.mxu0 0.0
    %4043 = vmatprep.subr.mxu0 0.0
    %4044 = vmatpush1.msra.mxu0 0.0
    %4045 = vmatprep.subr.mxu0 0.0
    %4046 = vmatpush1.msra.mxu0 0.0
    %4047 = vmatprep.subr.mxu0 0.0
    %4048 = vmatpush1.msra.mxu0 0.0
    %4049 = vmatprep.subr.mxu0 0.0
    %4050 = vmatpush1.msra.mxu0 0.0
    %4051 = vmatprep.subr.mxu0 0.0
    %4052 = vmatpush1.msra.mxu0 0.0
    %4053 = vmatprep.subr.mxu0 0.0
    %4054 = vmatpush1.msra.mxu0 0.0
    %4055 = vmatprep.subr.mxu0 0.0
    %4056 = vmatpush1.msra.mxu0 0.0
    %4057 = vmatprep.subr.mxu0 0.0
    %4058 = vmatpush1.msra.mxu0 0.0
    %4059 = vmatprep.subr.mxu0 0.0
    %4060 = vmatpush1.msra.mxu0 0.0
    %4061 = vmatprep.subr.mxu0 0.0
    %4062 = vmatpush1.msra.mxu0 0.0
    %4063 = vmatprep.subr.mxu0 0.0
    %4064 = vmatpush1.msra.mxu0 0.0
    %4065 = vmatprep.subr.mxu0 0.0
    %4066 = vmatpush1.msra.mxu0 0.0
    %4067 = vmatprep.subr.mxu0 0.0
    %4068 = vmatpush1.msra.mxu0 0.0
    %4069 = vmatprep.subr.mxu0 0.0
    %4070 = vmatpush1.msra.mxu0 0.0
    %4071 = vmatprep.subr.mxu0 0.0
    %4072 = vmatpush1.msra.mxu0 0.0
    %4073 = vmatprep.subr.mxu0 0.0
    %4074 = vmatpush1.msra.mxu0 0.0
    %4075 = vmatprep.subr.mxu0 0.0
    %4076 = vmatpush1.msra.mxu0 0.0
    %4077 = vmatprep.mubr.f32.mxu0 0.0
    %4078 = vmatmul.mubr.f32.gmra.mrb[0].mxu0 %v3849
    %v4079 = vpop.f32.mrb[0].mxu0
    %v4080 = vadd.f32 %v354, %v4079
    %v4081 = vpop.f32.mrb[0].mxu0
    %4082 = vdwg.mxu0
    %v4084 = vrot.slane %v4080, 6
    %4085 = vrot.lane.b32.xlu0 %v4084, 96
    %v4086 = vpop.permute.xlu0 %4085
    %v4088 = vmul.f32 %v3932, %v4086
    %4090 = vrot.lane.b32.xlu0 %v4088, 64
    %v4091 = vpop.permute.xlu0 %4090
    %v4093 = vadd.f32 %v310, %v4091
    %v4094 = vtanh.pop %v4093
    %v4095 = vsub.f32 1.0, %v4012
    %4097 = vrot.lane.b32.xlu0 %v4094, 96
    %v4098 = vpop.permute.xlu0 %4097
    %v4100 = vmul.f32 %v4095, %v4098
    %v4101 = vrot.slane %v3564, 2
    %v4103 = vmul.f32 %v4012, %v4101
    %v4104 = vadd.f32 %v4100, %v4103
    %v4106 = vrot.slane %v3579, 4
    %v4108 = vsub.f32 %v3846, %v4106
    %v4110 = vrot.slane %v4108, 4
    %4111 = vrot.lane.b32.xlu0 %v4110, 96
    %v4112 = vpop.permute.xlu0 %4111
    %v4114 = vmul.f32 %v1424, %v4112
    %4116 = vrot.lane.b32.xlu0 %v4114, 32
    %v4117 = vpop.permute.xlu0 %4116
    %v4119 = vadd.f32 %v3579, %v4117
    %v4121 = vrot.slane %v3588, 6
    %v4123 = vsub.f32 %v4104, %v4121
    %v4125 = vrot.slane %v4123, 2
    %v4127 = vmul.f32 %v1404, %v4125
    %v4128 = vadd.f32 %v3588, %v4127
    %v4130 = vrot.slane %v3846, 4
    %4131 = vrot.lane.b32.xlu0 %v4130, 96
    %v4132 = vpop.permute.xlu0 %4131
    %v4133 = vsel %vm234, %v4132, 0
    %4135 = vmatprep.subr.mxu0 0.0
    %4136 = vmatpush1.msra.mxu0 %v318
    %4137 = vmatprep.subr.mxu0 0.0
    %4138 = vmatpush1.msra.mxu0 %v319
    %4139 = vmatprep.subr.mxu0 0.0
    %4140 = vmatpush1.msra.mxu0 %v320
    %4141 = vmatprep.subr.mxu0 0.0
    %4142 = vmatpush1.msra.mxu0 %v321
    %4143 = vmatprep.subr.mxu0 0.0
    %4144 = vmatpush1.msra.mxu0 0.0
    %4145 = vmatprep.subr.mxu0 0.0
    %4146 = vmatpush1.msra.mxu0 0.0
    %4147 = vmatprep.subr.mxu0 0.0
    %4148 = vmatpush1.msra.mxu0 0.0
    %4149 = vmatprep.subr.mxu0 0.0
    %4150 = vmatpush1.msra.mxu0 0.0
    %4151 = vmatprep.subr.mxu0 0.0
    %4152 = vmatpush1.msra.mxu0 0.0
    %4153 = vmatprep.subr.mxu0 0.0
    %4154 = vmatpush1.msra.mxu0 0.0
    %4155 = vmatprep.subr.mxu0 0.0
    %4156 = vmatpush1.msra.mxu0 0.0
    %4157 = vmatprep.subr.mxu0 0.0
    %4158 = vmatpush1.msra.mxu0 0.0
    %4159 = vmatprep.subr.mxu0 0.0
    %4160 = vmatpush1.msra.mxu0 0.0
    %4161 = vmatprep.subr.mxu0 0.0
    %4162 = vmatpush1.msra.mxu0 0.0
    %4163 = vmatprep.subr.mxu0 0.0
    %4164 = vmatpush1.msra.mxu0 0.0
    %4165 = vmatprep.subr.mxu0 0.0
    %4166 = vmatpush1.msra.mxu0 0.0
    %4167 = vmatprep.subr.mxu0 0.0
    %4168 = vmatpush1.msra.mxu0 0.0
    %4169 = vmatprep.subr.mxu0 0.0
    %4170 = vmatpush1.msra.mxu0 0.0
    %4171 = vmatprep.subr.mxu0 0.0
    %4172 = vmatpush1.msra.mxu0 0.0
    %4173 = vmatprep.subr.mxu0 0.0
    %4174 = vmatpush1.msra.mxu0 0.0
    %4175 = vmatprep.subr.mxu0 0.0
    %4176 = vmatpush1.msra.mxu0 0.0
    %4177 = vmatprep.subr.mxu0 0.0
    %4178 = vmatpush1.msra.mxu0 0.0
    %4179 = vmatprep.subr.mxu0 0.0
    %4180 = vmatpush1.msra.mxu0 0.0
    %4181 = vmatprep.subr.mxu0 0.0
    %4182 = vmatpush1.msra.mxu0 0.0
    %4183 = vmatprep.subr.mxu0 0.0
    %4184 = vmatpush1.msra.mxu0 0.0
    %4185 = vmatprep.subr.mxu0 0.0
    %4186 = vmatpush1.msra.mxu0 0.0
    %4187 = vmatprep.subr.mxu0 0.0
    %4188 = vmatpush1.msra.mxu0 0.0
    %4189 = vmatprep.subr.mxu0 0.0
    %4190 = vmatpush1.msra.mxu0 0.0
    %4191 = vmatprep.subr.mxu0 0.0
    %4192 = vmatpush1.msra.mxu0 0.0
    %4193 = vmatprep.subr.mxu0 0.0
    %4194 = vmatpush1.msra.mxu0 0.0
    %4195 = vmatprep.subr.mxu0 0.0
    %4196 = vmatpush1.msra.mxu0 0.0
    %4197 = vmatprep.subr.mxu0 0.0
    %4198 = vmatpush1.msra.mxu0 0.0
    %4199 = vmatprep.mubr.f32.mxu0 0.0
    %4200 = vmatmul.mubr.f32.gmra.mrb[0].mxu0 %v4133
    %v4201 = vpop.f32.mrb[0].mxu0
    %v4202 = vadd.f32 0.0, %v4201
    %v4203 = vpop.f32.mrb[0].mxu0
    %4204 = vdwg.mxu0
    %v4206 = vrot.slane %v4202, 2
    %v4208 = vadd.f32 %v314, %v4206
    %v4209 = vxor.u32 %v4208, 2147483648
    %v4210 = vmul.f32 %v4209, 1.442695
    %v4211 = vpow.pop %v4210
    %v4212 = vadd.f32 %v4211, 1.0
    %v4213 = vrcp.pop %v4212
    %v4214 = vmul.f32 1.0, %v4213
    %4215 = vmatprep.subr.mxu0 0.0
    %4216 = vmatpush1.msra.mxu0 %v322
    %4217 = vmatprep.subr.mxu0 0.0
    %4218 = vmatpush1.msra.mxu0 %v323
    %4219 = vmatprep.subr.mxu0 0.0
    %4220 = vmatpush1.msra.mxu0 %v324
    %4221 = vmatprep.subr.mxu0 0.0
    %4222 = vmatpush1.msra.mxu0 %v325
    %4223 = vmatprep.subr.mxu0 0.0
    %4224 = vmatpush1.msra.mxu0 0.0
    %4225 = vmatprep.subr.mxu0 0.0
    %4226 = vmatpush1.msra.mxu0 0.0
    %4227 = vmatprep.subr.mxu0 0.0
    %4228 = vmatpush1.msra.mxu0 0.0
    %4229 = vmatprep.subr.mxu0 0.0
    %4230 = vmatpush1.msra.mxu0 0.0
    %4231 = vmatprep.subr.mxu0 0.0
    %4232 = vmatpush1.msra.mxu0 0.0
    %4233 = vmatprep.subr.mxu0 0.0
    %4234 = vmatpush1.msra.mxu0 0.0
    %4235 = vmatprep.subr.mxu0 0.0
    %4236 = vmatpush1.msra.mxu0 0.0
    %4237 = vmatprep.subr.mxu0 0.0
    %4238 = vmatpush1.msra.mxu0 0.0
    %4239 = vmatprep.subr.mxu0 0.0
    %4240 = vmatpush1.msra.mxu0 0.0
    %4241 = vmatprep.subr.mxu0 0.0
    %4242 = vmatpush1.msra.mxu0 0.0
    %4243 = vmatprep.subr.mxu0 0.0
    %4244 = vmatpush1.msra.mxu0 0.0
    %4245 = vmatprep.subr.mxu0 0.0
    %4246 = vmatpush1.msra.mxu0 0.0
    %4247 = vmatprep.subr.mxu0 0.0
    %4248 = vmatpush1.msra.mxu0 0.0
    %4249 = vmatprep.subr.mxu0 0.0
    %4250 = vmatpush1.msra.mxu0 0.0
    %4251 = vmatprep.subr.mxu0 0.0
    %4252 = vmatpush1.msra.mxu0 0.0
    %4253 = vmatprep.subr.mxu0 0.0
    %4254 = vmatpush1.msra.mxu0 0.0
    %4255 = vmatprep.subr.mxu0 0.0
    %4256 = vmatpush1.msra.mxu0 0.0
    %4257 = vmatprep.subr.mxu0 0.0
    %4258 = vmatpush1.msra.mxu0 0.0
    %4259 = vmatprep.subr.mxu0 0.0
    %4260 = vmatpush1.msra.mxu0 0.0
    %4261 = vmatprep.subr.mxu0 0.0
    %4262 = vmatpush1.msra.mxu0 0.0
    %4263 = vmatprep.subr.mxu0 0.0
    %4264 = vmatpush1.msra.mxu0 0.0
    %4265 = vmatprep.subr.mxu0 0.0
    %4266 = vmatpush1.msra.mxu0 0.0
    %4267 = vmatprep.subr.mxu0 0.0
    %4268 = vmatpush1.msra.mxu0 0.0
    %4269 = vmatprep.subr.mxu0 0.0
    %4270 = vmatpush1.msra.mxu0 0.0
    %4271 = vmatprep.subr.mxu0 0.0
    %4272 = vmatpush1.msra.mxu0 0.0
    %4273 = vmatprep.subr.mxu0 0.0
    %4274 = vmatpush1.msra.mxu0 0.0
    %4275 = vmatprep.subr.mxu0 0.0
    %4276 = vmatpush1.msra.mxu0 0.0
    %4277 = vmatprep.subr.mxu0 0.0
    %4278 = vmatpush1.msra.mxu0 0.0
    %4279 = vmatprep.mubr.f32.mxu0 0.0
    %4280 = vmatmul.mubr.f32.gmra.mrb[0].mxu0 %v4133
    %v4281 = vpop.f32.mrb[0].mxu0
    %v4282 = vadd.f32 0.0, %v4281
    %v4283 = vpop.f32.mrb[0].mxu0
    %4284 = vdwg.mxu0
    %v4286 = vrot.slane %v4282, 2
    %4287 = vrot.lane.b32.xlu0 %v4286, 32
    %v4288 = vpop.permute.xlu0 %4287
    %v4290 = vadd.f32 %v314, %v4288
    %v4291 = vxor.u32 %v4290, 2147483648
    %v4292 = vmul.f32 %v4291, 1.442695
    %v4293 = vpow.pop %v4292
    %v4294 = vadd.f32 %v4293, 1.0
    %v4295 = vrcp.pop %v4294
    %v4296 = vmul.f32 1.0, %v4295
    %4297 = vmatprep.subr.mxu0 0.0
    %4298 = vmatpush1.msra.mxu0 %v326
    %4299 = vmatprep.subr.mxu0 0.0
    %4300 = vmatpush1.msra.mxu0 %v327
    %4301 = vmatprep.subr.mxu0 0.0
    %4302 = vmatpush1.msra.mxu0 %v328
    %4303 = vmatprep.subr.mxu0 0.0
    %4304 = vmatpush1.msra.mxu0 %v329
    %4305 = vmatprep.subr.mxu0 0.0
    %4306 = vmatpush1.msra.mxu0 0.0
    %4307 = vmatprep.subr.mxu0 0.0
    %4308 = vmatpush1.msra.mxu0 0.0
    %4309 = vmatprep.subr.mxu0 0.0
    %4310 = vmatpush1.msra.mxu0 0.0
    %4311 = vmatprep.subr.mxu0 0.0
    %4312 = vmatpush1.msra.mxu0 0.0
    %4313 = vmatprep.subr.mxu0 0.0
    %4314 = vmatpush1.msra.mxu0 0.0
    %4315 = vmatprep.subr.mxu0 0.0
    %4316 = vmatpush1.msra.mxu0 0.0
    %4317 = vmatprep.subr.mxu0 0.0
    %4318 = vmatpush1.msra.mxu0 0.0
    %4319 = vmatprep.subr.mxu0 0.0
    %4320 = vmatpush1.msra.mxu0 0.0
    %4321 = vmatprep.subr.mxu0 0.0
    %4322 = vmatpush1.msra.mxu0 0.0
    %4323 = vmatprep.subr.mxu0 0.0
    %4324 = vmatpush1.msra.mxu0 0.0
    %4325 = vmatprep.subr.mxu0 0.0
    %4326 = vmatpush1.msra.mxu0 0.0
    %4327 = vmatprep.subr.mxu0 0.0
    %4328 = vmatpush1.msra.mxu0 0.0
    %4329 = vmatprep.subr.mxu0 0.0
    %4330 = vmatpush1.msra.mxu0 0.0
    %4331 = vmatprep.subr.mxu0 0.0
    %4332 = vmatpush1.msra.mxu0 0.0
    %4333 = vmatprep.subr.mxu0 0.0
    %4334 = vmatpush1.msra.mxu0 0.0
    %4335 = vmatprep.subr.mxu0 0.0
    %4336 = vmatpush1.msra.mxu0 0.0
    %4337 = vmatprep.subr.mxu0 0.0
    %4338 = vmatpush1.msra.mxu0 0.0
    %4339 = vmatprep.subr.mxu0 0.0
    %4340 = vmatpush1.msra.mxu0 0.0
    %4341 = vmatprep.subr.mxu0 0.0
    %4342 = vmatpush1.msra.mxu0 0.0
    %4343 = vmatprep.subr.mxu0 0.0
    %4344 = vmatpush1.msra.mxu0 0.0
    %4345 = vmatprep.subr.mxu0 0.0
    %4346 = vmatpush1.msra.mxu0 0.0
    %4347 = vmatprep.subr.mxu0 0.0
    %4348 = vmatpush1.msra.mxu0 0.0
    %4349 = vmatprep.subr.mxu0 0.0
    %4350 = vmatpush1.msra.mxu0 0.0
    %4351 = vmatprep.subr.mxu0 0.0
    %4352 = vmatpush1.msra.mxu0 0.0
    %4353 = vmatprep.subr.mxu0 0.0
    %4354 = vmatpush1.msra.mxu0 0.0
    %4355 = vmatprep.subr.mxu0 0.0
    %4356 = vmatpush1.msra.mxu0 0.0
    %4357 = vmatprep.subr.mxu0 0.0
    %4358 = vmatpush1.msra.mxu0 0.0
    %4359 = vmatprep.subr.mxu0 0.0
    %4360 = vmatpush1.msra.mxu0 0.0
    %4361 = vmatprep.mubr.f32.mxu0 0.0
    %4362 = vmatmul.mubr.f32.gmra.mrb[0].mxu0 %v4133
    %v4363 = vpop.f32.mrb[0].mxu0
    %v4364 = vadd.f32 %v347, %v4363
    %v4365 = vpop.f32.mrb[0].mxu0
    %4366 = vdwg.mxu0
    %v4368 = vrot.slane %v4364, 2
    %v4370 = vmul.f32 %v4214, %v4368
    %4372 = vrot.lane.b32.xlu0 %v4370, 64
    %v4373 = vpop.permute.xlu0 %4372
    %v4375 = vadd.f32 %v314, %v4373
    %v4376 = vtanh.pop %v4375
    %v4377 = vsub.f32 1.0, %v4296
    %4379 = vrot.lane.b32.xlu0 %v4376, 96
    %v4380 = vpop.permute.xlu0 %4379
    %v4382 = vmul.f32 %v4377, %v4380
    %v4383 = vrot.slane %v3846, 6
    %v4385 = vmul.f32 %v4296, %v4383
    %v4386 = vadd.f32 %v4382, %v4385
    %v4388 = vrot.slane %v4104, 2
    %v4389 = vsel %vm234, %v4388, 0
    %4391 = vmatprep.subr.mxu0 0.0
    %4392 = vmatpush1.msra.mxu0 %v330
    %4393 = vmatprep.subr.mxu0 0.0
    %4394 = vmatpush1.msra.mxu0 %v331
    %4395 = vmatprep.subr.mxu0 0.0
    %4396 = vmatpush1.msra.mxu0 %v332
    %4397 = vmatprep.subr.mxu0 0.0
    %4398 = vmatpush1.msra.mxu0 %v333
    %4399 = vmatprep.subr.mxu0 0.0
    %4400 = vmatpush1.msra.mxu0 0.0
    %4401 = vmatprep.subr.mxu0 0.0
    %4402 = vmatpush1.msra.mxu0 0.0
    %4403 = vmatprep.subr.mxu0 0.0
    %4404 = vmatpush1.msra.mxu0 0.0
    %4405 = vmatprep.subr.mxu0 0.0
    %4406 = vmatpush1.msra.mxu0 0.0
    %4407 = vmatprep.subr.mxu0 0.0
    %4408 = vmatpush1.msra.mxu0 0.0
    %4409 = vmatprep.subr.mxu0 0.0
    %4410 = vmatpush1.msra.mxu0 0.0
    %4411 = vmatprep.subr.mxu0 0.0
    %4412 = vmatpush1.msra.mxu0 0.0
    %4413 = vmatprep.subr.mxu0 0.0
    %4414 = vmatpush1.msra.mxu0 0.0
    %4415 = vmatprep.subr.mxu0 0.0
    %4416 = vmatpush1.msra.mxu0 0.0
    %4417 = vmatprep.subr.mxu0 0.0
    %4418 = vmatpush1.msra.mxu0 0.0
    %4419 = vmatprep.subr.mxu0 0.0
    %4420 = vmatpush1.msra.mxu0 0.0
    %4421 = vmatprep.subr.mxu0 0.0
    %4422 = vmatpush1.msra.mxu0 0.0
    %4423 = vmatprep.subr.mxu0 0.0
    %4424 = vmatpush1.msra.mxu0 0.0
    %4425 = vmatprep.subr.mxu0 0.0
    %4426 = vmatpush1.msra.mxu0 0.0
    %4427 = vmatprep.subr.mxu0 0.0
    %4428 = vmatpush1.msra.mxu0 0.0
    %4429 = vmatprep.subr.mxu0 0.0
    %4430 = vmatpush1.msra.mxu0 0.0
    %4431 = vmatprep.subr.mxu0 0.0
    %4432 = vmatpush1.msra.mxu0 0.0
    %4433 = vmatprep.subr.mxu0 0.0
    %4434 = vmatpush1.msra.mxu0 0.0
    %4435 = vmatprep.subr.mxu0 0.0
    %4436 = vmatpush1.msra.mxu0 0.0
    %4437 = vmatprep.subr.mxu0 0.0
    %4438 = vmatpush1.msra.mxu0 0.0
    %4439 = vmatprep.subr.mxu0 0.0
    %4440 = vmatpush1.msra.mxu0 0.0
    %4441 = vmatprep.subr.mxu0 0.0
    %4442 = vmatpush1.msra.mxu0 0.0
    %4443 = vmatprep.subr.mxu0 0.0
    %4444 = vmatpush1.msra.mxu0 0.0
    %4445 = vmatprep.subr.mxu0 0.0
    %4446 = vmatpush1.msra.mxu0 0.0
    %4447 = vmatprep.subr.mxu0 0.0
    %4448 = vmatpush1.msra.mxu0 0.0
    %4449 = vmatprep.subr.mxu0 0.0
    %4450 = vmatpush1.msra.mxu0 0.0
    %4451 = vmatprep.subr.mxu0 0.0
    %4452 = vmatpush1.msra.mxu0 0.0
    %4453 = vmatprep.subr.mxu0 0.0
    %4454 = vmatpush1.msra.mxu0 0.0
    %4455 = vmatprep.mubr.f32.mxu0 0.0
    %4456 = vmatmul.mubr.f32.gmra.mrb[0].mxu0 %v4389
    %v4457 = vpop.f32.mrb[0].mxu0
    %v4458 = vadd.f32 0.0, %v4457
    %v4459 = vpop.f32.mrb[0].mxu0
    %4460 = vdwg.mxu0
    %4462 = vrot.lane.b32.xlu0 %v4458, 96
    %v4463 = vpop.permute.xlu0 %4462
    %v4465 = vadd.f32 %v308, %v4463
    %v4466 = vxor.u32 %v4465, 2147483648
    %v4467 = vmul.f32 %v4466, 1.442695
    %v4468 = vpow.pop %v4467
    %v4469 = vadd.f32 %v4468, 1.0
    %v4470 = vrcp.pop %v4469
    %v4471 = vmul.f32 1.0, %v4470
    %4472 = vmatprep.subr.mxu0 0.0
    %4473 = vmatpush1.msra.mxu0 %v334
    %4474 = vmatprep.subr.mxu0 0.0
    %4475 = vmatpush1.msra.mxu0 %v335
    %4476 = vmatprep.subr.mxu0 0.0
    %4477 = vmatpush1.msra.mxu0 %v336
    %4478 = vmatprep.subr.mxu0 0.0
    %4479 = vmatpush1.msra.mxu0 %v337
    %4480 = vmatprep.subr.mxu0 0.0
    %4481 = vmatpush1.msra.mxu0 0.0
    %4482 = vmatprep.subr.mxu0 0.0
    %4483 = vmatpush1.msra.mxu0 0.0
    %4484 = vmatprep.subr.mxu0 0.0
    %4485 = vmatpush1.msra.mxu0 0.0
    %4486 = vmatprep.subr.mxu0 0.0
    %4487 = vmatpush1.msra.mxu0 0.0
    %4488 = vmatprep.subr.mxu0 0.0
    %4489 = vmatpush1.msra.mxu0 0.0
    %4490 = vmatprep.subr.mxu0 0.0
    %4491 = vmatpush1.msra.mxu0 0.0
    %4492 = vmatprep.subr.mxu0 0.0
    %4493 = vmatpush1.msra.mxu0 0.0
    %4494 = vmatprep.subr.mxu0 0.0
    %4495 = vmatpush1.msra.mxu0 0.0
    %4496 = vmatprep.subr.mxu0 0.0
    %4497 = vmatpush1.msra.mxu0 0.0
    %4498 = vmatprep.subr.mxu0 0.0
    %4499 = vmatpush1.msra.mxu0 0.0
    %4500 = vmatprep.subr.mxu0 0.0
    %4501 = vmatpush1.msra.mxu0 0.0
    %4502 = vmatprep.subr.mxu0 0.0
    %4503 = vmatpush1.msra.mxu0 0.0
    %4504 = vmatprep.subr.mxu0 0.0
    %4505 = vmatpush1.msra.mxu0 0.0
    %4506 = vmatprep.subr.mxu0 0.0
    %4507 = vmatpush1.msra.mxu0 0.0
    %4508 = vmatprep.subr.mxu0 0.0
    %4509 = vmatpush1.msra.mxu0 0.0
    %4510 = vmatprep.subr.mxu0 0.0
    %4511 = vmatpush1.msra.mxu0 0.0
    %4512 = vmatprep.subr.mxu0 0.0
    %4513 = vmatpush1.msra.mxu0 0.0
    %4514 = vmatprep.subr.mxu0 0.0
    %4515 = vmatpush1.msra.mxu0 0.0
    %4516 = vmatprep.subr.mxu0 0.0
    %4517 = vmatpush1.msra.mxu0 0.0
    %4518 = vmatprep.subr.mxu0 0.0
    %4519 = vmatpush1.msra.mxu0 0.0
    %4520 = vmatprep.subr.mxu0 0.0
    %4521 = vmatpush1.msra.mxu0 0.0
    %4522 = vmatprep.subr.mxu0 0.0
    %4523 = vmatpush1.msra.mxu0 0.0
    %4524 = vmatprep.subr.mxu0 0.0
    %4525 = vmatpush1.msra.mxu0 0.0
    %4526 = vmatprep.subr.mxu0 0.0
    %4527 = vmatpush1.msra.mxu0 0.0
    %4528 = vmatprep.subr.mxu0 0.0
    %4529 = vmatpush1.msra.mxu0 0.0
    %4530 = vmatprep.subr.mxu0 0.0
    %4531 = vmatpush1.msra.mxu0 0.0
    %4532 = vmatprep.subr.mxu0 0.0
    %4533 = vmatpush1.msra.mxu0 0.0
    %4534 = vmatprep.subr.mxu0 0.0
    %4535 = vmatpush1.msra.mxu0 0.0
    %4536 = vmatprep.mubr.f32.mxu0 0.0
    %4537 = vmatmul.mubr.f32.gmra.mrb[0].mxu0 %v4389
    %v4538 = vpop.f32.mrb[0].mxu0
    %v4539 = vadd.f32 0.0, %v4538
    %v4540 = vpop.f32.mrb[0].mxu0
    %4541 = vdwg.mxu0
    %v4542 = vadd.f32 %v310, %v4539
    %v4543 = vxor.u32 %v4542, 2147483648
    %v4544 = vmul.f32 %v4543, 1.442695
    %v4545 = vpow.pop %v4544
    %v4546 = vadd.f32 %v4545, 1.0
    %v4547 = vrcp.pop %v4546
    %v4548 = vmul.f32 1.0, %v4547
    %4549 = vmatprep.subr.mxu0 0.0
    %4550 = vmatpush1.msra.mxu0 %v338
    %4551 = vmatprep.subr.mxu0 0.0
    %4552 = vmatpush1.msra.mxu0 %v339
    %4553 = vmatprep.subr.mxu0 0.0
    %4554 = vmatpush1.msra.mxu0 %v340
    %4555 = vmatprep.subr.mxu0 0.0
    %4556 = vmatpush1.msra.mxu0 %v341
    %4557 = vmatprep.subr.mxu0 0.0
    %4558 = vmatpush1.msra.mxu0 0.0
    %4559 = vmatprep.subr.mxu0 0.0
    %4560 = vmatpush1.msra.mxu0 0.0
    %4561 = vmatprep.subr.mxu0 0.0
    %4562 = vmatpush1.msra.mxu0 0.0
    %4563 = vmatprep.subr.mxu0 0.0
    %4564 = vmatpush1.msra.mxu0 0.0
    %4565 = vmatprep.subr.mxu0 0.0
    %4566 = vmatpush1.msra.mxu0 0.0
    %4567 = vmatprep.subr.mxu0 0.0
    %4568 = vmatpush1.msra.mxu0 0.0
    %4569 = vmatprep.subr.mxu0 0.0
    %4570 = vmatpush1.msra.mxu0 0.0
    %4571 = vmatprep.subr.mxu0 0.0
    %4572 = vmatpush1.msra.mxu0 0.0
    %4573 = vmatprep.subr.mxu0 0.0
    %4574 = vmatpush1.msra.mxu0 0.0
    %4575 = vmatprep.subr.mxu0 0.0
    %4576 = vmatpush1.msra.mxu0 0.0
    %4577 = vmatprep.subr.mxu0 0.0
    %4578 = vmatpush1.msra.mxu0 0.0
    %4579 = vmatprep.subr.mxu0 0.0
    %4580 = vmatpush1.msra.mxu0 0.0
    %4581 = vmatprep.subr.mxu0 0.0
    %4582 = vmatpush1.msra.mxu0 0.0
    %4583 = vmatprep.subr.mxu0 0.0
    %4584 = vmatpush1.msra.mxu0 0.0
    %4585 = vmatprep.subr.mxu0 0.0
    %4586 = vmatpush1.msra.mxu0 0.0
    %4587 = vmatprep.subr.mxu0 0.0
    %4588 = vmatpush1.msra.mxu0 0.0
    %4589 = vmatprep.subr.mxu0 0.0
    %4590 = vmatpush1.msra.mxu0 0.0
    %4591 = vmatprep.subr.mxu0 0.0
    %4592 = vmatpush1.msra.mxu0 0.0
    %4593 = vmatprep.subr.mxu0 0.0
    %4594 = vmatpush1.msra.mxu0 0.0
    %4595 = vmatprep.subr.mxu0 0.0
    %4596 = vmatpush1.msra.mxu0 0.0
    %4597 = vmatprep.subr.mxu0 0.0
    %4598 = vmatpush1.msra.mxu0 0.0
    %4599 = vmatprep.subr.mxu0 0.0
    %4600 = vmatpush1.msra.mxu0 0.0
    %4601 = vmatprep.subr.mxu0 0.0
    %4602 = vmatpush1.msra.mxu0 0.0
    %4603 = vmatprep.subr.mxu0 0.0
    %4604 = vmatpush1.msra.mxu0 0.0
    %4605 = vmatprep.subr.mxu0 0.0
    %4606 = vmatpush1.msra.mxu0 0.0
    %4607 = vmatprep.subr.mxu0 0.0
    %4608 = vmatpush1.msra.mxu0 0.0
    %4609 = vmatprep.subr.mxu0 0.0
    %4610 = vmatpush1.msra.mxu0 0.0
    %4611 = vmatprep.subr.mxu0 0.0
    %4612 = vmatpush1.msra.mxu0 0.0
    %4613 = vmatprep.mubr.f32.mxu0 0.0
    %4614 = vmatmul.mubr.f32.gmra.mrb[0].mxu0 %v4389
    %v4615 = vpop.f32.mrb[0].mxu0
    %v4616 = vadd.f32 %v354, %v4615
    %v4617 = vpop.f32.mrb[0].mxu0
    %4618 = vdwg.mxu0
    %4620 = vrot.lane.b32.xlu0 %v4616, 96
    %v4621 = vpop.permute.xlu0 %4620
    %v4623 = vmul.f32 %v4471, %v4621
    %4625 = vrot.lane.b32.xlu0 %v4623, 64
    %v4626 = vpop.permute.xlu0 %4625
    %v4628 = vadd.f32 %v310, %v4626
    %v4629 = vtanh.pop %v4628
    %v4630 = vsub.f32 1.0, %v4548
    %4632 = vrot.lane.b32.xlu0 %v4629, 96
    %v4633 = vpop.permute.xlu0 %4632
    %v4635 = vmul.f32 %v4630, %v4633
    %v4637 = vmul.f32 %v4548, %v4388
    %v4638 = vadd.f32 %v4635, %v4637
    %v4640 = vrot.slane %v4119, 2
    %v4642 = vsub.f32 %v4386, %v4640
    %v4644 = vrot.slane %v4642, 6
    %4645 = vrot.lane.b32.xlu0 %v4644, 96
    %v4646 = vpop.permute.xlu0 %4645
    %v4648 = vmul.f32 %v871, %v4646
    %4650 = vrot.lane.b32.xlu0 %v4648, 32
    %v4651 = vpop.permute.xlu0 %4650
    %v4653 = vadd.f32 %v4119, %v4651
    %v4654 = vsub.f32 %v4638, %v4128
    %v4655 = vmul.f32 %v864, %v4654
    %v4656 = vadd.f32 %v4128, %v4655
    %v4657 = vld [vmem:[%s14] sm:$0xff]
    %v4658 = vld [vmem:[%s14 + $0x8] sm:$0xff]
    %v4659 = vld [vmem:[%s14 + $0x10] sm:$0xff]
    %v4660 = vld [vmem:[%s14 + $0x18] sm:$0xff]
    %v4661 = vld [vmem:[%s15] sm:$0xff]
    %v4662 = vld [vmem:[%s15 + $0x8] sm:$0xff]
    %v4663 = vld [vmem:[%s15 + $0x10] sm:$0xff]
    %v4664 = vld [vmem:[%s15 + $0x18] sm:$0xff]
    %v4666 = vsel %vm234, %v4656, 0
    %4668 = vmatprep.subr.mxu0 0.0
    %4669 = vmatpush1.msra.mxu0 %v4661
    %4670 = vmatprep.subr.mxu0 0.0
    %4671 = vmatpush1.msra.mxu0 %v4662
    %4672 = vmatprep.subr.mxu0 0.0
    %4673 = vmatpush1.msra.mxu0 %v4663
    %4674 = vmatprep.subr.mxu0 0.0
    %4675 = vmatpush1.msra.mxu0 %v4664
    %4676 = vmatprep.subr.mxu0 0.0
    %4677 = vmatpush1.msra.mxu0 0.0
    %4678 = vmatprep.subr.mxu0 0.0
    %4679 = vmatpush1.msra.mxu0 0.0
    %4680 = vmatprep.subr.mxu0 0.0
    %4681 = vmatpush1.msra.mxu0 0.0
    %4682 = vmatprep.subr.mxu0 0.0
    %4683 = vmatpush1.msra.mxu0 0.0
    %4684 = vmatprep.subr.mxu0 0.0
    %4685 = vmatpush1.msra.mxu0 0.0
    %4686 = vmatprep.subr.mxu0 0.0
    %4687 = vmatpush1.msra.mxu0 0.0
    %4688 = vmatprep.subr.mxu0 0.0
    %4689 = vmatpush1.msra.mxu0 0.0
    %4690 = vmatprep.subr.mxu0 0.0
    %4691 = vmatpush1.msra.mxu0 0.0
    %4692 = vmatprep.subr.mxu0 0.0
    %4693 = vmatpush1.msra.mxu0 0.0
    %4694 = vmatprep.subr.mxu0 0.0
    %4695 = vmatpush1.msra.mxu0 0.0
    %4696 = vmatprep.subr.mxu0 0.0
    %4697 = vmatpush1.msra.mxu0 0.0
    %4698 = vmatprep.subr.mxu0 0.0
    %4699 = vmatpush1.msra.mxu0 0.0
    %4700 = vmatprep.subr.mxu0 0.0
    %4701 = vmatpush1.msra.mxu0 0.0
    %4702 = vmatprep.subr.mxu0 0.0
    %4703 = vmatpush1.msra.mxu0 0.0
    %4704 = vmatprep.subr.mxu0 0.0
    %4705 = vmatpush1.msra.mxu0 0.0
    %4706 = vmatprep.subr.mxu0 0.0
    %4707 = vmatpush1.msra.mxu0 0.0
    %4708 = vmatprep.subr.mxu0 0.0
    %4709 = vmatpush1.msra.mxu0 0.0
    %4710 = vmatprep.subr.mxu0 0.0
    %4711 = vmatpush1.msra.mxu0 0.0
    %4712 = vmatprep.subr.mxu0 0.0
    %4713 = vmatpush1.msra.mxu0 0.0
    %4714 = vmatprep.subr.mxu0 0.0
    %4715 = vmatpush1.msra.mxu0 0.0
    %4716 = vmatprep.subr.mxu0 0.0
    %4717 = vmatpush1.msra.mxu0 0.0
    %4718 = vmatprep.subr.mxu0 0.0
    %4719 = vmatpush1.msra.mxu0 0.0
    %4720 = vmatprep.subr.mxu0 0.0
    %4721 = vmatpush1.msra.mxu0 0.0
    %4722 = vmatprep.subr.mxu0 0.0
    %4723 = vmatpush1.msra.mxu0 0.0
    %4724 = vmatprep.subr.mxu0 0.0
    %4725 = vmatpush1.msra.mxu0 0.0
    %4726 = vmatprep.subr.mxu0 0.0
    %4727 = vmatpush1.msra.mxu0 0.0
    %4728 = vmatprep.subr.mxu0 0.0
    %4729 = vmatpush1.msra.mxu0 0.0
    %4730 = vmatprep.subr.mxu0 0.0
    %4731 = vmatpush1.msra.mxu0 0.0
    %4732 = vmatprep.mubr.f32.mxu0 0.0
    %4733 = vmatmul.mubr.f32.gmra.mrb[0].mxu0 %v4666
    %v4734 = vpop.f32.mrb[0].mxu0
    %v4735 = vadd.f32 0.0, %v4734
    %v4736 = vpop.f32.mrb[0].mxu0
    %4737 = vdwg.mxu0
    %4739 = vrot.lane.b32.xlu0 %v4653, 96
    %v4740 = vpop.permute.xlu0 %4739
    %v4741 = vsel %vm234, %v4740, 0
    %4743 = vmatprep.subr.mxu0 0.0
    %4744 = vmatpush1.msra.mxu0 %v4657
    %4745 = vmatprep.subr.mxu0 0.0
    %4746 = vmatpush1.msra.mxu0 %v4658
    %4747 = vmatprep.subr.mxu0 0.0
    %4748 = vmatpush1.msra.mxu0 %v4659
    %4749 = vmatprep.subr.mxu0 0.0
    %4750 = vmatpush1.msra.mxu0 %v4660
    %4751 = vmatprep.subr.mxu0 0.0
    %4752 = vmatpush1.msra.mxu0 0.0
    %4753 = vmatprep.subr.mxu0 0.0
    %4754 = vmatpush1.msra.mxu0 0.0
    %4755 = vmatprep.subr.mxu0 0.0
    %4756 = vmatpush1.msra.mxu0 0.0
    %4757 = vmatprep.subr.mxu0 0.0
    %4758 = vmatpush1.msra.mxu0 0.0
    %4759 = vmatprep.subr.mxu0 0.0
    %4760 = vmatpush1.msra.mxu0 0.0
    %4761 = vmatprep.subr.mxu0 0.0
    %4762 = vmatpush1.msra.mxu0 0.0
    %4763 = vmatprep.subr.mxu0 0.0
    %4764 = vmatpush1.msra.mxu0 0.0
    %4765 = vmatprep.subr.mxu0 0.0
    %4766 = vmatpush1.msra.mxu0 0.0
    %4767 = vmatprep.subr.mxu0 0.0
    %4768 = vmatpush1.msra.mxu0 0.0
    %4769 = vmatprep.subr.mxu0 0.0
    %4770 = vmatpush1.msra.mxu0 0.0
    %4771 = vmatprep.subr.mxu0 0.0
    %4772 = vmatpush1.msra.mxu0 0.0
    %4773 = vmatprep.subr.mxu0 0.0
    %4774 = vmatpush1.msra.mxu0 0.0
    %4775 = vmatprep.subr.mxu0 0.0
    %4776 = vmatpush1.msra.mxu0 0.0
    %4777 = vmatprep.subr.mxu0 0.0
    %4778 = vmatpush1.msra.mxu0 0.0
    %4779 = vmatprep.subr.mxu0 0.0
    %4780 = vmatpush1.msra.mxu0 0.0
    %4781 = vmatprep.subr.mxu0 0.0
    %4782 = vmatpush1.msra.mxu0 0.0
    %4783 = vmatprep.subr.mxu0 0.0
    %4784 = vmatpush1.msra.mxu0 0.0
    %4785 = vmatprep.subr.mxu0 0.0
    %4786 = vmatpush1.msra.mxu0 0.0
    %4787 = vmatprep.subr.mxu0 0.0
    %4788 = vmatpush1.msra.mxu0 0.0
    %4789 = vmatprep.subr.mxu0 0.0
    %4790 = vmatpush1.msra.mxu0 0.0
    %4791 = vmatprep.subr.mxu0 0.0
    %4792 = vmatpush1.msra.mxu0 0.0
    %4793 = vmatprep.subr.mxu0 0.0
    %4794 = vmatpush1.msra.mxu0 0.0
    %4795 = vmatprep.subr.mxu0 0.0
    %4796 = vmatpush1.msra.mxu0 0.0
    %4797 = vmatprep.subr.mxu0 0.0
    %4798 = vmatpush1.msra.mxu0 0.0
    %4799 = vmatprep.subr.mxu0 0.0
    %4800 = vmatpush1.msra.mxu0 0.0
    %4801 = vmatprep.subr.mxu0 0.0
    %4802 = vmatpush1.msra.mxu0 0.0
    %4803 = vmatprep.subr.mxu0 0.0
    %4804 = vmatpush1.msra.mxu0 0.0
    %4805 = vmatprep.subr.mxu0 0.0
    %4806 = vmatpush1.msra.mxu0 0.0
    %4807 = vmatprep.mubr.f32.mxu0 0.0
    %4808 = vmatmul.mubr.f32.gmra.mrb[0].mxu0 %v4741
    %v4809 = vpop.f32.mrb[0].mxu0
    %v4810 = vadd.f32 %v4735, %v4809
    %v4811 = vpop.f32.mrb[0].mxu0
    %4812 = vdwg.mxu0
    %v4813 = vld [vmem:[%s16] sm:$0x1]
    %v4815 = vlaneseq
    %v4816 = vshrl.u32 %v4815, 7
    %v4817 = vsub.s32 0, %v4816
    %v4818 = vrot.slane %v4813, %v4817
    %v4820 = vadd.f32 %v4810, %v4818
    %v4821 = vld [vmem:[%s17] sm:$0xff]
    %v4822 = vld [vmem:[%s17 + $0x8] sm:$0xff]
    %v4823 = vld [vmem:[%s17 + $0x10] sm:$0xff]
    %v4824 = vld [vmem:[%s17 + $0x18] sm:$0xff]
    %v4825 = vld [vmem:[%s18] sm:$0xff]
    %v4826 = vld [vmem:[%s18 + $0x8] sm:$0xff]
    %v4827 = vld [vmem:[%s18 + $0x10] sm:$0xff]
    %v4828 = vld [vmem:[%s18 + $0x18] sm:$0xff]
    %4829 = vmatprep.subr.mxu0 0.0
    %4830 = vmatpush1.msra.mxu0 %v4825
    %4831 = vmatprep.subr.mxu0 0.0
    %4832 = vmatpush1.msra.mxu0 %v4826
    %4833 = vmatprep.subr.mxu0 0.0
    %4834 = vmatpush1.msra.mxu0 %v4827
    %4835 = vmatprep.subr.mxu0 0.0
    %4836 = vmatpush1.msra.mxu0 %v4828
    %4837 = vmatprep.subr.mxu0 0.0
    %4838 = vmatpush1.msra.mxu0 0.0
    %4839 = vmatprep.subr.mxu0 0.0
    %4840 = vmatpush1.msra.mxu0 0.0
    %4841 = vmatprep.subr.mxu0 0.0
    %4842 = vmatpush1.msra.mxu0 0.0
    %4843 = vmatprep.subr.mxu0 0.0
    %4844 = vmatpush1.msra.mxu0 0.0
    %4845 = vmatprep.subr.mxu0 0.0
    %4846 = vmatpush1.msra.mxu0 0.0
    %4847 = vmatprep.subr.mxu0 0.0
    %4848 = vmatpush1.msra.mxu0 0.0
    %4849 = vmatprep.subr.mxu0 0.0
    %4850 = vmatpush1.msra.mxu0 0.0
    %4851 = vmatprep.subr.mxu0 0.0
    %4852 = vmatpush1.msra.mxu0 0.0
    %4853 = vmatprep.subr.mxu0 0.0
    %4854 = vmatpush1.msra.mxu0 0.0
    %4855 = vmatprep.subr.mxu0 0.0
    %4856 = vmatpush1.msra.mxu0 0.0
    %4857 = vmatprep.subr.mxu0 0.0
    %4858 = vmatpush1.msra.mxu0 0.0
    %4859 = vmatprep.subr.mxu0 0.0
    %4860 = vmatpush1.msra.mxu0 0.0
    %4861 = vmatprep.subr.mxu0 0.0
    %4862 = vmatpush1.msra.mxu0 0.0
    %4863 = vmatprep.subr.mxu0 0.0
    %4864 = vmatpush1.msra.mxu0 0.0
    %4865 = vmatprep.subr.mxu0 0.0
    %4866 = vmatpush1.msra.mxu0 0.0
    %4867 = vmatprep.subr.mxu0 0.0
    %4868 = vmatpush1.msra.mxu0 0.0
    %4869 = vmatprep.subr.mxu0 0.0
    %4870 = vmatpush1.msra.mxu0 0.0
    %4871 = vmatprep.subr.mxu0 0.0
    %4872 = vmatpush1.msra.mxu0 0.0
    %4873 = vmatprep.subr.mxu0 0.0
    %4874 = vmatpush1.msra.mxu0 0.0
    %4875 = vmatprep.subr.mxu0 0.0
    %4876 = vmatpush1.msra.mxu0 0.0
    %4877 = vmatprep.subr.mxu0 0.0
    %4878 = vmatpush1.msra.mxu0 0.0
    %4879 = vmatprep.subr.mxu0 0.0
    %4880 = vmatpush1.msra.mxu0 0.0
    %4881 = vmatprep.subr.mxu0 0.0
    %4882 = vmatpush1.msra.mxu0 0.0
    %4883 = vmatprep.subr.mxu0 0.0
    %4884 = vmatpush1.msra.mxu0 0.0
    %4885 = vmatprep.subr.mxu0 0.0
    %4886 = vmatpush1.msra.mxu0 0.0
    %4887 = vmatprep.subr.mxu0 0.0
    %4888 = vmatpush1.msra.mxu0 0.0
    %4889 = vmatprep.subr.mxu0 0.0
    %4890 = vmatpush1.msra.mxu0 0.0
    %4891 = vmatprep.subr.mxu0 0.0
    %4892 = vmatpush1.msra.mxu0 0.0
    %4893 = vmatprep.mubr.f32.mxu0 0.0
    %4894 = vmatmul.mubr.f32.gmra.mrb[0].mxu0 %v4666
    %v4895 = vpop.f32.mrb[0].mxu0
    %v4896 = vadd.f32 0.0, %v4895
    %v4897 = vpop.f32.mrb[0].mxu0
    %4898 = vdwg.mxu0
    %4899 = vmatprep.subr.mxu0 0.0
    %4900 = vmatpush1.msra.mxu0 %v4821
    %4901 = vmatprep.subr.mxu0 0.0
    %4902 = vmatpush1.msra.mxu0 %v4822
    %4903 = vmatprep.subr.mxu0 0.0
    %4904 = vmatpush1.msra.mxu0 %v4823
    %4905 = vmatprep.subr.mxu0 0.0
    %4906 = vmatpush1.msra.mxu0 %v4824
    %4907 = vmatprep.subr.mxu0 0.0
    %4908 = vmatpush1.msra.mxu0 0.0
    %4909 = vmatprep.subr.mxu0 0.0
    %4910 = vmatpush1.msra.mxu0 0.0
    %4911 = vmatprep.subr.mxu0 0.0
    %4912 = vmatpush1.msra.mxu0 0.0
    %4913 = vmatprep.subr.mxu0 0.0
    %4914 = vmatpush1.msra.mxu0 0.0
    %4915 = vmatprep.subr.mxu0 0.0
    %4916 = vmatpush1.msra.mxu0 0.0
    %4917 = vmatprep.subr.mxu0 0.0
    %4918 = vmatpush1.msra.mxu0 0.0
    %4919 = vmatprep.subr.mxu0 0.0
    %4920 = vmatpush1.msra.mxu0 0.0
    %4921 = vmatprep.subr.mxu0 0.0
    %4922 = vmatpush1.msra.mxu0 0.0
    %4923 = vmatprep.subr.mxu0 0.0
    %4924 = vmatpush1.msra.mxu0 0.0
    %4925 = vmatprep.subr.mxu0 0.0
    %4926 = vmatpush1.msra.mxu0 0.0
    %4927 = vmatprep.subr.mxu0 0.0
    %4928 = vmatpush1.msra.mxu0 0.0
    %4929 = vmatprep.subr.mxu0 0.0
    %4930 = vmatpush1.msra.mxu0 0.0
    %4931 = vmatprep.subr.mxu0 0.0
    %4932 = vmatpush1.msra.mxu0 0.0
    %4933 = vmatprep.subr.mxu0 0.0
    %4934 = vmatpush1.msra.mxu0 0.0
    %4935 = vmatprep.subr.mxu0 0.0
    %4936 = vmatpush1.msra.mxu0 0.0
    %4937 = vmatprep.subr.mxu0 0.0
    %4938 = vmatpush1.msra.mxu0 0.0
    %4939 = vmatprep.subr.mxu0 0.0
    %4940 = vmatpush1.msra.mxu0 0.0
    %4941 = vmatprep.subr.mxu0 0.0
    %4942 = vmatpush1.msra.mxu0 0.0
    %4943 = vmatprep.subr.mxu0 0.0
    %4944 = vmatpush1.msra.mxu0 0.0
    %4945 = vmatprep.subr.mxu0 0.0
    %4946 = vmatpush1.msra.mxu0 0.0
    %4947 = vmatprep.subr.mxu0 0.0
    %4948 = vmatpush1.msra.mxu0 0.0
    %4949 = vmatprep.subr.mxu0 0.0
    %4950 = vmatpush1.msra.mxu0 0.0
    %4951 = vmatprep.subr.mxu0 0.0
    %4952 = vmatpush1.msra.mxu0 0.0
    %4953 = vmatprep.subr.mxu0 0.0
    %4954 = vmatpush1.msra.mxu0 0.0
    %4955 = vmatprep.subr.mxu0 0.0
    %4956 = vmatpush1.msra.mxu0 0.0
    %4957 = vmatprep.subr.mxu0 0.0
    %4958 = vmatpush1.msra.mxu0 0.0
    %4959 = vmatprep.subr.mxu0 0.0
    %4960 = vmatpush1.msra.mxu0 0.0
    %4961 = vmatprep.subr.mxu0 0.0
    %4962 = vmatpush1.msra.mxu0 0.0
    %4963 = vmatprep.mubr.f32.mxu0 0.0
    %4964 = vmatmul.mubr.f32.gmra.mrb[0].mxu0 %v4741
    %v4965 = vpop.f32.mrb[0].mxu0
    %v4966 = vadd.f32 %v4896, %v4965
    %v4967 = vpop.f32.mrb[0].mxu0
    %4968 = vdwg.mxu0
    %v4969 = vld [vmem:[%s19] sm:$0x1]
    %v4971 = vlaneseq
    %v4972 = vshrl.u32 %v4971, 7
    %v4973 = vsub.s32 0, %v4972
    %v4974 = vrot.slane %v4969, %v4973
    %v4976 = vadd.f32 %v4966, %v4974
    %v4977 = vld [vmem:[%s2] sm:$0x3]
    %v4978 = vmul.f32 %v4976, 0.5
    %v4979 = vmul.f32 %v4978, 1.442695
    %v4980 = vpow.pop %v4979
    %v4981 = vmul.f32 %v4977, %v4980
    %v4982 = vadd.f32 %v4981, %v4820
    %v4983 = vld [vmem:[%s20] sm:$0xff]
    %v4984 = vld [vmem:[%s20 + $0x8] sm:$0xff]
    %v4985 = vld [vmem:[%s21] sm:$0x1]
    %v4987 = vlaneseq
    %v4988 = vshrl.u32 %v4987, 7
    %v4989 = vsub.s32 0, %v4988
    %v4990 = vrot.slane %v4985, %v4989
    %vm4992 = vcmask 130048
    %v4994 = vsel %vm4992, %v4982, 0
    %4996 = vmatprep.subr.mxu0 0.0
    %4997 = vmatpush1.msra.mxu0 %v4983
    %4998 = vmatprep.subr.mxu0 0.0
    %4999 = vmatpush1.msra.mxu0 %v4984
    %5000 = vmatprep.subr.mxu0 0.0
    %5001 = vmatpush1.msra.mxu0 0.0
    %5002 = vmatprep.subr.mxu0 0.0
    %5003 = vmatpush1.msra.mxu0 0.0
    %5004 = vmatprep.subr.mxu0 0.0
    %5005 = vmatpush1.msra.mxu0 0.0
    %5006 = vmatprep.subr.mxu0 0.0
    %5007 = vmatpush1.msra.mxu0 0.0
    %5008 = vmatprep.subr.mxu0 0.0
    %5009 = vmatpush1.msra.mxu0 0.0
    %5010 = vmatprep.subr.mxu0 0.0
    %5011 = vmatpush1.msra.mxu0 0.0
    %5012 = vmatprep.subr.mxu0 0.0
    %5013 = vmatpush1.msra.mxu0 0.0
    %5014 = vmatprep.subr.mxu0 0.0
    %5015 = vmatpush1.msra.mxu0 0.0
    %5016 = vmatprep.subr.mxu0 0.0
    %5017 = vmatpush1.msra.mxu0 0.0
    %5018 = vmatprep.subr.mxu0 0.0
    %5019 = vmatpush1.msra.mxu0 0.0
    %5020 = vmatprep.subr.mxu0 0.0
    %5021 = vmatpush1.msra.mxu0 0.0
    %5022 = vmatprep.subr.mxu0 0.0
    %5023 = vmatpush1.msra.mxu0 0.0
    %5024 = vmatprep.subr.mxu0 0.0
    %5025 = vmatpush1.msra.mxu0 0.0
    %5026 = vmatprep.subr.mxu0 0.0
    %5027 = vmatpush1.msra.mxu0 0.0
    %5028 = vmatprep.subr.mxu0 0.0
    %5029 = vmatpush1.msra.mxu0 0.0
    %5030 = vmatprep.subr.mxu0 0.0
    %5031 = vmatpush1.msra.mxu0 0.0
    %5032 = vmatprep.subr.mxu0 0.0
    %5033 = vmatpush1.msra.mxu0 0.0
    %5034 = vmatprep.subr.mxu0 0.0
    %5035 = vmatpush1.msra.mxu0 0.0
    %5036 = vmatprep.subr.mxu0 0.0
    %5037 = vmatpush1.msra.mxu0 0.0
    %5038 = vmatprep.subr.mxu0 0.0
    %5039 = vmatpush1.msra.mxu0 0.0
    %5040 = vmatprep.subr.mxu0 0.0
    %5041 = vmatpush1.msra.mxu0 0.0
    %5042 = vmatprep.subr.mxu0 0.0
    %5043 = vmatpush1.msra.mxu0 0.0
    %5044 = vmatprep.subr.mxu0 0.0
    %5045 = vmatpush1.msra.mxu0 0.0
    %5046 = vmatprep.subr.mxu0 0.0
    %5047 = vmatpush1.msra.mxu0 0.0
    %5048 = vmatprep.subr.mxu0 0.0
    %5049 = vmatpush1.msra.mxu0 0.0
    %5050 = vmatprep.subr.mxu0 0.0
    %5051 = vmatpush1.msra.mxu0 0.0
    %5052 = vmatprep.subr.mxu0 0.0
    %5053 = vmatpush1.msra.mxu0 0.0
    %5054 = vmatprep.subr.mxu0 0.0
    %5055 = vmatpush1.msra.mxu0 0.0
    %5056 = vmatprep.subr.mxu0 0.0
    %5057 = vmatpush1.msra.mxu0 0.0
    %5058 = vmatprep.subr.mxu0 0.0
    %5059 = vmatpush1.msra.mxu0 0.0
    %5060 = vmatprep.mubr.f32.mxu0 0.0
    %5061 = vmatmul.mubr.f32.gmra.mrb[0].mxu0 %v4994
    %v5062 = vpop.f32.mrb[0].mxu0
    %v5063 = vadd.f32 %v4990, %v5062
    %v5064 = vpop.f32.mrb[0].mxu0
    %5065 = vdwg.mxu0
    %v5066 = vld [vmem:[%s22] sm:$0xff]
    %v5067 = vld [vmem:[%s22 + $0x8] sm:$0xff]
    %v5068 = vld [vmem:[%s22 + $0x10] sm:$0xff]
    %v5069 = vld [vmem:[%s22 + $0x18] sm:$0xff]
    %v5070 = vld [vmem:[%s22 + $0x20] sm:$0xff]
    %v5071 = vld [vmem:[%s22 + $0x28] sm:$0xff]
    %v5072 = vld [vmem:[%s22 + $0x30] sm:$0xff]
    %v5073 = vld [vmem:[%s22 + $0x38] sm:$0xff]
    %v5074 = vld [vmem:[%s23] sm:$0x3]
    %v5076 = vlaneseq
    %v5077 = vshrl.u32 %v5076, 7
    %v5078 = vsub.s32 0, %v5077
    %v5079 = vrot.slane %v5074, %v5078
    %v5080 = vlaneseq
    %v5081 = vshrl.u32 %v5080, 7
    %v5082 = vsub.s32 1, %v5081
    %v5083 = vrot.slane %v5074, %v5082
    %v5087 = vsel %vm234, %v5063, 0
    %5089 = vmatprep.subr.mxu0 %v5067
    %5090 = vmatpush1.msra.mxu0 %v5066
    %5091 = vmatprep.subr.mxu0 %v5069
    %5092 = vmatpush1.msra.mxu0 %v5068
    %5093 = vmatprep.subr.mxu0 %v5071
    %5094 = vmatpush1.msra.mxu0 %v5070
    %5095 = vmatprep.subr.mxu0 %v5073
    %5096 = vmatpush1.msra.mxu0 %v5072
    %5097 = vmatprep.subr.mxu0 0.0
    %5098 = vmatpush1.msra.mxu0 0.0
    %5099 = vmatprep.subr.mxu0 0.0
    %5100 = vmatpush1.msra.mxu0 0.0
    %5101 = vmatprep.subr.mxu0 0.0
    %5102 = vmatpush1.msra.mxu0 0.0
    %5103 = vmatprep.subr.mxu0 0.0
    %5104 = vmatpush1.msra.mxu0 0.0
    %5105 = vmatprep.subr.mxu0 0.0
    %5106 = vmatpush1.msra.mxu0 0.0
    %5107 = vmatprep.subr.mxu0 0.0
    %5108 = vmatpush1.msra.mxu0 0.0
    %5109 = vmatprep.subr.mxu0 0.0
    %5110 = vmatpush1.msra.mxu0 0.0
    %5111 = vmatprep.subr.mxu0 0.0
    %5112 = vmatpush1.msra.mxu0 0.0
    %5113 = vmatprep.subr.mxu0 0.0
    %5114 = vmatpush1.msra.mxu0 0.0
    %5115 = vmatprep.subr.mxu0 0.0
    %5116 = vmatpush1.msra.mxu0 0.0
    %5117 = vmatprep.subr.mxu0 0.0
    %5118 = vmatpush1.msra.mxu0 0.0
    %5119 = vmatprep.subr.mxu0 0.0
    %5120 = vmatpush1.msra.mxu0 0.0
    %5121 = vmatprep.subr.mxu0 0.0
    %5122 = vmatpush1.msra.mxu0 0.0
    %5123 = vmatprep.subr.mxu0 0.0
    %5124 = vmatpush1.msra.mxu0 0.0
    %5125 = vmatprep.subr.mxu0 0.0
    %5126 = vmatpush1.msra.mxu0 0.0
    %5127 = vmatprep.subr.mxu0 0.0
    %5128 = vmatpush1.msra.mxu0 0.0
    %5129 = vmatprep.subr.mxu0 0.0
    %5130 = vmatpush1.msra.mxu0 0.0
    %5131 = vmatprep.subr.mxu0 0.0
    %5132 = vmatpush1.msra.mxu0 0.0
    %5133 = vmatprep.subr.mxu0 0.0
    %5134 = vmatpush1.msra.mxu0 0.0
    %5135 = vmatprep.subr.mxu0 0.0
    %5136 = vmatpush1.msra.mxu0 0.0
    %5137 = vmatprep.subr.mxu0 0.0
    %5138 = vmatpush1.msra.mxu0 0.0
    %5139 = vmatprep.subr.mxu0 0.0
    %5140 = vmatpush1.msra.mxu0 0.0
    %5141 = vmatprep.subr.mxu0 0.0
    %5142 = vmatpush1.msra.mxu0 0.0
    %5143 = vmatprep.subr.mxu0 0.0
    %5144 = vmatpush1.msra.mxu0 0.0
    %5145 = vmatprep.subr.mxu0 0.0
    %5146 = vmatpush1.msra.mxu0 0.0
    %5147 = vmatprep.subr.mxu0 0.0
    %5148 = vmatpush1.msra.mxu0 0.0
    %5149 = vmatprep.subr.mxu0 0.0
    %5150 = vmatpush1.msra.mxu0 0.0
    %5151 = vmatprep.subr.mxu0 0.0
    %5152 = vmatpush1.msra.mxu0 0.0
    %5153 = vmatprep.mubr.f32.mxu0 0.0
    %5154 = vmatmul.mubr.f32.gmra.mrb[0].mxu0 %v5087
    %v5155 = vpop.f32.mrb[0].mxu0
    %v5156 = vadd.f32 %v5079, %v5155
    %v5157 = vpop.f32.mrb[0].mxu0
    %v5158 = vadd.f32 %v5083, %v5157
    %5159 = vdwg.mxu0
    %vm5160 = vcmask 123904
    %5161 = vst.msk [vmem:[#allocation4] sm:$0x3] %vm5160, %v4820
    %5162 = vst.msk [vmem:[#allocation6] sm:$0x3] %vm5160, %v4976
    %5163 = vst.msk [vmem:[#allocation7] sm:$0x3] %vm5160, %v4982
    %v5166 = vcombine.low %v5156, %v5158
    %v5168 = vunpack.c.l.s4 1983009808
    %v5169 = vunpack.c.0.s8 %v5168
    %v5170 = vlaneseq
    %v5171 = vshrl.u32 %v5170, 7
    %v5172 = vsub.s32 %v5169, %v5171
    %v5173 = vrot.slane %v5166, %v5172
    %5175 = vst [vmem:[#allocation2] sm:$0xf] %v5173
    // Predicated region
    $region98: #{reviewdi_forward.1} parent=1 // pred_check
      _
    $region99: #{reviewdi_forward.1} parent=1 // pred_check_branch
      %5177 = sbr.rel (0) target = $region101
    $region100: #{reviewdi_forward.1} parent=1 // pred_region
      %s5179 = ssub.s32 64, 64
      %5180 = vsyncadd [#allocation3], %s5179
      %s5182 = sshll.u32 [#allocation2], 4
      %s5183 = int_to_ptr.vmem [resolvable:$true] %s5182
      %5185 = dma.vmem_to_hbm [thread:$0]  %s5183, 64, %s24, [#allocation3]
    $region101: #{reviewdi_forward.1} parent=1 // pred_fallthru
      _
    // Predicated region
    $region102: #{reviewdi_forward.1} parent=1 // pred_check
      _
    $region103: #{reviewdi_forward.1} parent=1 // pred_check_branch
      %5187 = sbr.rel (0) target = $region105
    $region104: #{reviewdi_forward.1} parent=1 // pred_region
      %s5189 = ssub.s32 32, 32
      %5190 = vsyncadd [#allocation5], %s5189
      %s5192 = sshll.u32 [#allocation4], 4
      %s5193 = int_to_ptr.vmem [resolvable:$true] %s5192
      %5195 = dma.vmem_to_hbm [thread:$0]  %s5193, 32, %s25, [#allocation5]
    $region105: #{reviewdi_forward.1} parent=1 // pred_fallthru
      _
    // Predicated region
    $region106: #{reviewdi_forward.1} parent=1 // pred_check
      _
    $region107: #{reviewdi_forward.1} parent=1 // pred_check_branch
      %5197 = sbr.rel (0) target = $region109
    $region108: #{reviewdi_forward.1} parent=1 // pred_region
      %s5199 = ssub.s32 32, 32
      %5200 = vsyncadd [#allocation5], %s5199
      %s5202 = sshll.u32 [#allocation6], 4
      %s5203 = int_to_ptr.vmem [resolvable:$true] %s5202
      %5205 = dma.vmem_to_hbm [thread:$0]  %s5203, 32, %s26, [#allocation5]
    $region109: #{reviewdi_forward.1} parent=1 // pred_fallthru
      _
    // Predicated region
    $region110: #{reviewdi_forward.1} parent=1 // pred_check
      _
    $region111: #{reviewdi_forward.1} parent=1 // pred_check_branch
      %5207 = sbr.rel (0) target = $region113
    $region112: #{reviewdi_forward.1} parent=1 // pred_region
      %s5209 = ssub.s32 32, 32
      %5210 = vsyncadd [#allocation8], %s5209
      %s5212 = sshll.u32 [#allocation7], 4
      %s5213 = int_to_ptr.vmem [resolvable:$true] %s5212
      %5215 = dma.vmem_to_hbm [thread:$0]  %s5213, 32, %s27, [#allocation8]
    $region113: #{reviewdi_forward.1} parent=1 // pred_fallthru
      _
    // Predicated region
    $region114: #{reviewdi_forward.1} parent=1 // pred_check
      _
    $region115: #{reviewdi_forward.1} parent=1 // pred_check_branch
      %5217 = sbr.rel (0) target = $region117
    $region116: #{reviewdi_forward.1} parent=1 // pred_region
      %5218 = dma.done [#allocation3], 64
    $region117: #{reviewdi_forward.1} parent=1 // pred_fallthru
      _
    // Predicated region
    $region118: #{reviewdi_forward.1} parent=1 // pred_check
      _
    $region119: #{reviewdi_forward.1} parent=1 // pred_check_branch
      %5220 = sbr.rel (0) target = $region121
    $region120: #{reviewdi_forward.1} parent=1 // pred_region
      %5221 = dma.done [#allocation5], 32
    $region121: #{reviewdi_forward.1} parent=1 // pred_fallthru
      _
    // Predicated region
    $region122: #{reviewdi_forward.1} parent=1 // pred_check
      _
    $region123: #{reviewdi_forward.1} parent=1 // pred_check_branch
      %5223 = sbr.rel (0) target = $region125
    $region124: #{reviewdi_forward.1} parent=1 // pred_region
      %5224 = dma.done [#allocation5], 32
    $region125: #{reviewdi_forward.1} parent=1 // pred_fallthru
      _
    // Predicated region
    $region126: #{reviewdi_forward.1} parent=1 // pred_check
      _
    $region127: #{reviewdi_forward.1} parent=1 // pred_check_branch
      %5226 = sbr.rel (0) target = $region129
    $region128: #{reviewdi_forward.1} parent=1 // pred_region
      %5227 = dma.done [#allocation8], 32
    $region129: #{reviewdi_forward.1} parent=1 // pred_fallthru
      _
    %5228 = vsyncpa [#allocation3], 1
    %5229 = vsyncpa [#allocation5], 1
    %5230 = vsyncpa [#allocation8], 1

</llo_original>
